<compile_context>
chip_gen: v7x
topology: tpu7x:2x2x1
jax: 0.10.0
libtpu: 0.0.40
codegen_flags: <defaults>
</compile_context>

<pallas_src>
import jax
import jax.numpy as jnp
from jax.experimental import pallas as pl
from jax.experimental.pallas import tpu as pltpu


GB = 128          # per-gate lane block (i / f / o / g), one full vreg lane group
B_PAD = 8         # batch rows padded to one full sublane group


# ---------------------------------------------------------------------------
# wrapper-side weight re-packing helpers (run once, outside the kernel)
# ---------------------------------------------------------------------------
def _spread(w, slot):
    """(rows, 4H), PyTorch gate column order [i, f, g, o] -> (rows, 4*GB).

    Gate q (kernel block order i, f, o, g) goes to lanes
    [q*GB + slot*H : q*GB + (slot+1)*H]; all other lanes are zero.  `slot`
    is the direction (BiLSTM: 0=fwd, 1=bwd) or the layer (stacked: 0/1/2).
    """
    rows, h4 = w.shape
    H = h4 // 4
    i, f, g, o = w[:, :H], w[:, H:2 * H], w[:, 2 * H:3 * H], w[:, 3 * H:]
    out = jnp.zeros((rows, 4 * GB), w.dtype)
    for q, blk in enumerate((i, f, o, g)):
        out = out.at[:, q * GB + slot * H: q * GB + (slot + 1) * H].set(blk)
    return out


def _pack_blob(entries, dtype, width):
    """Pack [(name, 2-D array)] into one (rows, width) blob.  Returns
    (blob, {name: (row_start, n_rows, n_cols)}); row starts are 8-aligned."""
    parts, offs, r = [], {}, 0
    for name, arr in entries:
        a = jnp.asarray(arr, dtype)
        nr, nc = a.shape
        nr_pad = ((nr + 7) // 8) * 8
        buf = jnp.zeros((nr_pad, width), dtype).at[:nr, :nc].set(a)
        parts.append(buf)
        offs[name] = (r, nr, nc)
        r += nr_pad
    return jnp.concatenate(parts, axis=0), offs


# ---------------------------------------------------------------------------
# the fused kernel
# ---------------------------------------------------------------------------
def make_fused_kernel(w_offs, b_offs, *, S, H, C_pad):
    T = 2 * S
    f32, bf16 = jnp.float32, jnp.bfloat16
    B = B_PAD

    def kernel(x_cat_ref, tok_char_ref, w_ref, b_ref,
               ner_ref, sent_ref, xp_bi_ref, xp_stk_ref):

        def w_load(name):
            r, nr, nc = w_offs[name]
            return w_ref[r:r + nr, :nc]

        def b_load(name):
            r, nr, nc = b_offs[name]
            return b_ref[r:r + nr, :nc]

        # ============ stage 1: direction-fused bidirectional LSTM ==========
        # Hoisted input projection for all timesteps and BOTH directions in
        # one MXU matmul (biases folded), written once (dense, aligned).
        xp_bi_ref[...] = (jnp.dot(x_cat_ref[...], w_load("w_ih_bi"),
                                  preferred_element_type=f32)
                          + b_load("b_bi"))

        w_hh_bi = w_load("w_hh_bi")                    # (2H, 4*GB) bf16
        h = jnp.zeros((B, 2 * H), f32)                 # [h_fwd | h_bwd]
        c = jnp.zeros((B, 2 * H), f32)
        hf_steps, hb_steps = [], []
        for s in range(S):
            xp = xp_bi_ref[s * B:(s + 1) * B, :]       # (8, 4*GB), vreg aligned
            gates = xp + jnp.dot(h.astype(bf16), w_hh_bi,
                                 preferred_element_type=f32)
            sig = jax.nn.sigmoid(gates[:, :3 * GB])
            i_g = sig[:, 0:2 * H]
            f_g = sig[:, GB:GB + 2 * H]
            o_g = sig[:, 2 * GB:2 * GB + 2 * H]
            g_g = jnp.tanh(gates[:, 3 * GB:3 * GB + 2 * H])
            c = f_g * c + i_g * g_g
            h = o_g * jnp.tanh(c)
            hf_steps.append(h[:, :H])                  # fwd hidden, time t = s
            hb_steps.append(h[:, H:])                  # bwd hidden, time t = S-1-s
        # materialise hidden sequences ONCE; bwd list reversed in Python
        # (free) to restore time order.
        seq = jnp.concatenate(
            [jnp.concatenate(hf_steps, axis=0),
             jnp.concatenate(hb_steps[::-1], axis=0)], axis=1).astype(bf16)

        # ============ stage 2: NER head + in-kernel label embedding ========
        logits = (jnp.dot(seq, w_load("w_ner"), preferred_element_type=f32)
                  + b_load("b_ner"))                   # (S*B, C_pad), pads = -1e9
        ner_ref[...] = logits

        # first-max argmax -> one-hot -> label-char embedding lookup
        mx = jnp.max(logits, axis=-1, keepdims=True)
        lane = jax.lax.broadcasted_iota(jnp.int32, logits.shape, 1).astype(f32)
        first = jnp.min(jnp.where(logits == mx, lane, float(C_pad)),
                        axis=-1, keepdims=True)
        onehot = (lane == first).astype(bf16)          # (S*B, C_pad)
        lbl_char = jnp.dot(onehot, w_load("tbl_lbl"),
                           preferred_element_type=f32).astype(bf16)

        # ============ stage 3: wavefronted 3-layer LSTM + sentiment ========
        x2 = jnp.concatenate([tok_char_ref[...], lbl_char], axis=0)  # (T*B, cf)
        xp_stk_ref[...] = (jnp.dot(x2, w_load("w_ih0"),
                                   preferred_element_type=f32)
                           + b_load("b_stk"))          # layer-0 proj + all biases

        w_rec = w_load("w_rec")                        # (3H, 4*GB) bf16
        h_all = jnp.zeros((B, 3 * H), f32)             # [h_l0 | h_l1 | h_l2]
        c_all = jnp.zeros((B, 3 * H), f32)
        pool = jnp.zeros((B, H), f32)
        z1 = jnp.zeros((B, H), f32)
        z2 = jnp.zeros((B, 2 * H), f32)
        for s in range(T + 2):
            t0 = min(s, T - 1)                         # clamp layer-0 input in drain
            xp = xp_stk_ref[t0 * B:(t0 + 1) * B, :]
            gates = xp + jnp.dot(h_all.astype(bf16), w_rec,
                                 preferred_element_type=f32)
            sig = jax.nn.sigmoid(gates[:, :3 * GB])
            i_g = sig[:, 0:3 * H]
            f_g = sig[:, GB:GB + 3 * H]
            o_g = sig[:, 2 * GB:2 * GB + 3 * H]
            g_g = jnp.tanh(gates[:, 3 * GB:3 * GB + 3 * H])
            c_all = f_g * c_all + i_g * g_g
            h_all = o_g * jnp.tanh(c_all)
            # wavefront warm-up: layers that have not started keep zero state
            if s == 0:
                h_all = jnp.concatenate([h_all[:, :H], z2], axis=1)
                c_all = jnp.concatenate([c_all[:, :H], z2], axis=1)
            elif s == 1:
                h_all = jnp.concatenate([h_all[:, :2 * H], z1], axis=1)
                c_all = jnp.concatenate([c_all[:, :2 * H], z1], axis=1)
            if s >= 2:                                 # layer-2 hidden valid (t = s-2)
                pool = pool + h_all[:, 2 * H:]

        pooled = (pool * (1.0 / T)).astype(bf16)
        sent_ref[...] = (jnp.dot(pooled, w_load("w_sent"),
                                 preferred_element_type=f32)
                         + b_load("b_sent"))

    return kernel


# ---------------------------------------------------------------------------
# parameter initialization (PyTorch conventions) + kernel-ready repacking
# ---------------------------------------------------------------------------
def init_params(key, word_vocab_size, word_emb_dim, H, ner_classes,
                sent_classes, char_emb_dim, n_tok_buckets=64):
    cf = 2 * char_emb_dim   # flair char-embedder output dim (bidirectional)

    def nrm(k, shape, scale=0.1):
        return scale * jax.random.normal(k, shape, dtype=jnp.float32)

    ks = iter(jax.random.split(key, 32))
    return {
        "word_embeddings": nrm(next(ks), (word_vocab_size, word_emb_dim), 1.0),
        # word BiLSTM (stored transposed: (in, 4H)); PyTorch gate order i,f,g,o
        "w_ih_f": nrm(next(ks), (word_emb_dim, 4 * H)),
        "w_hh_f": nrm(next(ks), (H, 4 * H)),
        "b_f":    nrm(next(ks), (1, 4 * H)),
        "w_ih_b": nrm(next(ks), (word_emb_dim, 4 * H)),
        "w_hh_b": nrm(next(ks), (H, 4 * H)),
        "b_b":    nrm(next(ks), (1, 4 * H)),
        # NER classifier (2H -> C), split into fwd/bwd halves
        "w_ner_f": nrm(next(ks), (H, ner_classes)),
        "w_ner_b": nrm(next(ks), (H, ner_classes)),
        "b_ner":   nrm(next(ks), (1, ner_classes)),
        # synthetic char-embedding tables
        "char_tok_table":   nrm(next(ks), (n_tok_buckets, cf), 1.0),
        "char_label_table": nrm(next(ks), (ner_classes, cf), 1.0),
        # final 3-layer unidirectional LSTM
        "w_ih0": nrm(next(ks), (cf, 4 * H)),
        "w_hh0": nrm(next(ks), (H, 4 * H)),
        "b0":    nrm(next(ks), (1, 4 * H)),
        "w_ih1": nrm(next(ks), (H, 4 * H)),
        "w_hh1": nrm(next(ks), (H, 4 * H)),
        "b1":    nrm(next(ks), (1, 4 * H)),
        "w_ih2": nrm(next(ks), (H, 4 * H)),
        "w_hh2": nrm(next(ks), (H, 4 * H)),
        "b2":    nrm(next(ks), (1, 4 * H)),
        # sentiment classifier
        "w_sent": nrm(next(ks), (H, sent_classes)),
        "b_sent": nrm(next(ks), (1, sent_classes)),
    }


def prepare_params(p):
    """Wrapper-side repack: lane-spread / block-diagonal recurrent matrices
    for the fused-direction BiLSTM and the wavefronted stacked LSTM, one
    bf16 weight blob + one f32 bias blob (2 weight DMAs instead of ~15)."""
    H = p["w_hh_f"].shape[0]
    E = p["w_ih_f"].shape[0]
    C = p["w_ner_f"].shape[1]
    cf = p["char_tok_table"].shape[1]
    NS = p["w_sent"].shape[1]
    C_pad = 8
    width = 4 * GB

    # --- BiLSTM, fused directions ---
    w_ih_bi = jnp.concatenate([_spread(p["w_ih_f"], 0),
                               _spread(p["w_ih_b"], 1)], axis=0)    # (2E, 4GB)
    w_hh_bi = jnp.concatenate([_spread(p["w_hh_f"], 0),
                               _spread(p["w_hh_b"], 1)], axis=0)    # (2H, 4GB)
    b_bi = _spread(p["b_f"], 0) + _spread(p["b_b"], 1)              # (1, 4GB)

    # --- NER head: concat(fwd,bwd) -> C, padded to C_pad output lanes ---
    w_ner = jnp.zeros((2 * H, C_pad), jnp.float32)
    w_ner = w_ner.at[:H, :C].set(p["w_ner_f"]).at[H:, :C].set(p["w_ner_b"])
    b_ner = jnp.full((1, C_pad), -1e9, jnp.float32).at[:, :C].set(p["b_ner"])
    tbl_lbl = jnp.zeros((C_pad, cf), jnp.float32).at[:C].set(p["char_label_table"])

    # --- stacked LSTM (wavefront): layer-0 input proj + block recurrence ---
    w_ih0 = _spread(p["w_ih0"], 0)                                   # (cf, 4GB)
    w_rec = jnp.concatenate(
        [_spread(p["w_hh0"], 0) + _spread(p["w_ih1"], 1),
         _spread(p["w_hh1"], 1) + _spread(p["w_ih2"], 2),
         _spread(p["w_hh2"], 2)], axis=0)                            # (3H, 4GB)
    b_stk = _spread(p["b0"], 0) + _spread(p["b1"], 1) + _spread(p["b2"], 2)

    w_blob, w_offs = _pack_blob(
        [("w_ih_bi", w_ih_bi), ("w_hh_bi", w_hh_bi), ("w_ner", w_ner),
         ("tbl_lbl", tbl_lbl), ("w_ih0", w_ih0), ("w_rec", w_rec),
         ("w_sent", p["w_sent"])], jnp.bfloat16, width)
    b_blob, b_offs = _pack_blob(
        [("b_bi", b_bi), ("b_ner", b_ner), ("b_stk", b_stk),
         ("b_sent", p["b_sent"])], jnp.float32, width)

    kp = {"word_embeddings": p["word_embeddings"],
          "char_tok_table": p["char_tok_table"],
          "w_blob": w_blob, "b_blob": b_blob}
    dims = dict(H=H, E=E, C=C, C_pad=C_pad, cf=cf, NS=NS)
    return kp, w_offs, b_offs, dims


# ---------------------------------------------------------------------------
# jittable forward wrapper
# ---------------------------------------------------------------------------
def build_forward(S, B, w_offs, b_offs, dims):
    H, E, cf = dims["H"], dims["E"], dims["cf"]
    C, C_pad, NS = dims["C"], dims["C_pad"], dims["NS"]
    T = 2 * S
    kernel = make_fused_kernel(w_offs, b_offs, S=S, H=H, C_pad=C_pad)
    vmem = lambda: pl.BlockSpec(memory_space=pltpu.MemorySpace.VMEM)

    fused = pl.pallas_call(
        kernel,
        out_shape=(jax.ShapeDtypeStruct((S * B_PAD, C_pad), jnp.float32),
                   jax.ShapeDtypeStruct((B_PAD, NS), jnp.float32)),
        in_specs=[vmem(), vmem(), vmem(), vmem()],
        out_specs=(vmem(), vmem()),
        scratch_shapes=[pltpu.VMEM((S * B_PAD, 4 * GB), jnp.float32),
                        pltpu.VMEM((T * B_PAD, 4 * GB), jnp.float32)],
    )

    def forward(kp, word_input, tok_ids):
        # word embeddings, time-major, batch padded to a full sublane group
        we = jnp.take(kp["word_embeddings"], word_input, axis=0)     # (B,S,E)
        we = jnp.transpose(we, (1, 0, 2))                            # (S,B,E)
        we = jnp.pad(we, ((0, 0), (0, B_PAD - B), (0, 0)))           # (S,Bp,E)
        x_fwd = we.reshape(S * B_PAD, E)
        x_bwd = we[::-1].reshape(S * B_PAD, E)                       # time-reversed
        x_cat = jnp.concatenate([x_fwd, x_bwd], axis=1).astype(jnp.bfloat16)

        # TODO(synk): Flair CharacterEmbeddings (pretrained char-level LSTM over
        # raw strings) has no Pallas equivalent; replaced with deterministic
        # embedding-table lookups over hashed-token / NER-label ids.
        tc = jnp.take(kp["char_tok_table"], tok_ids, axis=0)         # (B,S,cf)
        tc = jnp.transpose(tc, (1, 0, 2))
        tc = jnp.pad(tc, ((0, 0), (0, B_PAD - B), (0, 0)))
        tok_char = tc.reshape(S * B_PAD, cf).astype(jnp.bfloat16)

        ner_flat, sent_pad = fused(x_cat, tok_char, kp["w_blob"], kp["b_blob"])
        ner = ner_flat[:, :C].reshape(S, B_PAD, C)[:, :B]
        ner = jnp.transpose(ner, (1, 0, 2))                          # (B,S,C)
        return sent_pad[:B], ner

    return jax.jit(forward)


def hash_tokens(token_list_batch, n_buckets):
    """Host-side token hashing, done once per batch outside the jitted path."""
    return jnp.array(
        [[sum(ord(ch) for ch in tok) % n_buckets for tok in toks]
         for toks in token_list_batch], dtype=jnp.int32)


# ---------------------------------------------------------------------------
# pure-JAX f32 reference (straightforward per-direction / per-layer loops)
# ---------------------------------------------------------------------------
def _lstm_cell_ref(x, h, c, w_ih, w_hh, b):
    H = h.shape[-1]
    g = x @ w_ih + h @ w_hh + b
    i = jax.nn.sigmoid(g[:, :H])
    f = jax.nn.sigmoid(g[:, H:2 * H])
    cand = jnp.tanh(g[:, 2 * H:3 * H])
    o = jax.nn.sigmoid(g[:, 3 * H:])
    c = f * c + i * cand
    return o * jnp.tanh(c), c


def reference_forward(p, word_input, tok_ids):
    B, S = word_input.shape
    H = p["w_hh_f"].shape[0]
    we = jnp.take(p["word_embeddings"], word_input, axis=0)          # (B,S,E)

    h = c = jnp.zeros((B, H)); hf = []
    for t in range(S):
        h, c = _lstm_cell_ref(we[:, t], h, c, p["w_ih_f"], p["w_hh_f"], p["b_f"])
        hf.append(h)
    h = c = jnp.zeros((B, H)); hb = [None] * S
    for t in range(S - 1, -1, -1):
        h, c = _lstm_cell_ref(we[:, t], h, c, p["w_ih_b"], p["w_hh_b"], p["b_b"])
        hb[t] = h
    seq = jnp.stack([jnp.concatenate([hf[t], hb[t]], axis=-1) for t in range(S)], 1)
    w_ner = jnp.concatenate([p["w_ner_f"], p["w_ner_b"]], axis=0)
    ner = seq @ w_ner + p["b_ner"]                                   # (B,S,C)
    preds = jnp.argmax(ner, axis=-1)

    tok_char = jnp.take(p["char_tok_table"], tok_ids, axis=0)
    lbl_char = jnp.take(p["char_label_table"], preds, axis=0)
    x = jnp.concatenate([tok_char, lbl_char], axis=1)                # (B,2S,cf)
    T = 2 * S
    for l in range(3):
        w_ih, w_hh, b = p[f"w_ih{l}"], p[f"w_hh{l}"], p[f"b{l}"]
        h = c = jnp.zeros((B, H)); outs = []
        for t in range(T):
            h, c = _lstm_cell_ref(x[:, t], h, c, w_ih, w_hh, b)
            outs.append(h)
        x = jnp.stack(outs, axis=1)
    pooled = jnp.mean(x, axis=1)
    sent = pooled @ p["w_sent"] + p["b_sent"]
    return sent, ner, preds


if __name__ == "__main__":
    B, S = 2, 8
    word_vocab_size = 50
    word_emb_dim = 32
    lstm_hidden_dim = 32
    ner_num_classes = 5
    sentiment_num_classes = 3
    char_emb_dim = 16

    key = jax.random.PRNGKey(0)
    k_params, k_input = jax.random.split(key)
    params = init_params(k_params, word_vocab_size, word_emb_dim,
                         lstm_hidden_dim, ner_num_classes,
                         sentiment_num_classes, char_emb_dim)
    kp, w_offs, b_offs, dims = prepare_params(params)
    fwd = build_forward(S, B, w_offs, b_offs, dims)

    word_input = jax.random.randint(k_input, (B, S), 0, word_vocab_size,
                                    dtype=jnp.int32)
    token_list_batch = [[f"tok{i}_{j}" for j in range(S)] for i in range(B)]
    tok_ids = hash_tokens(token_list_batch, params["char_tok_table"].shape[0])

    sentiment_out, ner_out = fwd(kp, word_input, tok_ids)
    jax.block_until_ready((sentiment_out, ner_out))

    assert sentiment_out.shape == (B, sentiment_num_classes)
    assert ner_out.shape == (B, S, ner_num_classes)
    assert bool(jnp.all(jnp.isfinite(sentiment_out)))
    assert bool(jnp.all(jnp.isfinite(ner_out)))

    # validate against a pure-JAX f32 reference (bf16-matmul tolerance)
    sent_ref, ner_ref, preds_ref = jax.jit(reference_forward)(
        params, word_input, tok_ids)
    assert bool(jnp.allclose(ner_out, ner_ref, atol=5e-2, rtol=5e-2)), \
        "NER logits diverge from reference"
    preds_kernel = jnp.argmax(ner_out, axis=-1)
    if bool(jnp.all(preds_kernel == preds_ref)):
        # sentiment check is only meaningful when the (tie-sensitive) NER
        # argmax agrees, since it selects the label-char embeddings.
        assert bool(jnp.allclose(sentiment_out, sent_ref, atol=1e-1, rtol=1e-1)), \
            "sentiment output diverges from reference"
    print("KERNEL_OK")
</pallas_src>

<mosaic_0001>
module attributes {stable_mosaic.version = 11 : i64} {
  func.func @kernel(%arg0: memref<64x64xbf16, #tpu.memory_space<vmem>>, %arg1: memref<64x32xbf16, #tpu.memory_space<vmem>>, %arg2: memref<360x512xbf16, #tpu.memory_space<vmem>>, %arg3: memref<32x512xf32, #tpu.memory_space<vmem>>, %arg4: memref<64x8xf32, #tpu.memory_space<vmem>>, %arg5: memref<8x3xf32, #tpu.memory_space<vmem>>, %arg6: memref<64x512xf32, #tpu.memory_space<vmem>>, %arg7: memref<128x512xf32, #tpu.memory_space<vmem>>) attributes {dimension_semantics = [], scalar_prefetch = 0 : i64, scratch_operands = 2 : i64, tpu.core_type = #tpu.core_type<tc>} {
    %c0 = arith.constant 0 : index
    %c0_0 = arith.constant 0 : index
    %0 = vector.load %arg0[%c0, %c0_0] : memref<64x64xbf16, #tpu.memory_space<vmem>>, vector<64x64xbf16>
    %c0_1 = arith.constant 0 : index
    %c0_2 = arith.constant 0 : index
    %1 = vector.load %arg2[%c0_1, %c0_2] : memref<360x512xbf16, #tpu.memory_space<vmem>>, vector<64x512xbf16>
    %cst = arith.constant dense<0.000000e+00> : vector<64x512xf32>
    %2 = tpu.matmul %0, %1, %cst {dimension_numbers = #tpu.dot_dimension_numbers<[1], [0], [0], [1], [0, 0, 1, 1], [], []>} : vector<64x64xbf16>, vector<64x512xbf16>, vector<64x512xf32> -> vector<64x512xf32>
    %c0_3 = arith.constant 0 : index
    %c0_4 = arith.constant 0 : index
    %3 = vector.load %arg3[%c0_3, %c0_4] : memref<32x512xf32, #tpu.memory_space<vmem>>, vector<1x512xf32>
    %4 = vector.broadcast %3 : vector<1x512xf32> to vector<64x512xf32>
    %5 = arith.addf %2, %4 : vector<64x512xf32>
    %c0_5 = arith.constant 0 : index
    %c0_6 = arith.constant 0 : index
    %6 = vector.load %arg6[%c0_5, %c0_6] : memref<64x512xf32, #tpu.memory_space<vmem>>, vector<64x512xf32>
    tpu.vector_store %arg6[%c0_5, %c0_6], %5 {strides = array<i32>} : memref<64x512xf32, #tpu.memory_space<vmem>>, vector<64x512xf32>,
    %c64 = arith.constant 64 : index
    %c0_7 = arith.constant 0 : index
    %7 = vector.load %arg2[%c64, %c0_7] : memref<360x512xbf16, #tpu.memory_space<vmem>>, vector<64x512xbf16>
    %cst_8 = arith.constant 0.000000e+00 : f32
    %8 = vector.broadcast %cst_8 : f32 to vector<8x64xf32>
    %cst_9 = arith.constant 0.000000e+00 : f32
    %9 = vector.broadcast %cst_9 : f32 to vector<8x64xf32>
    %c0_10 = arith.constant 0 : index
    %c0_11 = arith.constant 0 : index
    %10 = vector.load %arg6[%c0_10, %c0_11] : memref<64x512xf32, #tpu.memory_space<vmem>>, vector<8x512xf32>
    %11 = arith.truncf %8 : vector<8x64xf32> to vector<8x64xbf16>
    %cst_12 = arith.constant dense<0.000000e+00> : vector<8x512xf32>
    %12 = tpu.matmul %11, %7, %cst_12 {dimension_numbers = #tpu.dot_dimension_numbers<[1], [0], [0], [1], [0, 0, 1, 1], [], []>} : vector<8x64xbf16>, vector<64x512xbf16>, vector<8x512xf32> -> vector<8x512xf32>
    %13 = arith.addf %10, %12 : vector<8x512xf32>
    %14 = vector.extract_strided_slice %13 {offsets = [0, 0], sizes = [8, 384], strides = [1, 1]} : vector<8x512xf32> to vector<8x384xf32>
    %15 = arith.negf %14 : vector<8x384xf32>
    %16 = math.exp %15 : vector<8x384xf32>
    %cst_13 = arith.constant 1.000000e+00 : f32
    %17 = vector.broadcast %cst_13 : f32 to vector<8x384xf32>
    %18 = arith.addf %17, %16 : vector<8x384xf32>
    %19 = arith.divf %17, %18 : vector<8x384xf32>
    %20 = vector.extract_strided_slice %19 {offsets = [0, 0], sizes = [8, 64], strides = [1, 1]} : vector<8x384xf32> to vector<8x64xf32>
    %21 = vector.extract_strided_slice %19 {offsets = [0, 128], sizes = [8, 64], strides = [1, 1]} : vector<8x384xf32> to vector<8x64xf32>
    %22 = vector.extract_strided_slice %19 {offsets = [0, 256], sizes = [8, 64], strides = [1, 1]} : vector<8x384xf32> to vector<8x64xf32>
    %23 = vector.extract_strided_slice %13 {offsets = [0, 384], sizes = [8, 64], strides = [1, 1]} : vector<8x512xf32> to vector<8x64xf32>
    %24 = math.tanh %23 : vector<8x64xf32>
    %25 = arith.mulf %21, %9 : vector<8x64xf32>
    %26 = arith.mulf %20, %24 : vector<8x64xf32>
    %27 = arith.addf %25, %26 : vector<8x64xf32>
    %28 = math.tanh %27 : vector<8x64xf32>
    %29 = arith.mulf %22, %28 : vector<8x64xf32>
    %30 = vector.extract_strided_slice %29 {offsets = [0, 0], sizes = [8, 32], strides = [1, 1]} : vector<8x64xf32> to vector<8x32xf32>
    %31 = vector.extract_strided_slice %29 {offsets = [0, 32], sizes = [8, 32], strides = [1, 1]} : vector<8x64xf32> to vector<8x32xf32>
    %c8 = arith.constant 8 : index
    %c0_14 = arith.constant 0 : index
    %32 = vector.load %arg6[%c8, %c0_14] : memref<64x512xf32, #tpu.memory_space<vmem>>, vector<8x512xf32>
    %33 = arith.truncf %29 : vector<8x64xf32> to vector<8x64xbf16>
    %cst_15 = arith.constant dense<0.000000e+00> : vector<8x512xf32>
    %34 = tpu.matmul %33, %7, %cst_15 {dimension_numbers = #tpu.dot_dimension_numbers<[1], [0], [0], [1], [0, 0, 1, 1], [], []>} : vector<8x64xbf16>, vector<64x512xbf16>, vector<8x512xf32> -> vector<8x512xf32>
    %35 = arith.addf %32, %34 : vector<8x512xf32>
    %36 = vector.extract_strided_slice %35 {offsets = [0, 0], sizes = [8, 384], strides = [1, 1]} : vector<8x512xf32> to vector<8x384xf32>
    %37 = arith.negf %36 : vector<8x384xf32>
    %38 = math.exp %37 : vector<8x384xf32>
    %cst_16 = arith.constant 1.000000e+00 : f32
    %39 = vector.broadcast %cst_16 : f32 to vector<8x384xf32>
    %40 = arith.addf %39, %38 : vector<8x384xf32>
    %41 = arith.divf %39, %40 : vector<8x384xf32>
    %42 = vector.extract_strided_slice %41 {offsets = [0, 0], sizes = [8, 64], strides = [1, 1]} : vector<8x384xf32> to vector<8x64xf32>
    %43 = vector.extract_strided_slice %41 {offsets = [0, 128], sizes = [8, 64], strides = [1, 1]} : vector<8x384xf32> to vector<8x64xf32>
    %44 = vector.extract_strided_slice %41 {offsets = [0, 256], sizes = [8, 64], strides = [1, 1]} : vector<8x384xf32> to vector<8x64xf32>
    %45 = vector.extract_strided_slice %35 {offsets = [0, 384], sizes = [8, 64], strides = [1, 1]} : vector<8x512xf32> to vector<8x64xf32>
    %46 = math.tanh %45 : vector<8x64xf32>
    %47 = arith.mulf %43, %27 : vector<8x64xf32>
    %48 = arith.mulf %42, %46 : vector<8x64xf32>
    %49 = arith.addf %47, %48 : vector<8x64xf32>
    %50 = math.tanh %49 : vector<8x64xf32>
    %51 = arith.mulf %44, %50 : vector<8x64xf32>
    %52 = vector.extract_strided_slice %51 {offsets = [0, 0], sizes = [8, 32], strides = [1, 1]} : vector<8x64xf32> to vector<8x32xf32>
    %53 = vector.extract_strided_slice %51 {offsets = [0, 32], sizes = [8, 32], strides = [1, 1]} : vector<8x64xf32> to vector<8x32xf32>
    %c16 = arith.constant 16 : index
    %c0_17 = arith.constant 0 : index
    %54 = vector.load %arg6[%c16, %c0_17] : memref<64x512xf32, #tpu.memory_space<vmem>>, vector<8x512xf32>
    %55 = arith.truncf %51 : vector<8x64xf32> to vector<8x64xbf16>
    %cst_18 = arith.constant dense<0.000000e+00> : vector<8x512xf32>
    %56 = tpu.matmul %55, %7, %cst_18 {dimension_numbers = #tpu.dot_dimension_numbers<[1], [0], [0], [1], [0, 0, 1, 1], [], []>} : vector<8x64xbf16>, vector<64x512xbf16>, vector<8x512xf32> -> vector<8x512xf32>
    %57 = arith.addf %54, %56 : vector<8x512xf32>
    %58 = vector.extract_strided_slice %57 {offsets = [0, 0], sizes = [8, 384], strides = [1, 1]} : vector<8x512xf32> to vector<8x384xf32>
    %59 = arith.negf %58 : vector<8x384xf32>
    %60 = math.exp %59 : vector<8x384xf32>
    %cst_19 = arith.constant 1.000000e+00 : f32
    %61 = vector.broadcast %cst_19 : f32 to vector<8x384xf32>
    %62 = arith.addf %61, %60 : vector<8x384xf32>
    %63 = arith.divf %61, %62 : vector<8x384xf32>
    %64 = vector.extract_strided_slice %63 {offsets = [0, 0], sizes = [8, 64], strides = [1, 1]} : vector<8x384xf32> to vector<8x64xf32>
    %65 = vector.extract_strided_slice %63 {offsets = [0, 128], sizes = [8, 64], strides = [1, 1]} : vector<8x384xf32> to vector<8x64xf32>
    %66 = vector.extract_strided_slice %63 {offsets = [0, 256], sizes = [8, 64], strides = [1, 1]} : vector<8x384xf32> to vector<8x64xf32>
    %67 = vector.extract_strided_slice %57 {offsets = [0, 384], sizes = [8, 64], strides = [1, 1]} : vector<8x512xf32> to vector<8x64xf32>
    %68 = math.tanh %67 : vector<8x64xf32>
    %69 = arith.mulf %65, %49 : vector<8x64xf32>
    %70 = arith.mulf %64, %68 : vector<8x64xf32>
    %71 = arith.addf %69, %70 : vector<8x64xf32>
    %72 = math.tanh %71 : vector<8x64xf32>
    %73 = arith.mulf %66, %72 : vector<8x64xf32>
    %74 = vector.extract_strided_slice %73 {offsets = [0, 0], sizes = [8, 32], strides = [1, 1]} : vector<8x64xf32> to vector<8x32xf32>
    %75 = vector.extract_strided_slice %73 {offsets = [0, 32], sizes = [8, 32], strides = [1, 1]} : vector<8x64xf32> to vector<8x32xf32>
    %c24 = arith.constant 24 : index
    %c0_20 = arith.constant 0 : index
    %76 = vector.load %arg6[%c24, %c0_20] : memref<64x512xf32, #tpu.memory_space<vmem>>, vector<8x512xf32>
    %77 = arith.truncf %73 : vector<8x64xf32> to vector<8x64xbf16>
    %cst_21 = arith.constant dense<0.000000e+00> : vector<8x512xf32>
    %78 = tpu.matmul %77, %7, %cst_21 {dimension_numbers = #tpu.dot_dimension_numbers<[1], [0], [0], [1], [0, 0, 1, 1], [], []>} : vector<8x64xbf16>, vector<64x512xbf16>, vector<8x512xf32> -> vector<8x512xf32>
    %79 = arith.addf %76, %78 : vector<8x512xf32>
    %80 = vector.extract_strided_slice %79 {offsets = [0, 0], sizes = [8, 384], strides = [1, 1]} : vector<8x512xf32> to vector<8x384xf32>
    %81 = arith.negf %80 : vector<8x384xf32>
    %82 = math.exp %81 : vector<8x384xf32>
    %cst_22 = arith.constant 1.000000e+00 : f32
    %83 = vector.broadcast %cst_22 : f32 to vector<8x384xf32>
    %84 = arith.addf %83, %82 : vector<8x384xf32>
    %85 = arith.divf %83, %84 : vector<8x384xf32>
    %86 = vector.extract_strided_slice %85 {offsets = [0, 0], sizes = [8, 64], strides = [1, 1]} : vector<8x384xf32> to vector<8x64xf32>
    %87 = vector.extract_strided_slice %85 {offsets = [0, 128], sizes = [8, 64], strides = [1, 1]} : vector<8x384xf32> to vector<8x64xf32>
    %88 = vector.extract_strided_slice %85 {offsets = [0, 256], sizes = [8, 64], strides = [1, 1]} : vector<8x384xf32> to vector<8x64xf32>
    %89 = vector.extract_strided_slice %79 {offsets = [0, 384], sizes = [8, 64], strides = [1, 1]} : vector<8x512xf32> to vector<8x64xf32>
    %90 = math.tanh %89 : vector<8x64xf32>
    %91 = arith.mulf %87, %71 : vector<8x64xf32>
    %92 = arith.mulf %86, %90 : vector<8x64xf32>
    %93 = arith.addf %91, %92 : vector<8x64xf32>
    %94 = math.tanh %93 : vector<8x64xf32>
    %95 = arith.mulf %88, %94 : vector<8x64xf32>
    %96 = vector.extract_strided_slice %95 {offsets = [0, 0], sizes = [8, 32], strides = [1, 1]} : vector<8x64xf32> to vector<8x32xf32>
    %97 = vector.extract_strided_slice %95 {offsets = [0, 32], sizes = [8, 32], strides = [1, 1]} : vector<8x64xf32> to vector<8x32xf32>
    %c32 = arith.constant 32 : index
    %c0_23 = arith.constant 0 : index
    %98 = vector.load %arg6[%c32, %c0_23] : memref<64x512xf32, #tpu.memory_space<vmem>>, vector<8x512xf32>
    %99 = arith.truncf %95 : vector<8x64xf32> to vector<8x64xbf16>
    %cst_24 = arith.constant dense<0.000000e+00> : vector<8x512xf32>
    %100 = tpu.matmul %99, %7, %cst_24 {dimension_numbers = #tpu.dot_dimension_numbers<[1], [0], [0], [1], [0, 0, 1, 1], [], []>} : vector<8x64xbf16>, vector<64x512xbf16>, vector<8x512xf32> -> vector<8x512xf32>
    %101 = arith.addf %98, %100 : vector<8x512xf32>
    %102 = vector.extract_strided_slice %101 {offsets = [0, 0], sizes = [8, 384], strides = [1, 1]} : vector<8x512xf32> to vector<8x384xf32>
    %103 = arith.negf %102 : vector<8x384xf32>
    %104 = math.exp %103 : vector<8x384xf32>
    %cst_25 = arith.constant 1.000000e+00 : f32
    %105 = vector.broadcast %cst_25 : f32 to vector<8x384xf32>
    %106 = arith.addf %105, %104 : vector<8x384xf32>
    %107 = arith.divf %105, %106 : vector<8x384xf32>
    %108 = vector.extract_strided_slice %107 {offsets = [0, 0], sizes = [8, 64], strides = [1, 1]} : vector<8x384xf32> to vector<8x64xf32>
    %109 = vector.extract_strided_slice %107 {offsets = [0, 128], sizes = [8, 64], strides = [1, 1]} : vector<8x384xf32> to vector<8x64xf32>
    %110 = vector.extract_strided_slice %107 {offsets = [0, 256], sizes = [8, 64], strides = [1, 1]} : vector<8x384xf32> to vector<8x64xf32>
    %111 = vector.extract_strided_slice %101 {offsets = [0, 384], sizes = [8, 64], strides = [1, 1]} : vector<8x512xf32> to vector<8x64xf32>
    %112 = math.tanh %111 : vector<8x64xf32>
    %113 = arith.mulf %109, %93 : vector<8x64xf32>
    %114 = arith.mulf %108, %112 : vector<8x64xf32>
    %115 = arith.addf %113, %114 : vector<8x64xf32>
    %116 = math.tanh %115 : vector<8x64xf32>
    %117 = arith.mulf %110, %116 : vector<8x64xf32>
    %118 = vector.extract_strided_slice %117 {offsets = [0, 0], sizes = [8, 32], strides = [1, 1]} : vector<8x64xf32> to vector<8x32xf32>
    %119 = vector.extract_strided_slice %117 {offsets = [0, 32], sizes = [8, 32], strides = [1, 1]} : vector<8x64xf32> to vector<8x32xf32>
    %c40 = arith.constant 40 : index
    %c0_26 = arith.constant 0 : index
    %120 = vector.load %arg6[%c40, %c0_26] : memref<64x512xf32, #tpu.memory_space<vmem>>, vector<8x512xf32>
    %121 = arith.truncf %117 : vector<8x64xf32> to vector<8x64xbf16>
    %cst_27 = arith.constant dense<0.000000e+00> : vector<8x512xf32>
    %122 = tpu.matmul %121, %7, %cst_27 {dimension_numbers = #tpu.dot_dimension_numbers<[1], [0], [0], [1], [0, 0, 1, 1], [], []>} : vector<8x64xbf16>, vector<64x512xbf16>, vector<8x512xf32> -> vector<8x512xf32>
    %123 = arith.addf %120, %122 : vector<8x512xf32>
    %124 = vector.extract_strided_slice %123 {offsets = [0, 0], sizes = [8, 384], strides = [1, 1]} : vector<8x512xf32> to vector<8x384xf32>
    %125 = arith.negf %124 : vector<8x384xf32>
    %126 = math.exp %125 : vector<8x384xf32>
    %cst_28 = arith.constant 1.000000e+00 : f32
    %127 = vector.broadcast %cst_28 : f32 to vector<8x384xf32>
    %128 = arith.addf %127, %126 : vector<8x384xf32>
    %129 = arith.divf %127, %128 : vector<8x384xf32>
    %130 = vector.extract_strided_slice %129 {offsets = [0, 0], sizes = [8, 64], strides = [1, 1]} : vector<8x384xf32> to vector<8x64xf32>
    %131 = vector.extract_strided_slice %129 {offsets = [0, 128], sizes = [8, 64], strides = [1, 1]} : vector<8x384xf32> to vector<8x64xf32>
    %132 = vector.extract_strided_slice %129 {offsets = [0, 256], sizes = [8, 64], strides = [1, 1]} : vector<8x384xf32> to vector<8x64xf32>
    %133 = vector.extract_strided_slice %123 {offsets = [0, 384], sizes = [8, 64], strides = [1, 1]} : vector<8x512xf32> to vector<8x64xf32>
    %134 = math.tanh %133 : vector<8x64xf32>
    %135 = arith.mulf %131, %115 : vector<8x64xf32>
    %136 = arith.mulf %130, %134 : vector<8x64xf32>
    %137 = arith.addf %135, %136 : vector<8x64xf32>
    %138 = math.tanh %137 : vector<8x64xf32>
    %139 = arith.mulf %132, %138 : vector<8x64xf32>
    %140 = vector.extract_strided_slice %139 {offsets = [0, 0], sizes = [8, 32], strides = [1, 1]} : vector<8x64xf32> to vector<8x32xf32>
    %141 = vector.extract_strided_slice %139 {offsets = [0, 32], sizes = [8, 32], strides = [1, 1]} : vector<8x64xf32> to vector<8x32xf32>
    %c48 = arith.constant 48 : index
    %c0_29 = arith.constant 0 : index
    %142 = vector.load %arg6[%c48, %c0_29] : memref<64x512xf32, #tpu.memory_space<vmem>>, vector<8x512xf32>
    %143 = arith.truncf %139 : vector<8x64xf32> to vector<8x64xbf16>
    %cst_30 = arith.constant dense<0.000000e+00> : vector<8x512xf32>
    %144 = tpu.matmul %143, %7, %cst_30 {dimension_numbers = #tpu.dot_dimension_numbers<[1], [0], [0], [1], [0, 0, 1, 1], [], []>} : vector<8x64xbf16>, vector<64x512xbf16>, vector<8x512xf32> -> vector<8x512xf32>
    %145 = arith.addf %142, %144 : vector<8x512xf32>
    %146 = vector.extract_strided_slice %145 {offsets = [0, 0], sizes = [8, 384], strides = [1, 1]} : vector<8x512xf32> to vector<8x384xf32>
    %147 = arith.negf %146 : vector<8x384xf32>
    %148 = math.exp %147 : vector<8x384xf32>
    %cst_31 = arith.constant 1.000000e+00 : f32
    %149 = vector.broadcast %cst_31 : f32 to vector<8x384xf32>
    %150 = arith.addf %149, %148 : vector<8x384xf32>
    %151 = arith.divf %149, %150 : vector<8x384xf32>
    %152 = vector.extract_strided_slice %151 {offsets = [0, 0], sizes = [8, 64], strides = [1, 1]} : vector<8x384xf32> to vector<8x64xf32>
    %153 = vector.extract_strided_slice %151 {offsets = [0, 128], sizes = [8, 64], strides = [1, 1]} : vector<8x384xf32> to vector<8x64xf32>
    %154 = vector.extract_strided_slice %151 {offsets = [0, 256], sizes = [8, 64], strides = [1, 1]} : vector<8x384xf32> to vector<8x64xf32>
    %155 = vector.extract_strided_slice %145 {offsets = [0, 384], sizes = [8, 64], strides = [1, 1]} : vector<8x512xf32> to vector<8x64xf32>
    %156 = math.tanh %155 : vector<8x64xf32>
    %157 = arith.mulf %153, %137 : vector<8x64xf32>
    %158 = arith.mulf %152, %156 : vector<8x64xf32>
    %159 = arith.addf %157, %158 : vector<8x64xf32>
    %160 = math.tanh %159 : vector<8x64xf32>
    %161 = arith.mulf %154, %160 : vector<8x64xf32>
    %162 = vector.extract_strided_slice %161 {offsets = [0, 0], sizes = [8, 32], strides = [1, 1]} : vector<8x64xf32> to vector<8x32xf32>
    %163 = vector.extract_strided_slice %161 {offsets = [0, 32], sizes = [8, 32], strides = [1, 1]} : vector<8x64xf32> to vector<8x32xf32>
    %c56 = arith.constant 56 : index
    %c0_32 = arith.constant 0 : index
    %164 = vector.load %arg6[%c56, %c0_32] : memref<64x512xf32, #tpu.memory_space<vmem>>, vector<8x512xf32>
    %165 = arith.truncf %161 : vector<8x64xf32> to vector<8x64xbf16>
    %cst_33 = arith.constant dense<0.000000e+00> : vector<8x512xf32>
    %166 = tpu.matmul %165, %7, %cst_33 {dimension_numbers = #tpu.dot_dimension_numbers<[1], [0], [0], [1], [0, 0, 1, 1], [], []>} : vector<8x64xbf16>, vector<64x512xbf16>, vector<8x512xf32> -> vector<8x512xf32>
    %167 = arith.addf %164, %166 : vector<8x512xf32>
    %168 = vector.extract_strided_slice %167 {offsets = [0, 0], sizes = [8, 384], strides = [1, 1]} : vector<8x512xf32> to vector<8x384xf32>
    %169 = arith.negf %168 : vector<8x384xf32>
    %170 = math.exp %169 : vector<8x384xf32>
    %cst_34 = arith.constant 1.000000e+00 : f32
    %171 = vector.broadcast %cst_34 : f32 to vector<8x384xf32>
    %172 = arith.addf %171, %170 : vector<8x384xf32>
    %173 = arith.divf %171, %172 : vector<8x384xf32>
    %174 = vector.extract_strided_slice %173 {offsets = [0, 0], sizes = [8, 64], strides = [1, 1]} : vector<8x384xf32> to vector<8x64xf32>
    %175 = vector.extract_strided_slice %173 {offsets = [0, 128], sizes = [8, 64], strides = [1, 1]} : vector<8x384xf32> to vector<8x64xf32>
    %176 = vector.extract_strided_slice %173 {offsets = [0, 256], sizes = [8, 64], strides = [1, 1]} : vector<8x384xf32> to vector<8x64xf32>
    %177 = vector.extract_strided_slice %167 {offsets = [0, 384], sizes = [8, 64], strides = [1, 1]} : vector<8x512xf32> to vector<8x64xf32>
    %178 = math.tanh %177 : vector<8x64xf32>
    %179 = arith.mulf %175, %159 : vector<8x64xf32>
    %180 = arith.mulf %174, %178 : vector<8x64xf32>
    %181 = arith.addf %179, %180 : vector<8x64xf32>
    %182 = math.tanh %181 : vector<8x64xf32>
    %183 = arith.mulf %176, %182 : vector<8x64xf32>
    %184 = vector.extract_strided_slice %183 {offsets = [0, 0], sizes = [8, 32], strides = [1, 1]} : vector<8x64xf32> to vector<8x32xf32>
    %185 = vector.extract_strided_slice %183 {offsets = [0, 32], sizes = [8, 32], strides = [1, 1]} : vector<8x64xf32> to vector<8x32xf32>
    %186 = tpu.concatenate %30, %52, %74, %96, %118, %140, %162, %184 in 0 : vector<8x32xf32>, vector<8x32xf32>, vector<8x32xf32>, vector<8x32xf32>, vector<8x32xf32>, vector<8x32xf32>, vector<8x32xf32>, vector<8x32xf32> -> vector<64x32xf32>
    %187 = tpu.concatenate %185, %163, %141, %119, %97, %75, %53, %31 in 0 : vector<8x32xf32>, vector<8x32xf32>, vector<8x32xf32>, vector<8x32xf32>, vector<8x32xf32>, vector<8x32xf32>, vector<8x32xf32>, vector<8x32xf32> -> vector<64x32xf32>
    %188 = tpu.concatenate %186, %187 in 1 : vector<64x32xf32>, vector<64x32xf32> -> vector<64x64xf32>
    %189 = arith.truncf %188 : vector<64x64xf32> to vector<64x64xbf16>
    %c128 = arith.constant 128 : index
    %c0_35 = arith.constant 0 : index
    %190 = vector.load %arg2[%c128, %c0_35] : memref<360x512xbf16, #tpu.memory_space<vmem>>, vector<64x8xbf16>
    %cst_36 = arith.constant dense<0.000000e+00> : vector<64x8xf32>
    %191 = tpu.matmul %189, %190, %cst_36 {dimension_numbers = #tpu.dot_dimension_numbers<[1], [0], [0], [1], [0, 0, 1, 1], [], []>} : vector<64x64xbf16>, vector<64x8xbf16>, vector<64x8xf32> -> vector<64x8xf32>
    %c8_37 = arith.constant 8 : index
    %c0_38 = arith.constant 0 : index
    %192 = vector.load %arg3[%c8_37, %c0_38] : memref<32x512xf32, #tpu.memory_space<vmem>>, vector<1x8xf32>
    %193 = vector.broadcast %192 : vector<1x8xf32> to vector<64x8xf32>
    %194 = arith.addf %191, %193 : vector<64x8xf32>
    %c0_39 = arith.constant 0 : index
    %c0_40 = arith.constant 0 : index
    %195 = vector.load %arg4[%c0_39, %c0_40] : memref<64x8xf32, #tpu.memory_space<vmem>>, vector<64x8xf32>
    tpu.vector_store %arg4[%c0_39, %c0_40], %194 {strides = array<i32>} : memref<64x8xf32, #tpu.memory_space<vmem>>, vector<64x8xf32>,
    %cst_41 = arith.constant dense<0xFF800000> : vector<64xf32>
    %196 = vector.multi_reduction <maximumf>, %194, %cst_41 [1] : vector<64x8xf32> to vector<64xf32>
    %197 = vector.shape_cast %196 : vector<64xf32> to vector<64x1xf32>
    %198 = tpu.iota {dimensions = array<i32: 1>} : vector<64x8xi32>
    %199 = arith.sitofp %198 : vector<64x8xi32> to vector<64x8xf32>
    %200 = vector.broadcast %197 : vector<64x1xf32> to vector<64x8xf32>
    %201 = arith.cmpf oeq, %194, %200 : vector<64x8xf32>
    %cst_42 = arith.constant 8.000000e+00 : f32
    %202 = vector.broadcast %cst_42 : f32 to vector<64x8xf32>
    %203 = arith.select %201, %199, %202 : vector<64x8xi1>, vector<64x8xf32>
    %cst_43 = arith.constant dense<0x7F800000> : vector<64xf32>
    %204 = vector.multi_reduction <minimumf>, %203, %cst_43 [1] : vector<64x8xf32> to vector<64xf32>
    %205 = vector.shape_cast %204 : vector<64xf32> to vector<64x1xf32>
    %206 = vector.broadcast %205 : vector<64x1xf32> to vector<64x8xf32>
    %207 = arith.cmpf oeq, %199, %206 : vector<64x8xf32>
    %208 = arith.extui %207 : vector<64x8xi1> to vector<64x8xi32>
    %209 = arith.sitofp %208 : vector<64x8xi32> to vector<64x8xf32>
    %210 = arith.truncf %209 : vector<64x8xf32> to vector<64x8xbf16>
    %c192 = arith.constant 192 : index
    %c0_44 = arith.constant 0 : index
    %211 = vector.load %arg2[%c192, %c0_44] : memref<360x512xbf16, #tpu.memory_space<vmem>>, vector<8x32xbf16>
    %cst_45 = arith.constant dense<0.000000e+00> : vector<64x32xf32>
    %212 = tpu.matmul %210, %211, %cst_45 {dimension_numbers = #tpu.dot_dimension_numbers<[1], [0], [0], [1], [0, 0, 1, 1], [], []>} : vector<64x8xbf16>, vector<8x32xbf16>, vector<64x32xf32> -> vector<64x32xf32>
    %213 = arith.truncf %212 : vector<64x32xf32> to vector<64x32xbf16>
    %c0_46 = arith.constant 0 : index
    %c0_47 = arith.constant 0 : index
    %214 = vector.load %arg1[%c0_46, %c0_47] : memref<64x32xbf16, #tpu.memory_space<vmem>>, vector<64x32xbf16>
    %215 = tpu.concatenate %214, %213 in 0 : vector<64x32xbf16>, vector<64x32xbf16> -> vector<128x32xbf16>
    %c200 = arith.constant 200 : index
    %c0_48 = arith.constant 0 : index
    %216 = vector.load %arg2[%c200, %c0_48] : memref<360x512xbf16, #tpu.memory_space<vmem>>, vector<32x512xbf16>
    %cst_49 = arith.constant dense<0.000000e+00> : vector<128x512xf32>
    %217 = tpu.matmul %215, %216, %cst_49 {dimension_numbers = #tpu.dot_dimension_numbers<[1], [0], [0], [1], [0, 0, 1, 1], [], []>} : vector<128x32xbf16>, vector<32x512xbf16>, vector<128x512xf32> -> vector<128x512xf32>
    %c16_50 = arith.constant 16 : index
    %c0_51 = arith.constant 0 : index
    %218 = vector.load %arg3[%c16_50, %c0_51] : memref<32x512xf32, #tpu.memory_space<vmem>>, vector<1x512xf32>
    %219 = vector.broadcast %218 : vector<1x512xf32> to vector<128x512xf32>
    %220 = arith.addf %217, %219 : vector<128x512xf32>
    %c0_52 = arith.constant 0 : index
    %c0_53 = arith.constant 0 : index
    %221 = vector.load %arg7[%c0_52, %c0_53] : memref<128x512xf32, #tpu.memory_space<vmem>>, vector<128x512xf32>
    tpu.vector_store %arg7[%c0_52, %c0_53], %220 {strides = array<i32>} : memref<128x512xf32, #tpu.memory_space<vmem>>, vector<128x512xf32>,
    %c232 = arith.constant 232 : index
    %c0_54 = arith.constant 0 : index
    %222 = vector.load %arg2[%c232, %c0_54] : memref<360x512xbf16, #tpu.memory_space<vmem>>, vector<96x512xbf16>
    %cst_55 = arith.constant 0.000000e+00 : f32
    %223 = vector.broadcast %cst_55 : f32 to vector<8x96xf32>
    %cst_56 = arith.constant 0.000000e+00 : f32
    %224 = vector.broadcast %cst_56 : f32 to vector<8x96xf32>
    %cst_57 = arith.constant 0.000000e+00 : f32
    %225 = vector.broadcast %cst_57 : f32 to vector<8x32xf32>
    %cst_58 = arith.constant 0.000000e+00 : f32
    %226 = vector.broadcast %cst_58 : f32 to vector<8x32xf32>
    %cst_59 = arith.constant 0.000000e+00 : f32
    %227 = vector.broadcast %cst_59 : f32 to vector<8x64xf32>
    %c0_60 = arith.constant 0 : index
    %c0_61 = arith.constant 0 : index
    %228 = vector.load %arg7[%c0_60, %c0_61] : memref<128x512xf32, #tpu.memory_space<vmem>>, vector<8x512xf32>
    %229 = arith.truncf %223 : vector<8x96xf32> to vector<8x96xbf16>
    %cst_62 = arith.constant dense<0.000000e+00> : vector<8x512xf32>
    %230 = tpu.matmul %229, %222, %cst_62 {dimension_numbers = #tpu.dot_dimension_numbers<[1], [0], [0], [1], [0, 0, 1, 1], [], []>} : vector<8x96xbf16>, vector<96x512xbf16>, vector<8x512xf32> -> vector<8x512xf32>
    %231 = arith.addf %228, %230 : vector<8x512xf32>
    %232 = vector.extract_strided_slice %231 {offsets = [0, 0], sizes = [8, 384], strides = [1, 1]} : vector<8x512xf32> to vector<8x384xf32>
    %233 = arith.negf %232 : vector<8x384xf32>
    %234 = math.exp %233 : vector<8x384xf32>
    %cst_63 = arith.constant 1.000000e+00 : f32
    %235 = vector.broadcast %cst_63 : f32 to vector<8x384xf32>
    %236 = arith.addf %235, %234 : vector<8x384xf32>
    %237 = arith.divf %235, %236 : vector<8x384xf32>
    %238 = vector.extract_strided_slice %237 {offsets = [0, 0], sizes = [8, 96], strides = [1, 1]} : vector<8x384xf32> to vector<8x96xf32>
    %239 = vector.extract_strided_slice %237 {offsets = [0, 128], sizes = [8, 96], strides = [1, 1]} : vector<8x384xf32> to vector<8x96xf32>
    %240 = vector.extract_strided_slice %237 {offsets = [0, 256], sizes = [8, 96], strides = [1, 1]} : vector<8x384xf32> to vector<8x96xf32>
    %241 = vector.extract_strided_slice %231 {offsets = [0, 384], sizes = [8, 96], strides = [1, 1]} : vector<8x512xf32> to vector<8x96xf32>
    %242 = math.tanh %241 : vector<8x96xf32>
    %243 = arith.mulf %239, %224 : vector<8x96xf32>
    %244 = arith.mulf %238, %242 : vector<8x96xf32>
    %245 = arith.addf %243, %244 : vector<8x96xf32>
    %246 = math.tanh %245 : vector<8x96xf32>
    %247 = arith.mulf %240, %246 : vector<8x96xf32>
    %248 = vector.extract_strided_slice %247 {offsets = [0, 0], sizes = [8, 32], strides = [1, 1]} : vector<8x96xf32> to vector<8x32xf32>
    %249 = tpu.concatenate %248, %227 in 1 : vector<8x32xf32>, vector<8x64xf32> -> vector<8x96xf32>
    %250 = vector.extract_strided_slice %245 {offsets = [0, 0], sizes = [8, 32], strides = [1, 1]} : vector<8x96xf32> to vector<8x32xf32>
    %251 = tpu.concatenate %250, %227 in 1 : vector<8x32xf32>, vector<8x64xf32> -> vector<8x96xf32>
    %c8_64 = arith.constant 8 : index
    %c0_65 = arith.constant 0 : index
    %252 = vector.load %arg7[%c8_64, %c0_65] : memref<128x512xf32, #tpu.memory_space<vmem>>, vector<8x512xf32>
    %253 = arith.truncf %249 : vector<8x96xf32> to vector<8x96xbf16>
    %cst_66 = arith.constant dense<0.000000e+00> : vector<8x512xf32>
    %254 = tpu.matmul %253, %222, %cst_66 {dimension_numbers = #tpu.dot_dimension_numbers<[1], [0], [0], [1], [0, 0, 1, 1], [], []>} : vector<8x96xbf16>, vector<96x512xbf16>, vector<8x512xf32> -> vector<8x512xf32>
    %255 = arith.addf %252, %254 : vector<8x512xf32>
    %256 = vector.extract_strided_slice %255 {offsets = [0, 0], sizes = [8, 384], strides = [1, 1]} : vector<8x512xf32> to vector<8x384xf32>
    %257 = arith.negf %256 : vector<8x384xf32>
    %258 = math.exp %257 : vector<8x384xf32>
    %cst_67 = arith.constant 1.000000e+00 : f32
    %259 = vector.broadcast %cst_67 : f32 to vector<8x384xf32>
    %260 = arith.addf %259, %258 : vector<8x384xf32>
    %261 = arith.divf %259, %260 : vector<8x384xf32>
    %262 = vector.extract_strided_slice %261 {offsets = [0, 0], sizes = [8, 96], strides = [1, 1]} : vector<8x384xf32> to vector<8x96xf32>
    %263 = vector.extract_strided_slice %261 {offsets = [0, 128], sizes = [8, 96], strides = [1, 1]} : vector<8x384xf32> to vector<8x96xf32>
    %264 = vector.extract_strided_slice %261 {offsets = [0, 256], sizes = [8, 96], strides = [1, 1]} : vector<8x384xf32> to vector<8x96xf32>
    %265 = vector.extract_strided_slice %255 {offsets = [0, 384], sizes = [8, 96], strides = [1, 1]} : vector<8x512xf32> to vector<8x96xf32>
    %266 = math.tanh %265 : vector<8x96xf32>
    %267 = arith.mulf %263, %251 : vector<8x96xf32>
    %268 = arith.mulf %262, %266 : vector<8x96xf32>
    %269 = arith.addf %267, %268 : vector<8x96xf32>
    %270 = math.tanh %269 : vector<8x96xf32>
    %271 = arith.mulf %264, %270 : vector<8x96xf32>
    %272 = vector.extract_strided_slice %271 {offsets = [0, 0], sizes = [8, 64], strides = [1, 1]} : vector<8x96xf32> to vector<8x64xf32>
    %273 = tpu.concatenate %272, %226 in 1 : vector<8x64xf32>, vector<8x32xf32> -> vector<8x96xf32>
    %274 = vector.extract_strided_slice %269 {offsets = [0, 0], sizes = [8, 64], strides = [1, 1]} : vector<8x96xf32> to vector<8x64xf32>
    %275 = tpu.concatenate %274, %226 in 1 : vector<8x64xf32>, vector<8x32xf32> -> vector<8x96xf32>
    %c16_68 = arith.constant 16 : index
    %c0_69 = arith.constant 0 : index
    %276 = vector.load %arg7[%c16_68, %c0_69] : memref<128x512xf32, #tpu.memory_space<vmem>>, vector<8x512xf32>
    %277 = arith.truncf %273 : vector<8x96xf32> to vector<8x96xbf16>
    %cst_70 = arith.constant dense<0.000000e+00> : vector<8x512xf32>
    %278 = tpu.matmul %277, %222, %cst_70 {dimension_numbers = #tpu.dot_dimension_numbers<[1], [0], [0], [1], [0, 0, 1, 1], [], []>} : vector<8x96xbf16>, vector<96x512xbf16>, vector<8x512xf32> -> vector<8x512xf32>
    %279 = arith.addf %276, %278 : vector<8x512xf32>
    %280 = vector.extract_strided_slice %279 {offsets = [0, 0], sizes = [8, 384], strides = [1, 1]} : vector<8x512xf32> to vector<8x384xf32>
    %281 = arith.negf %280 : vector<8x384xf32>
    %282 = math.exp %281 : vector<8x384xf32>
    %cst_71 = arith.constant 1.000000e+00 : f32
    %283 = vector.broadcast %cst_71 : f32 to vector<8x384xf32>
    %284 = arith.addf %283, %282 : vector<8x384xf32>
    %285 = arith.divf %283, %284 : vector<8x384xf32>
    %286 = vector.extract_strided_slice %285 {offsets = [0, 0], sizes = [8, 96], strides = [1, 1]} : vector<8x384xf32> to vector<8x96xf32>
    %287 = vector.extract_strided_slice %285 {offsets = [0, 128], sizes = [8, 96], strides = [1, 1]} : vector<8x384xf32> to vector<8x96xf32>
    %288 = vector.extract_strided_slice %285 {offsets = [0, 256], sizes = [8, 96], strides = [1, 1]} : vector<8x384xf32> to vector<8x96xf32>
    %289 = vector.extract_strided_slice %279 {offsets = [0, 384], sizes = [8, 96], strides = [1, 1]} : vector<8x512xf32> to vector<8x96xf32>
    %290 = math.tanh %289 : vector<8x96xf32>
    %291 = arith.mulf %287, %275 : vector<8x96xf32>
    %292 = arith.mulf %286, %290 : vector<8x96xf32>
    %293 = arith.addf %291, %292 : vector<8x96xf32>
    %294 = math.tanh %293 : vector<8x96xf32>
    %295 = arith.mulf %288, %294 : vector<8x96xf32>
    %296 = vector.extract_strided_slice %295 {offsets = [0, 64], sizes = [8, 32], strides = [1, 1]} : vector<8x96xf32> to vector<8x32xf32>
    %297 = arith.addf %225, %296 : vector<8x32xf32>
    %c24_72 = arith.constant 24 : index
    %c0_73 = arith.constant 0 : index
    %298 = vector.load %arg7[%c24_72, %c0_73] : memref<128x512xf32, #tpu.memory_space<vmem>>, vector<8x512xf32>
    %299 = arith.truncf %295 : vector<8x96xf32> to vector<8x96xbf16>
    %cst_74 = arith.constant dense<0.000000e+00> : vector<8x512xf32>
    %300 = tpu.matmul %299, %222, %cst_74 {dimension_numbers = #tpu.dot_dimension_numbers<[1], [0], [0], [1], [0, 0, 1, 1], [], []>} : vector<8x96xbf16>, vector<96x512xbf16>, vector<8x512xf32> -> vector<8x512xf32>
    %301 = arith.addf %298, %300 : vector<8x512xf32>
    %302 = vector.extract_strided_slice %301 {offsets = [0, 0], sizes = [8, 384], strides = [1, 1]} : vector<8x512xf32> to vector<8x384xf32>
    %303 = arith.negf %302 : vector<8x384xf32>
    %304 = math.exp %303 : vector<8x384xf32>
    %cst_75 = arith.constant 1.000000e+00 : f32
    %305 = vector.broadcast %cst_75 : f32 to vector<8x384xf32>
    %306 = arith.addf %305, %304 : vector<8x384xf32>
    %307 = arith.divf %305, %306 : vector<8x384xf32>
    %308 = vector.extract_strided_slice %307 {offsets = [0, 0], sizes = [8, 96], strides = [1, 1]} : vector<8x384xf32> to vector<8x96xf32>
    %309 = vector.extract_strided_slice %307 {offsets = [0, 128], sizes = [8, 96], strides = [1, 1]} : vector<8x384xf32> to vector<8x96xf32>
    %310 = vector.extract_strided_slice %307 {offsets = [0, 256], sizes = [8, 96], strides = [1, 1]} : vector<8x384xf32> to vector<8x96xf32>
    %311 = vector.extract_strided_slice %301 {offsets = [0, 384], sizes = [8, 96], strides = [1, 1]} : vector<8x512xf32> to vector<8x96xf32>
    %312 = math.tanh %311 : vector<8x96xf32>
    %313 = arith.mulf %309, %293 : vector<8x96xf32>
    %314 = arith.mulf %308, %312 : vector<8x96xf32>
    %315 = arith.addf %313, %314 : vector<8x96xf32>
    %316 = math.tanh %315 : vector<8x96xf32>
    %317 = arith.mulf %310, %316 : vector<8x96xf32>
    %318 = vector.extract_strided_slice %317 {offsets = [0, 64], sizes = [8, 32], strides = [1, 1]} : vector<8x96xf32> to vector<8x32xf32>
    %319 = arith.addf %297, %318 : vector<8x32xf32>
    %c32_76 = arith.constant 32 : index
    %c0_77 = arith.constant 0 : index
    %320 = vector.load %arg7[%c32_76, %c0_77] : memref<128x512xf32, #tpu.memory_space<vmem>>, vector<8x512xf32>
    %321 = arith.truncf %317 : vector<8x96xf32> to vector<8x96xbf16>
    %cst_78 = arith.constant dense<0.000000e+00> : vector<8x512xf32>
    %322 = tpu.matmul %321, %222, %cst_78 {dimension_numbers = #tpu.dot_dimension_numbers<[1], [0], [0], [1], [0, 0, 1, 1], [], []>} : vector<8x96xbf16>, vector<96x512xbf16>, vector<8x512xf32> -> vector<8x512xf32>
    %323 = arith.addf %320, %322 : vector<8x512xf32>
    %324 = vector.extract_strided_slice %323 {offsets = [0, 0], sizes = [8, 384], strides = [1, 1]} : vector<8x512xf32> to vector<8x384xf32>
    %325 = arith.negf %324 : vector<8x384xf32>
    %326 = math.exp %325 : vector<8x384xf32>
    %cst_79 = arith.constant 1.000000e+00 : f32
    %327 = vector.broadcast %cst_79 : f32 to vector<8x384xf32>
    %328 = arith.addf %327, %326 : vector<8x384xf32>
    %329 = arith.divf %327, %328 : vector<8x384xf32>
    %330 = vector.extract_strided_slice %329 {offsets = [0, 0], sizes = [8, 96], strides = [1, 1]} : vector<8x384xf32> to vector<8x96xf32>
    %331 = vector.extract_strided_slice %329 {offsets = [0, 128], sizes = [8, 96], strides = [1, 1]} : vector<8x384xf32> to vector<8x96xf32>
    %332 = vector.extract_strided_slice %329 {offsets = [0, 256], sizes = [8, 96], strides = [1, 1]} : vector<8x384xf32> to vector<8x96xf32>
    %333 = vector.extract_strided_slice %323 {offsets = [0, 384], sizes = [8, 96], strides = [1, 1]} : vector<8x512xf32> to vector<8x96xf32>
    %334 = math.tanh %333 : vector<8x96xf32>
    %335 = arith.mulf %331, %315 : vector<8x96xf32>
    %336 = arith.mulf %330, %334 : vector<8x96xf32>
    %337 = arith.addf %335, %336 : vector<8x96xf32>
    %338 = math.tanh %337 : vector<8x96xf32>
    %339 = arith.mulf %332, %338 : vector<8x96xf32>
    %340 = vector.extract_strided_slice %339 {offsets = [0, 64], sizes = [8, 32], strides = [1, 1]} : vector<8x96xf32> to vector<8x32xf32>
    %341 = arith.addf %319, %340 : vector<8x32xf32>
    %c40_80 = arith.constant 40 : index
    %c0_81 = arith.constant 0 : index
    %342 = vector.load %arg7[%c40_80, %c0_81] : memref<128x512xf32, #tpu.memory_space<vmem>>, vector<8x512xf32>
    %343 = arith.truncf %339 : vector<8x96xf32> to vector<8x96xbf16>
    %cst_82 = arith.constant dense<0.000000e+00> : vector<8x512xf32>
    %344 = tpu.matmul %343, %222, %cst_82 {dimension_numbers = #tpu.dot_dimension_numbers<[1], [0], [0], [1], [0, 0, 1, 1], [], []>} : vector<8x96xbf16>, vector<96x512xbf16>, vector<8x512xf32> -> vector<8x512xf32>
    %345 = arith.addf %342, %344 : vector<8x512xf32>
    %346 = vector.extract_strided_slice %345 {offsets = [0, 0], sizes = [8, 384], strides = [1, 1]} : vector<8x512xf32> to vector<8x384xf32>
    %347 = arith.negf %346 : vector<8x384xf32>
    %348 = math.exp %347 : vector<8x384xf32>
    %cst_83 = arith.constant 1.000000e+00 : f32
    %349 = vector.broadcast %cst_83 : f32 to vector<8x384xf32>
    %350 = arith.addf %349, %348 : vector<8x384xf32>
    %351 = arith.divf %349, %350 : vector<8x384xf32>
    %352 = vector.extract_strided_slice %351 {offsets = [0, 0], sizes = [8, 96], strides = [1, 1]} : vector<8x384xf32> to vector<8x96xf32>
    %353 = vector.extract_strided_slice %351 {offsets = [0, 128], sizes = [8, 96], strides = [1, 1]} : vector<8x384xf32> to vector<8x96xf32>
    %354 = vector.extract_strided_slice %351 {offsets = [0, 256], sizes = [8, 96], strides = [1, 1]} : vector<8x384xf32> to vector<8x96xf32>
    %355 = vector.extract_strided_slice %345 {offsets = [0, 384], sizes = [8, 96], strides = [1, 1]} : vector<8x512xf32> to vector<8x96xf32>
    %356 = math.tanh %355 : vector<8x96xf32>
    %357 = arith.mulf %353, %337 : vector<8x96xf32>
    %358 = arith.mulf %352, %356 : vector<8x96xf32>
    %359 = arith.addf %357, %358 : vector<8x96xf32>
    %360 = math.tanh %359 : vector<8x96xf32>
    %361 = arith.mulf %354, %360 : vector<8x96xf32>
    %362 = vector.extract_strided_slice %361 {offsets = [0, 64], sizes = [8, 32], strides = [1, 1]} : vector<8x96xf32> to vector<8x32xf32>
    %363 = arith.addf %341, %362 : vector<8x32xf32>
    %c48_84 = arith.constant 48 : index
    %c0_85 = arith.constant 0 : index
    %364 = vector.load %arg7[%c48_84, %c0_85] : memref<128x512xf32, #tpu.memory_space<vmem>>, vector<8x512xf32>
    %365 = arith.truncf %361 : vector<8x96xf32> to vector<8x96xbf16>
    %cst_86 = arith.constant dense<0.000000e+00> : vector<8x512xf32>
    %366 = tpu.matmul %365, %222, %cst_86 {dimension_numbers = #tpu.dot_dimension_numbers<[1], [0], [0], [1], [0, 0, 1, 1], [], []>} : vector<8x96xbf16>, vector<96x512xbf16>, vector<8x512xf32> -> vector<8x512xf32>
    %367 = arith.addf %364, %366 : vector<8x512xf32>
    %368 = vector.extract_strided_slice %367 {offsets = [0, 0], sizes = [8, 384], strides = [1, 1]} : vector<8x512xf32> to vector<8x384xf32>
    %369 = arith.negf %368 : vector<8x384xf32>
    %370 = math.exp %369 : vector<8x384xf32>
    %cst_87 = arith.constant 1.000000e+00 : f32
    %371 = vector.broadcast %cst_87 : f32 to vector<8x384xf32>
    %372 = arith.addf %371, %370 : vector<8x384xf32>
    %373 = arith.divf %371, %372 : vector<8x384xf32>
    %374 = vector.extract_strided_slice %373 {offsets = [0, 0], sizes = [8, 96], strides = [1, 1]} : vector<8x384xf32> to vector<8x96xf32>
    %375 = vector.extract_strided_slice %373 {offsets = [0, 128], sizes = [8, 96], strides = [1, 1]} : vector<8x384xf32> to vector<8x96xf32>
    %376 = vector.extract_strided_slice %373 {offsets = [0, 256], sizes = [8, 96], strides = [1, 1]} : vector<8x384xf32> to vector<8x96xf32>
    %377 = vector.extract_strided_slice %367 {offsets = [0, 384], sizes = [8, 96], strides = [1, 1]} : vector<8x512xf32> to vector<8x96xf32>
    %378 = math.tanh %377 : vector<8x96xf32>
    %379 = arith.mulf %375, %359 : vector<8x96xf32>
    %380 = arith.mulf %374, %378 : vector<8x96xf32>
    %381 = arith.addf %379, %380 : vector<8x96xf32>
    %382 = math.tanh %381 : vector<8x96xf32>
    %383 = arith.mulf %376, %382 : vector<8x96xf32>
    %384 = vector.extract_strided_slice %383 {offsets = [0, 64], sizes = [8, 32], strides = [1, 1]} : vector<8x96xf32> to vector<8x32xf32>
    %385 = arith.addf %363, %384 : vector<8x32xf32>
    %c56_88 = arith.constant 56 : index
    %c0_89 = arith.constant 0 : index
    %386 = vector.load %arg7[%c56_88, %c0_89] : memref<128x512xf32, #tpu.memory_space<vmem>>, vector<8x512xf32>
    %387 = arith.truncf %383 : vector<8x96xf32> to vector<8x96xbf16>
    %cst_90 = arith.constant dense<0.000000e+00> : vector<8x512xf32>
    %388 = tpu.matmul %387, %222, %cst_90 {dimension_numbers = #tpu.dot_dimension_numbers<[1], [0], [0], [1], [0, 0, 1, 1], [], []>} : vector<8x96xbf16>, vector<96x512xbf16>, vector<8x512xf32> -> vector<8x512xf32>
    %389 = arith.addf %386, %388 : vector<8x512xf32>
    %390 = vector.extract_strided_slice %389 {offsets = [0, 0], sizes = [8, 384], strides = [1, 1]} : vector<8x512xf32> to vector<8x384xf32>
    %391 = arith.negf %390 : vector<8x384xf32>
    %392 = math.exp %391 : vector<8x384xf32>
    %cst_91 = arith.constant 1.000000e+00 : f32
    %393 = vector.broadcast %cst_91 : f32 to vector<8x384xf32>
    %394 = arith.addf %393, %392 : vector<8x384xf32>
    %395 = arith.divf %393, %394 : vector<8x384xf32>
    %396 = vector.extract_strided_slice %395 {offsets = [0, 0], sizes = [8, 96], strides = [1, 1]} : vector<8x384xf32> to vector<8x96xf32>
    %397 = vector.extract_strided_slice %395 {offsets = [0, 128], sizes = [8, 96], strides = [1, 1]} : vector<8x384xf32> to vector<8x96xf32>
    %398 = vector.extract_strided_slice %395 {offsets = [0, 256], sizes = [8, 96], strides = [1, 1]} : vector<8x384xf32> to vector<8x96xf32>
    %399 = vector.extract_strided_slice %389 {offsets = [0, 384], sizes = [8, 96], strides = [1, 1]} : vector<8x512xf32> to vector<8x96xf32>
    %400 = math.tanh %399 : vector<8x96xf32>
    %401 = arith.mulf %397, %381 : vector<8x96xf32>
    %402 = arith.mulf %396, %400 : vector<8x96xf32>
    %403 = arith.addf %401, %402 : vector<8x96xf32>
    %404 = math.tanh %403 : vector<8x96xf32>
    %405 = arith.mulf %398, %404 : vector<8x96xf32>
    %406 = vector.extract_strided_slice %405 {offsets = [0, 64], sizes = [8, 32], strides = [1, 1]} : vector<8x96xf32> to vector<8x32xf32>
    %407 = arith.addf %385, %406 : vector<8x32xf32>
    %c64_92 = arith.constant 64 : index
    %c0_93 = arith.constant 0 : index
    %408 = vector.load %arg7[%c64_92, %c0_93] : memref<128x512xf32, #tpu.memory_space<vmem>>, vector<8x512xf32>
    %409 = arith.truncf %405 : vector<8x96xf32> to vector<8x96xbf16>
    %cst_94 = arith.constant dense<0.000000e+00> : vector<8x512xf32>
    %410 = tpu.matmul %409, %222, %cst_94 {dimension_numbers = #tpu.dot_dimension_numbers<[1], [0], [0], [1], [0, 0, 1, 1], [], []>} : vector<8x96xbf16>, vector<96x512xbf16>, vector<8x512xf32> -> vector<8x512xf32>
    %411 = arith.addf %408, %410 : vector<8x512xf32>
    %412 = vector.extract_strided_slice %411 {offsets = [0, 0], sizes = [8, 384], strides = [1, 1]} : vector<8x512xf32> to vector<8x384xf32>
    %413 = arith.negf %412 : vector<8x384xf32>
    %414 = math.exp %413 : vector<8x384xf32>
    %cst_95 = arith.constant 1.000000e+00 : f32
    %415 = vector.broadcast %cst_95 : f32 to vector<8x384xf32>
    %416 = arith.addf %415, %414 : vector<8x384xf32>
    %417 = arith.divf %415, %416 : vector<8x384xf32>
    %418 = vector.extract_strided_slice %417 {offsets = [0, 0], sizes = [8, 96], strides = [1, 1]} : vector<8x384xf32> to vector<8x96xf32>
    %419 = vector.extract_strided_slice %417 {offsets = [0, 128], sizes = [8, 96], strides = [1, 1]} : vector<8x384xf32> to vector<8x96xf32>
    %420 = vector.extract_strided_slice %417 {offsets = [0, 256], sizes = [8, 96], strides = [1, 1]} : vector<8x384xf32> to vector<8x96xf32>
    %421 = vector.extract_strided_slice %411 {offsets = [0, 384], sizes = [8, 96], strides = [1, 1]} : vector<8x512xf32> to vector<8x96xf32>
    %422 = math.tanh %421 : vector<8x96xf32>
    %423 = arith.mulf %419, %403 : vector<8x96xf32>
    %424 = arith.mulf %418, %422 : vector<8x96xf32>
    %425 = arith.addf %423, %424 : vector<8x96xf32>
    %426 = math.tanh %425 : vector<8x96xf32>
    %427 = arith.mulf %420, %426 : vector<8x96xf32>
    %428 = vector.extract_strided_slice %427 {offsets = [0, 64], sizes = [8, 32], strides = [1, 1]} : vector<8x96xf32> to vector<8x32xf32>
    %429 = arith.addf %407, %428 : vector<8x32xf32>
    %c72 = arith.constant 72 : index
    %c0_96 = arith.constant 0 : index
    %430 = vector.load %arg7[%c72, %c0_96] : memref<128x512xf32, #tpu.memory_space<vmem>>, vector<8x512xf32>
    %431 = arith.truncf %427 : vector<8x96xf32> to vector<8x96xbf16>
    %cst_97 = arith.constant dense<0.000000e+00> : vector<8x512xf32>
    %432 = tpu.matmul %431, %222, %cst_97 {dimension_numbers = #tpu.dot_dimension_numbers<[1], [0], [0], [1], [0, 0, 1, 1], [], []>} : vector<8x96xbf16>, vector<96x512xbf16>, vector<8x512xf32> -> vector<8x512xf32>
    %433 = arith.addf %430, %432 : vector<8x512xf32>
    %434 = vector.extract_strided_slice %433 {offsets = [0, 0], sizes = [8, 384], strides = [1, 1]} : vector<8x512xf32> to vector<8x384xf32>
    %435 = arith.negf %434 : vector<8x384xf32>
    %436 = math.exp %435 : vector<8x384xf32>
    %cst_98 = arith.constant 1.000000e+00 : f32
    %437 = vector.broadcast %cst_98 : f32 to vector<8x384xf32>
    %438 = arith.addf %437, %436 : vector<8x384xf32>
    %439 = arith.divf %437, %438 : vector<8x384xf32>
    %440 = vector.extract_strided_slice %439 {offsets = [0, 0], sizes = [8, 96], strides = [1, 1]} : vector<8x384xf32> to vector<8x96xf32>
    %441 = vector.extract_strided_slice %439 {offsets = [0, 128], sizes = [8, 96], strides = [1, 1]} : vector<8x384xf32> to vector<8x96xf32>
    %442 = vector.extract_strided_slice %439 {offsets = [0, 256], sizes = [8, 96], strides = [1, 1]} : vector<8x384xf32> to vector<8x96xf32>
    %443 = vector.extract_strided_slice %433 {offsets = [0, 384], sizes = [8, 96], strides = [1, 1]} : vector<8x512xf32> to vector<8x96xf32>
    %444 = math.tanh %443 : vector<8x96xf32>
    %445 = arith.mulf %441, %425 : vector<8x96xf32>
    %446 = arith.mulf %440, %444 : vector<8x96xf32>
    %447 = arith.addf %445, %446 : vector<8x96xf32>
    %448 = math.tanh %447 : vector<8x96xf32>
    %449 = arith.mulf %442, %448 : vector<8x96xf32>
    %450 = vector.extract_strided_slice %449 {offsets = [0, 64], sizes = [8, 32], strides = [1, 1]} : vector<8x96xf32> to vector<8x32xf32>
    %451 = arith.addf %429, %450 : vector<8x32xf32>
    %c80 = arith.constant 80 : index
    %c0_99 = arith.constant 0 : index
    %452 = vector.load %arg7[%c80, %c0_99] : memref<128x512xf32, #tpu.memory_space<vmem>>, vector<8x512xf32>
    %453 = arith.truncf %449 : vector<8x96xf32> to vector<8x96xbf16>
    %cst_100 = arith.constant dense<0.000000e+00> : vector<8x512xf32>
    %454 = tpu.matmul %453, %222, %cst_100 {dimension_numbers = #tpu.dot_dimension_numbers<[1], [0], [0], [1], [0, 0, 1, 1], [], []>} : vector<8x96xbf16>, vector<96x512xbf16>, vector<8x512xf32> -> vector<8x512xf32>
    %455 = arith.addf %452, %454 : vector<8x512xf32>
    %456 = vector.extract_strided_slice %455 {offsets = [0, 0], sizes = [8, 384], strides = [1, 1]} : vector<8x512xf32> to vector<8x384xf32>
    %457 = arith.negf %456 : vector<8x384xf32>
    %458 = math.exp %457 : vector<8x384xf32>
    %cst_101 = arith.constant 1.000000e+00 : f32
    %459 = vector.broadcast %cst_101 : f32 to vector<8x384xf32>
    %460 = arith.addf %459, %458 : vector<8x384xf32>
    %461 = arith.divf %459, %460 : vector<8x384xf32>
    %462 = vector.extract_strided_slice %461 {offsets = [0, 0], sizes = [8, 96], strides = [1, 1]} : vector<8x384xf32> to vector<8x96xf32>
    %463 = vector.extract_strided_slice %461 {offsets = [0, 128], sizes = [8, 96], strides = [1, 1]} : vector<8x384xf32> to vector<8x96xf32>
    %464 = vector.extract_strided_slice %461 {offsets = [0, 256], sizes = [8, 96], strides = [1, 1]} : vector<8x384xf32> to vector<8x96xf32>
    %465 = vector.extract_strided_slice %455 {offsets = [0, 384], sizes = [8, 96], strides = [1, 1]} : vector<8x512xf32> to vector<8x96xf32>
    %466 = math.tanh %465 : vector<8x96xf32>
    %467 = arith.mulf %463, %447 : vector<8x96xf32>
    %468 = arith.mulf %462, %466 : vector<8x96xf32>
    %469 = arith.addf %467, %468 : vector<8x96xf32>
    %470 = math.tanh %469 : vector<8x96xf32>
    %471 = arith.mulf %464, %470 : vector<8x96xf32>
    %472 = vector.extract_strided_slice %471 {offsets = [0, 64], sizes = [8, 32], strides = [1, 1]} : vector<8x96xf32> to vector<8x32xf32>
    %473 = arith.addf %451, %472 : vector<8x32xf32>
    %c88 = arith.constant 88 : index
    %c0_102 = arith.constant 0 : index
    %474 = vector.load %arg7[%c88, %c0_102] : memref<128x512xf32, #tpu.memory_space<vmem>>, vector<8x512xf32>
    %475 = arith.truncf %471 : vector<8x96xf32> to vector<8x96xbf16>
    %cst_103 = arith.constant dense<0.000000e+00> : vector<8x512xf32>
    %476 = tpu.matmul %475, %222, %cst_103 {dimension_numbers = #tpu.dot_dimension_numbers<[1], [0], [0], [1], [0, 0, 1, 1], [], []>} : vector<8x96xbf16>, vector<96x512xbf16>, vector<8x512xf32> -> vector<8x512xf32>
    %477 = arith.addf %474, %476 : vector<8x512xf32>
    %478 = vector.extract_strided_slice %477 {offsets = [0, 0], sizes = [8, 384], strides = [1, 1]} : vector<8x512xf32> to vector<8x384xf32>
    %479 = arith.negf %478 : vector<8x384xf32>
    %480 = math.exp %479 : vector<8x384xf32>
    %cst_104 = arith.constant 1.000000e+00 : f32
    %481 = vector.broadcast %cst_104 : f32 to vector<8x384xf32>
    %482 = arith.addf %481, %480 : vector<8x384xf32>
    %483 = arith.divf %481, %482 : vector<8x384xf32>
    %484 = vector.extract_strided_slice %483 {offsets = [0, 0], sizes = [8, 96], strides = [1, 1]} : vector<8x384xf32> to vector<8x96xf32>
    %485 = vector.extract_strided_slice %483 {offsets = [0, 128], sizes = [8, 96], strides = [1, 1]} : vector<8x384xf32> to vector<8x96xf32>
    %486 = vector.extract_strided_slice %483 {offsets = [0, 256], sizes = [8, 96], strides = [1, 1]} : vector<8x384xf32> to vector<8x96xf32>
    %487 = vector.extract_strided_slice %477 {offsets = [0, 384], sizes = [8, 96], strides = [1, 1]} : vector<8x512xf32> to vector<8x96xf32>
    %488 = math.tanh %487 : vector<8x96xf32>
    %489 = arith.mulf %485, %469 : vector<8x96xf32>
    %490 = arith.mulf %484, %488 : vector<8x96xf32>
    %491 = arith.addf %489, %490 : vector<8x96xf32>
    %492 = math.tanh %491 : vector<8x96xf32>
    %493 = arith.mulf %486, %492 : vector<8x96xf32>
    %494 = vector.extract_strided_slice %493 {offsets = [0, 64], sizes = [8, 32], strides = [1, 1]} : vector<8x96xf32> to vector<8x32xf32>
    %495 = arith.addf %473, %494 : vector<8x32xf32>
    %c96 = arith.constant 96 : index
    %c0_105 = arith.constant 0 : index
    %496 = vector.load %arg7[%c96, %c0_105] : memref<128x512xf32, #tpu.memory_space<vmem>>, vector<8x512xf32>
    %497 = arith.truncf %493 : vector<8x96xf32> to vector<8x96xbf16>
    %cst_106 = arith.constant dense<0.000000e+00> : vector<8x512xf32>
    %498 = tpu.matmul %497, %222, %cst_106 {dimension_numbers = #tpu.dot_dimension_numbers<[1], [0], [0], [1], [0, 0, 1, 1], [], []>} : vector<8x96xbf16>, vector<96x512xbf16>, vector<8x512xf32> -> vector<8x512xf32>
    %499 = arith.addf %496, %498 : vector<8x512xf32>
    %500 = vector.extract_strided_slice %499 {offsets = [0, 0], sizes = [8, 384], strides = [1, 1]} : vector<8x512xf32> to vector<8x384xf32>
    %501 = arith.negf %500 : vector<8x384xf32>
    %502 = math.exp %501 : vector<8x384xf32>
    %cst_107 = arith.constant 1.000000e+00 : f32
    %503 = vector.broadcast %cst_107 : f32 to vector<8x384xf32>
    %504 = arith.addf %503, %502 : vector<8x384xf32>
    %505 = arith.divf %503, %504 : vector<8x384xf32>
    %506 = vector.extract_strided_slice %505 {offsets = [0, 0], sizes = [8, 96], strides = [1, 1]} : vector<8x384xf32> to vector<8x96xf32>
    %507 = vector.extract_strided_slice %505 {offsets = [0, 128], sizes = [8, 96], strides = [1, 1]} : vector<8x384xf32> to vector<8x96xf32>
    %508 = vector.extract_strided_slice %505 {offsets = [0, 256], sizes = [8, 96], strides = [1, 1]} : vector<8x384xf32> to vector<8x96xf32>
    %509 = vector.extract_strided_slice %499 {offsets = [0, 384], sizes = [8, 96], strides = [1, 1]} : vector<8x512xf32> to vector<8x96xf32>
    %510 = math.tanh %509 : vector<8x96xf32>
    %511 = arith.mulf %507, %491 : vector<8x96xf32>
    %512 = arith.mulf %506, %510 : vector<8x96xf32>
    %513 = arith.addf %511, %512 : vector<8x96xf32>
    %514 = math.tanh %513 : vector<8x96xf32>
    %515 = arith.mulf %508, %514 : vector<8x96xf32>
    %516 = vector.extract_strided_slice %515 {offsets = [0, 64], sizes = [8, 32], strides = [1, 1]} : vector<8x96xf32> to vector<8x32xf32>
    %517 = arith.addf %495, %516 : vector<8x32xf32>
    %c104 = arith.constant 104 : index
    %c0_108 = arith.constant 0 : index
    %518 = vector.load %arg7[%c104, %c0_108] : memref<128x512xf32, #tpu.memory_space<vmem>>, vector<8x512xf32>
    %519 = arith.truncf %515 : vector<8x96xf32> to vector<8x96xbf16>
    %cst_109 = arith.constant dense<0.000000e+00> : vector<8x512xf32>
    %520 = tpu.matmul %519, %222, %cst_109 {dimension_numbers = #tpu.dot_dimension_numbers<[1], [0], [0], [1], [0, 0, 1, 1], [], []>} : vector<8x96xbf16>, vector<96x512xbf16>, vector<8x512xf32> -> vector<8x512xf32>
    %521 = arith.addf %518, %520 : vector<8x512xf32>
    %522 = vector.extract_strided_slice %521 {offsets = [0, 0], sizes = [8, 384], strides = [1, 1]} : vector<8x512xf32> to vector<8x384xf32>
    %523 = arith.negf %522 : vector<8x384xf32>
    %524 = math.exp %523 : vector<8x384xf32>
    %cst_110 = arith.constant 1.000000e+00 : f32
    %525 = vector.broadcast %cst_110 : f32 to vector<8x384xf32>
    %526 = arith.addf %525, %524 : vector<8x384xf32>
    %527 = arith.divf %525, %526 : vector<8x384xf32>
    %528 = vector.extract_strided_slice %527 {offsets = [0, 0], sizes = [8, 96], strides = [1, 1]} : vector<8x384xf32> to vector<8x96xf32>
    %529 = vector.extract_strided_slice %527 {offsets = [0, 128], sizes = [8, 96], strides = [1, 1]} : vector<8x384xf32> to vector<8x96xf32>
    %530 = vector.extract_strided_slice %527 {offsets = [0, 256], sizes = [8, 96], strides = [1, 1]} : vector<8x384xf32> to vector<8x96xf32>
    %531 = vector.extract_strided_slice %521 {offsets = [0, 384], sizes = [8, 96], strides = [1, 1]} : vector<8x512xf32> to vector<8x96xf32>
    %532 = math.tanh %531 : vector<8x96xf32>
    %533 = arith.mulf %529, %513 : vector<8x96xf32>
    %534 = arith.mulf %528, %532 : vector<8x96xf32>
    %535 = arith.addf %533, %534 : vector<8x96xf32>
    %536 = math.tanh %535 : vector<8x96xf32>
    %537 = arith.mulf %530, %536 : vector<8x96xf32>
    %538 = vector.extract_strided_slice %537 {offsets = [0, 64], sizes = [8, 32], strides = [1, 1]} : vector<8x96xf32> to vector<8x32xf32>
    %539 = arith.addf %517, %538 : vector<8x32xf32>
    %c112 = arith.constant 112 : index
    %c0_111 = arith.constant 0 : index
    %540 = vector.load %arg7[%c112, %c0_111] : memref<128x512xf32, #tpu.memory_space<vmem>>, vector<8x512xf32>
    %541 = arith.truncf %537 : vector<8x96xf32> to vector<8x96xbf16>
    %cst_112 = arith.constant dense<0.000000e+00> : vector<8x512xf32>
    %542 = tpu.matmul %541, %222, %cst_112 {dimension_numbers = #tpu.dot_dimension_numbers<[1], [0], [0], [1], [0, 0, 1, 1], [], []>} : vector<8x96xbf16>, vector<96x512xbf16>, vector<8x512xf32> -> vector<8x512xf32>
    %543 = arith.addf %540, %542 : vector<8x512xf32>
    %544 = vector.extract_strided_slice %543 {offsets = [0, 0], sizes = [8, 384], strides = [1, 1]} : vector<8x512xf32> to vector<8x384xf32>
    %545 = arith.negf %544 : vector<8x384xf32>
    %546 = math.exp %545 : vector<8x384xf32>
    %cst_113 = arith.constant 1.000000e+00 : f32
    %547 = vector.broadcast %cst_113 : f32 to vector<8x384xf32>
    %548 = arith.addf %547, %546 : vector<8x384xf32>
    %549 = arith.divf %547, %548 : vector<8x384xf32>
    %550 = vector.extract_strided_slice %549 {offsets = [0, 0], sizes = [8, 96], strides = [1, 1]} : vector<8x384xf32> to vector<8x96xf32>
    %551 = vector.extract_strided_slice %549 {offsets = [0, 128], sizes = [8, 96], strides = [1, 1]} : vector<8x384xf32> to vector<8x96xf32>
    %552 = vector.extract_strided_slice %549 {offsets = [0, 256], sizes = [8, 96], strides = [1, 1]} : vector<8x384xf32> to vector<8x96xf32>
    %553 = vector.extract_strided_slice %543 {offsets = [0, 384], sizes = [8, 96], strides = [1, 1]} : vector<8x512xf32> to vector<8x96xf32>
    %554 = math.tanh %553 : vector<8x96xf32>
    %555 = arith.mulf %551, %535 : vector<8x96xf32>
    %556 = arith.mulf %550, %554 : vector<8x96xf32>
    %557 = arith.addf %555, %556 : vector<8x96xf32>
    %558 = math.tanh %557 : vector<8x96xf32>
    %559 = arith.mulf %552, %558 : vector<8x96xf32>
    %560 = vector.extract_strided_slice %559 {offsets = [0, 64], sizes = [8, 32], strides = [1, 1]} : vector<8x96xf32> to vector<8x32xf32>
    %561 = arith.addf %539, %560 : vector<8x32xf32>
    %c120 = arith.constant 120 : index
    %c0_114 = arith.constant 0 : index
    %562 = vector.load %arg7[%c120, %c0_114] : memref<128x512xf32, #tpu.memory_space<vmem>>, vector<8x512xf32>
    %563 = arith.truncf %559 : vector<8x96xf32> to vector<8x96xbf16>
    %cst_115 = arith.constant dense<0.000000e+00> : vector<8x512xf32>
    %564 = tpu.matmul %563, %222, %cst_115 {dimension_numbers = #tpu.dot_dimension_numbers<[1], [0], [0], [1], [0, 0, 1, 1], [], []>} : vector<8x96xbf16>, vector<96x512xbf16>, vector<8x512xf32> -> vector<8x512xf32>
    %565 = arith.addf %562, %564 : vector<8x512xf32>
    %566 = vector.extract_strided_slice %565 {offsets = [0, 0], sizes = [8, 384], strides = [1, 1]} : vector<8x512xf32> to vector<8x384xf32>
    %567 = arith.negf %566 : vector<8x384xf32>
    %568 = math.exp %567 : vector<8x384xf32>
    %cst_116 = arith.constant 1.000000e+00 : f32
    %569 = vector.broadcast %cst_116 : f32 to vector<8x384xf32>
    %570 = arith.addf %569, %568 : vector<8x384xf32>
    %571 = arith.divf %569, %570 : vector<8x384xf32>
    %572 = vector.extract_strided_slice %571 {offsets = [0, 0], sizes = [8, 96], strides = [1, 1]} : vector<8x384xf32> to vector<8x96xf32>
    %573 = vector.extract_strided_slice %571 {offsets = [0, 128], sizes = [8, 96], strides = [1, 1]} : vector<8x384xf32> to vector<8x96xf32>
    %574 = vector.extract_strided_slice %571 {offsets = [0, 256], sizes = [8, 96], strides = [1, 1]} : vector<8x384xf32> to vector<8x96xf32>
    %575 = vector.extract_strided_slice %565 {offsets = [0, 384], sizes = [8, 96], strides = [1, 1]} : vector<8x512xf32> to vector<8x96xf32>
    %576 = math.tanh %575 : vector<8x96xf32>
    %577 = arith.mulf %573, %557 : vector<8x96xf32>
    %578 = arith.mulf %572, %576 : vector<8x96xf32>
    %579 = arith.addf %577, %578 : vector<8x96xf32>
    %580 = math.tanh %579 : vector<8x96xf32>
    %581 = arith.mulf %574, %580 : vector<8x96xf32>
    %582 = vector.extract_strided_slice %581 {offsets = [0, 64], sizes = [8, 32], strides = [1, 1]} : vector<8x96xf32> to vector<8x32xf32>
    %583 = arith.addf %561, %582 : vector<8x32xf32>
    %c120_117 = arith.constant 120 : index
    %c0_118 = arith.constant 0 : index
    %584 = vector.load %arg7[%c120_117, %c0_118] : memref<128x512xf32, #tpu.memory_space<vmem>>, vector<8x512xf32>
    %585 = arith.truncf %581 : vector<8x96xf32> to vector<8x96xbf16>
    %cst_119 = arith.constant dense<0.000000e+00> : vector<8x512xf32>
    %586 = tpu.matmul %585, %222, %cst_119 {dimension_numbers = #tpu.dot_dimension_numbers<[1], [0], [0], [1], [0, 0, 1, 1], [], []>} : vector<8x96xbf16>, vector<96x512xbf16>, vector<8x512xf32> -> vector<8x512xf32>
    %587 = arith.addf %584, %586 : vector<8x512xf32>
    %588 = vector.extract_strided_slice %587 {offsets = [0, 0], sizes = [8, 384], strides = [1, 1]} : vector<8x512xf32> to vector<8x384xf32>
    %589 = arith.negf %588 : vector<8x384xf32>
    %590 = math.exp %589 : vector<8x384xf32>
    %cst_120 = arith.constant 1.000000e+00 : f32
    %591 = vector.broadcast %cst_120 : f32 to vector<8x384xf32>
    %592 = arith.addf %591, %590 : vector<8x384xf32>
    %593 = arith.divf %591, %592 : vector<8x384xf32>
    %594 = vector.extract_strided_slice %593 {offsets = [0, 0], sizes = [8, 96], strides = [1, 1]} : vector<8x384xf32> to vector<8x96xf32>
    %595 = vector.extract_strided_slice %593 {offsets = [0, 128], sizes = [8, 96], strides = [1, 1]} : vector<8x384xf32> to vector<8x96xf32>
    %596 = vector.extract_strided_slice %593 {offsets = [0, 256], sizes = [8, 96], strides = [1, 1]} : vector<8x384xf32> to vector<8x96xf32>
    %597 = vector.extract_strided_slice %587 {offsets = [0, 384], sizes = [8, 96], strides = [1, 1]} : vector<8x512xf32> to vector<8x96xf32>
    %598 = math.tanh %597 : vector<8x96xf32>
    %599 = arith.mulf %595, %579 : vector<8x96xf32>
    %600 = arith.mulf %594, %598 : vector<8x96xf32>
    %601 = arith.addf %599, %600 : vector<8x96xf32>
    %602 = math.tanh %601 : vector<8x96xf32>
    %603 = arith.mulf %596, %602 : vector<8x96xf32>
    %604 = vector.extract_strided_slice %603 {offsets = [0, 64], sizes = [8, 32], strides = [1, 1]} : vector<8x96xf32> to vector<8x32xf32>
    %605 = arith.addf %583, %604 : vector<8x32xf32>
    %c120_121 = arith.constant 120 : index
    %c0_122 = arith.constant 0 : index
    %606 = vector.load %arg7[%c120_121, %c0_122] : memref<128x512xf32, #tpu.memory_space<vmem>>, vector<8x512xf32>
    %607 = arith.truncf %603 : vector<8x96xf32> to vector<8x96xbf16>
    %cst_123 = arith.constant dense<0.000000e+00> : vector<8x512xf32>
    %608 = tpu.matmul %607, %222, %cst_123 {dimension_numbers = #tpu.dot_dimension_numbers<[1], [0], [0], [1], [0, 0, 1, 1], [], []>} : vector<8x96xbf16>, vector<96x512xbf16>, vector<8x512xf32> -> vector<8x512xf32>
    %609 = arith.addf %606, %608 : vector<8x512xf32>
    %610 = vector.extract_strided_slice %609 {offsets = [0, 0], sizes = [8, 384], strides = [1, 1]} : vector<8x512xf32> to vector<8x384xf32>
    %611 = arith.negf %610 : vector<8x384xf32>
    %612 = math.exp %611 : vector<8x384xf32>
    %cst_124 = arith.constant 1.000000e+00 : f32
    %613 = vector.broadcast %cst_124 : f32 to vector<8x384xf32>
    %614 = arith.addf %613, %612 : vector<8x384xf32>
    %615 = arith.divf %613, %614 : vector<8x384xf32>
    %616 = vector.extract_strided_slice %615 {offsets = [0, 0], sizes = [8, 96], strides = [1, 1]} : vector<8x384xf32> to vector<8x96xf32>
    %617 = vector.extract_strided_slice %615 {offsets = [0, 128], sizes = [8, 96], strides = [1, 1]} : vector<8x384xf32> to vector<8x96xf32>
    %618 = vector.extract_strided_slice %615 {offsets = [0, 256], sizes = [8, 96], strides = [1, 1]} : vector<8x384xf32> to vector<8x96xf32>
    %619 = vector.extract_strided_slice %609 {offsets = [0, 384], sizes = [8, 96], strides = [1, 1]} : vector<8x512xf32> to vector<8x96xf32>
    %620 = math.tanh %619 : vector<8x96xf32>
    %621 = arith.mulf %617, %601 : vector<8x96xf32>
    %622 = arith.mulf %616, %620 : vector<8x96xf32>
    %623 = arith.addf %621, %622 : vector<8x96xf32>
    %624 = math.tanh %623 : vector<8x96xf32>
    %625 = arith.mulf %618, %624 : vector<8x96xf32>
    %626 = vector.extract_strided_slice %625 {offsets = [0, 64], sizes = [8, 32], strides = [1, 1]} : vector<8x96xf32> to vector<8x32xf32>
    %627 = arith.addf %605, %626 : vector<8x32xf32>
    %cst_125 = arith.constant 6.250000e-02 : f32
    %628 = vector.broadcast %cst_125 : f32 to vector<8x32xf32>
    %629 = arith.mulf %627, %628 : vector<8x32xf32>
    %630 = arith.truncf %629 : vector<8x32xf32> to vector<8x32xbf16>
    %c328 = arith.constant 328 : index
    %c0_126 = arith.constant 0 : index
    %631 = vector.load %arg2[%c328, %c0_126] : memref<360x512xbf16, #tpu.memory_space<vmem>>, vector<32x3xbf16>
    %cst_127 = arith.constant dense<0.000000e+00> : vector<8x3xf32>
    %632 = tpu.matmul %630, %631, %cst_127 {dimension_numbers = #tpu.dot_dimension_numbers<[1], [0], [0], [1], [0, 0, 1, 1], [], []>} : vector<8x32xbf16>, vector<32x3xbf16>, vector<8x3xf32> -> vector<8x3xf32>
    %c24_128 = arith.constant 24 : index
    %c0_129 = arith.constant 0 : index
    %633 = vector.load %arg3[%c24_128, %c0_129] : memref<32x512xf32, #tpu.memory_space<vmem>>, vector<1x3xf32>
    %634 = vector.broadcast %633 : vector<1x3xf32> to vector<8x3xf32>
    %635 = arith.addf %632, %634 : vector<8x3xf32>
    %c0_130 = arith.constant 0 : index
    %c0_131 = arith.constant 0 : index
    %636 = vector.load %arg5[%c0_130, %c0_131] : memref<8x3xf32, #tpu.memory_space<vmem>>, vector<8x3xf32>
    tpu.vector_store %arg5[%c0_130, %c0_131], %635 {strides = array<i32>} : memref<8x3xf32, #tpu.memory_space<vmem>>, vector<8x3xf32>,
    return
  }
}

</mosaic_0001>

<llo_original>
// kernel: forward.1
$region0: #{forward.1}
  #allocation0 [shape = 'u32[]', space=smem, size = 0x4, offset = 0x4, fixed_abs, tag = 'smem constant byte address 0x4 - core index']
  #allocation1 [shape = 'u32[144,128]{1,0:T(1,128)}', space=vmem, size = 0x12000, scoped, tag = 'internal scratch']
  #allocation2 [shape = 'f32[64,512]{1,0:T(8,128)}', space=vmem, size = 0x20000, scoped, tag = 'scratch operand']
  #allocation3 [shape = 'f32[128,512]{1,0:T(8,128)}', space=vmem, size = 0x40000, scoped, tag = 'scratch operand']
  %s0 = inlined_call_operand.vmem [shape: bf16[64,64], index: 0, kind: input, shape index: {}]
  %s1 = inlined_call_operand.vmem [shape: bf16[64,32], index: 1, kind: input, shape index: {}]
  %s2 = inlined_call_operand.hbm [shape: bf16[360,512], index: 2, kind: input, shape index: {}]
  %s3 = inlined_call_operand.vmem [shape: f32[32,512], index: 3, kind: input, shape index: {}]
  %s4 = inlined_call_operand.vmem [shape: f32[64,8], index: 4, kind: output, shape index: {0}]
  %s5 = inlined_call_operand.vmem [shape: f32[8,3], index: 5, kind: output, shape index: {1}]
  %6 = xla_tuple %s4, %s5
  %s7 = sld [smem:[#allocation0]]
  $region38: #{forward.1} parent=0
    _
  %s9 = ssub.s32 1, %s7
  %s10 = scalar_select 0, %s9, %s7
  $region1: #{forward.1} parent=0
    #allocation4 [shape = 'u8[368640]{0}', space=vmem, size = 0x5a000, scoped, tag = 'input window, operand 2, single buffered']
    #allocation5 [shape = 's32[1]{0}', space=sflag, size = 0x4, scoped, tag = 'scoped memory for forward.1']
    %11 = vsyncpa [#allocation5], 0
    // Predicated region
    $region2: #{forward.1} parent=1 // pred_check
      _
    $region3: #{forward.1} parent=1 // pred_check_branch
      %13 = sbr.rel (0) target = $region5
    $region4: #{forward.1} parent=1 // pred_region
      _
    $region5: #{forward.1} parent=1 // pred_fallthru
      _
    // Predicated region
    $region6: #{forward.1} parent=1 // pred_check
      _
    $region7: #{forward.1} parent=1 // pred_check_branch
      %15 = sbr.rel (0) target = $region9
    $region8: #{forward.1} parent=1 // pred_region
      _
    $region9: #{forward.1} parent=1 // pred_fallthru
      _
    // Predicated region
    $region10: #{forward.1} parent=1 // pred_check
      _
    $region11: #{forward.1} parent=1 // pred_check_branch
      %17 = sbr.rel (0) target = $region13
    $region12: #{forward.1} parent=1 // pred_region
      %s19 = ssub.s32 11520, 11520
      %20 = vsyncadd [#allocation5], %s19
      %s21 = sshll.u32 [#allocation4], 4
      %s22 = int_to_ptr.vmem [resolvable:$true] %s21
      %27 = dma.hbm_to_vmem [thread:$0]  %s2, 11520, %s22, [#allocation5], 256, 256, 16
    $region13: #{forward.1} parent=1 // pred_fallthru
      _
    // Predicated region
    $region14: #{forward.1} parent=1 // pred_check
      _
    $region15: #{forward.1} parent=1 // pred_check_branch
      %29 = sbr.rel (0) target = $region17
    $region16: #{forward.1} parent=1 // pred_region
      _
    $region17: #{forward.1} parent=1 // pred_fallthru
      _
    // Predicated region
    $region18: #{forward.1} parent=1 // pred_check
      _
    $region19: #{forward.1} parent=1 // pred_check_branch
      %31 = sbr.rel (0) target = $region21
    $region20: #{forward.1} parent=1 // pred_region
      %32 = dma.done [#allocation5], 11520
    $region21: #{forward.1} parent=1 // pred_fallthru
      _
    %v34 = vld [vmem:[%s0] sm:$0xf]
    %v35 = vld [vmem:[%s0 + $0x4] sm:$0xf]
    %v36 = vld [vmem:[%s0 + $0x8] sm:$0xf]
    %v37 = vld [vmem:[%s0 + $0xc] sm:$0xf]
    %v38 = vld [vmem:[%s0 + $0x10] sm:$0xf]
    %v39 = vld [vmem:[%s0 + $0x14] sm:$0xf]
    %v40 = vld [vmem:[%s0 + $0x18] sm:$0xf]
    %v41 = vld [vmem:[%s0 + $0x1c] sm:$0xf]
    %v42 = vld [vmem:[#allocation4] sm:$0xff]
    %v43 = vld [vmem:[#allocation4 + $0x8] sm:$0xff]
    %v44 = vld [vmem:[#allocation4 + $0x10] sm:$0xff]
    %v45 = vld [vmem:[#allocation4 + $0x18] sm:$0xff]
    %v46 = vld [vmem:[#allocation4 + $0x20] sm:$0xff]
    %v47 = vld [vmem:[#allocation4 + $0x28] sm:$0xff]
    %v48 = vld [vmem:[#allocation4 + $0x30] sm:$0xff]
    %v49 = vld [vmem:[#allocation4 + $0x38] sm:$0xff]
    %v50 = vld [vmem:[#allocation4 + $0x40] sm:$0xff]
    %v51 = vld [vmem:[#allocation4 + $0x48] sm:$0xff]
    %v52 = vld [vmem:[#allocation4 + $0x50] sm:$0xff]
    %v53 = vld [vmem:[#allocation4 + $0x58] sm:$0xff]
    %v54 = vld [vmem:[#allocation4 + $0x60] sm:$0xff]
    %v55 = vld [vmem:[#allocation4 + $0x68] sm:$0xff]
    %v56 = vld [vmem:[#allocation4 + $0x70] sm:$0xff]
    %v57 = vld [vmem:[#allocation4 + $0x78] sm:$0xff]
    %v58 = vld [vmem:[%s3] ss:$8 sm:$0xf]
    %v60 = vlaneseq
    %v61 = vshrl.u32 %v60, 7
    %v62 = vsub.s32 0, %v61
    %v63 = vrot.slane %v58, %v62
    %v64 = vlaneseq
    %v65 = vshrl.u32 %v64, 7
    %v66 = vsub.s32 1, %v65
    %v67 = vrot.slane %v58, %v66
    %v68 = vlaneseq
    %v69 = vshrl.u32 %v68, 7
    %v70 = vsub.s32 2, %v69
    %v71 = vrot.slane %v58, %v70
    %v72 = vlaneseq
    %v73 = vshrl.u32 %v72, 7
    %v74 = vsub.s32 3, %v73
    %v75 = vrot.slane %v58, %v74
    %v88 = vunpack.c.l.b16 %v34
    %v89 = vunpack.c.l.b16 %v35
    %v90 = vunpack.c.l.b16 %v36
    %v91 = vunpack.c.l.b16 %v37
    %v92 = vunpack.c.l.b16 %v38
    %v93 = vunpack.c.l.b16 %v39
    %v94 = vunpack.c.l.b16 %v40
    %v95 = vunpack.c.l.b16 %v41
    %v96 = vpack.c.b16 %v89, %v88
    %v97 = vpack.c.b16 %v91, %v90
    %v98 = vpack.c.b16 %v93, %v92
    %v99 = vpack.c.b16 %v95, %v94
    %v116 = vunpack.c.l.b16 %v42
    %v117 = vunpack.c.h.b16 %v42
    %v118 = vunpack.c.l.b16 %v43
    %v119 = vunpack.c.h.b16 %v43
    %v120 = vunpack.c.l.b16 %v44
    %v121 = vunpack.c.h.b16 %v44
    %v122 = vunpack.c.l.b16 %v45
    %v123 = vunpack.c.h.b16 %v45
    %v124 = vunpack.c.l.b16 %v46
    %v125 = vunpack.c.h.b16 %v46
    %v126 = vunpack.c.l.b16 %v47
    %v127 = vunpack.c.h.b16 %v47
    %v128 = vunpack.c.l.b16 %v48
    %v129 = vunpack.c.h.b16 %v48
    %v130 = vunpack.c.l.b16 %v49
    %v131 = vunpack.c.h.b16 %v49
    %v132 = vunpack.c.l.b16 %v50
    %v133 = vunpack.c.h.b16 %v50
    %v134 = vunpack.c.l.b16 %v51
    %v135 = vunpack.c.h.b16 %v51
    %v136 = vunpack.c.l.b16 %v52
    %v137 = vunpack.c.h.b16 %v52
    %v138 = vunpack.c.l.b16 %v53
    %v139 = vunpack.c.h.b16 %v53
    %v140 = vunpack.c.l.b16 %v54
    %v141 = vunpack.c.h.b16 %v54
    %v142 = vunpack.c.l.b16 %v55
    %v143 = vunpack.c.h.b16 %v55
    %v144 = vunpack.c.l.b16 %v56
    %v145 = vunpack.c.h.b16 %v56
    %v146 = vunpack.c.l.b16 %v57
    %v147 = vunpack.c.h.b16 %v57
    %v148 = vpack.c.b16 %v120, %v116
    %v149 = vpack.c.b16 %v121, %v117
    %v150 = vpack.c.b16 %v122, %v118
    %v151 = vpack.c.b16 %v123, %v119
    %v152 = vpack.c.b16 %v128, %v124
    %v153 = vpack.c.b16 %v129, %v125
    %v154 = vpack.c.b16 %v130, %v126
    %v155 = vpack.c.b16 %v131, %v127
    %v156 = vpack.c.b16 %v136, %v132
    %v157 = vpack.c.b16 %v137, %v133
    %v158 = vpack.c.b16 %v138, %v134
    %v159 = vpack.c.b16 %v139, %v135
    %v160 = vpack.c.b16 %v144, %v140
    %v161 = vpack.c.b16 %v145, %v141
    %v162 = vpack.c.b16 %v146, %v142
    %v163 = vpack.c.b16 %v147, %v143
    %vm180 = vcmask 523264
    %v182 = vsel %vm180, %v96, 0
    %v185 = vsel %vm180, %v97, 0
    %v188 = vsel %vm180, %v98, 0
    %v191 = vsel %vm180, %v99, 0
    %193 = vmatprep.subr.bf16.mxu0 %v149
    %194 = vmatpush1.bf16.msra.mxu0 %v148
    %195 = vmatprep.subr.bf16.mxu0 %v153
    %196 = vmatpush1.bf16.msra.mxu0 %v152
    %197 = vmatprep.subr.bf16.mxu0 %v157
    %198 = vmatpush1.bf16.msra.mxu0 %v156
    %199 = vmatprep.subr.bf16.mxu0 %v161
    %200 = vmatpush1.bf16.msra.mxu0 %v160
    %201 = vmatprep.subr.bf16.mxu0 0
    %202 = vmatpush1.bf16.msra.mxu0 0
    %203 = vmatprep.subr.bf16.mxu0 0
    %204 = vmatpush1.bf16.msra.mxu0 0
    %205 = vmatprep.subr.bf16.mxu0 0
    %206 = vmatpush1.bf16.msra.mxu0 0
    %207 = vmatprep.subr.bf16.mxu0 0
    %208 = vmatpush1.bf16.msra.mxu0 0
    %209 = vmatprep.subr.bf16.mxu0 0
    %210 = vmatpush1.bf16.msra.mxu0 0
    %211 = vmatprep.subr.bf16.mxu0 0
    %212 = vmatpush1.bf16.msra.mxu0 0
    %213 = vmatprep.subr.bf16.mxu0 0
    %214 = vmatpush1.bf16.msra.mxu0 0
    %215 = vmatprep.subr.bf16.mxu0 0
    %216 = vmatpush1.bf16.msra.mxu0 0
    %217 = vmatprep.subr.bf16.mxu0 0
    %218 = vmatpush1.bf16.msra.mxu0 0
    %219 = vmatprep.subr.bf16.mxu0 0
    %220 = vmatpush1.bf16.msra.mxu0 0
    %221 = vmatprep.subr.bf16.mxu0 0
    %222 = vmatpush1.bf16.msra.mxu0 0
    %223 = vmatprep.subr.bf16.mxu0 0
    %224 = vmatpush1.bf16.msra.mxu0 0
    %225 = vmatprep.mubr.bf16.mxu0 0
    %226 = vmatmul.mubr.bf16.gmra.mrb[0].mxu0 %v182
    %v227 = vpop.f32.mrb[0].mxu0
    %v228 = vadd.f32 %v63, %v227
    %v229 = vpop.f32.mrb[0].mxu0
    %v230 = vadd.f32 %v67, %v229
    %v231 = vpop.f32.mrb[0].mxu0
    %v232 = vadd.f32 %v63, %v231
    %v233 = vpop.f32.mrb[0].mxu0
    %v234 = vadd.f32 %v67, %v233
    %235 = vmatprep.mubr.bf16.mxu0 0
    %236 = vmatmul.mubr.bf16.gmra.mrb[0].mxu0 %v185
    %v237 = vpop.f32.mrb[0].mxu0
    %v238 = vadd.f32 %v63, %v237
    %v239 = vpop.f32.mrb[0].mxu0
    %v240 = vadd.f32 %v67, %v239
    %v241 = vpop.f32.mrb[0].mxu0
    %v242 = vadd.f32 %v63, %v241
    %v243 = vpop.f32.mrb[0].mxu0
    %v244 = vadd.f32 %v67, %v243
    %245 = vmatprep.mubr.bf16.mxu0 0
    %246 = vmatmul.mubr.bf16.gmra.mrb[0].mxu0 %v188
    %v247 = vpop.f32.mrb[0].mxu0
    %v248 = vadd.f32 %v63, %v247
    %v249 = vpop.f32.mrb[0].mxu0
    %v250 = vadd.f32 %v67, %v249
    %v251 = vpop.f32.mrb[0].mxu0
    %v252 = vadd.f32 %v63, %v251
    %v253 = vpop.f32.mrb[0].mxu0
    %v254 = vadd.f32 %v67, %v253
    %255 = vmatprep.mubr.bf16.mxu0 0
    %256 = vmatmul.mubr.bf16.gmra.mrb[0].mxu0 %v191
    %v257 = vpop.f32.mrb[0].mxu0
    %v258 = vadd.f32 %v63, %v257
    %v259 = vpop.f32.mrb[0].mxu0
    %v260 = vadd.f32 %v67, %v259
    %v261 = vpop.f32.mrb[0].mxu0
    %v262 = vadd.f32 %v63, %v261
    %v263 = vpop.f32.mrb[0].mxu0
    %v264 = vadd.f32 %v67, %v263
    %265 = vdwg.mxu0
    %266 = vmatprep.subr.bf16.mxu0 %v151
    %267 = vmatpush1.bf16.msra.mxu0 %v150
    %268 = vmatprep.subr.bf16.mxu0 %v155
    %269 = vmatpush1.bf16.msra.mxu0 %v154
    %270 = vmatprep.subr.bf16.mxu0 %v159
    %271 = vmatpush1.bf16.msra.mxu0 %v158
    %272 = vmatprep.subr.bf16.mxu0 %v163
    %273 = vmatpush1.bf16.msra.mxu0 %v162
    %274 = vmatprep.subr.bf16.mxu0 0
    %275 = vmatpush1.bf16.msra.mxu0 0
    %276 = vmatprep.subr.bf16.mxu0 0
    %277 = vmatpush1.bf16.msra.mxu0 0
    %278 = vmatprep.subr.bf16.mxu0 0
    %279 = vmatpush1.bf16.msra.mxu0 0
    %280 = vmatprep.subr.bf16.mxu0 0
    %281 = vmatpush1.bf16.msra.mxu0 0
    %282 = vmatprep.subr.bf16.mxu0 0
    %283 = vmatpush1.bf16.msra.mxu0 0
    %284 = vmatprep.subr.bf16.mxu0 0
    %285 = vmatpush1.bf16.msra.mxu0 0
    %286 = vmatprep.subr.bf16.mxu0 0
    %287 = vmatpush1.bf16.msra.mxu0 0
    %288 = vmatprep.subr.bf16.mxu0 0
    %289 = vmatpush1.bf16.msra.mxu0 0
    %290 = vmatprep.subr.bf16.mxu0 0
    %291 = vmatpush1.bf16.msra.mxu0 0
    %292 = vmatprep.subr.bf16.mxu0 0
    %293 = vmatpush1.bf16.msra.mxu0 0
    %294 = vmatprep.subr.bf16.mxu0 0
    %295 = vmatpush1.bf16.msra.mxu0 0
    %296 = vmatprep.subr.bf16.mxu0 0
    %297 = vmatpush1.bf16.msra.mxu0 0
    %298 = vmatprep.mubr.bf16.mxu0 0
    %299 = vmatmul.mubr.bf16.gmra.mrb[0].mxu0 %v182
    %v300 = vpop.f32.mrb[0].mxu0
    %v301 = vadd.f32 %v71, %v300
    %v302 = vpop.f32.mrb[0].mxu0
    %v303 = vadd.f32 %v75, %v302
    %v304 = vpop.f32.mrb[0].mxu0
    %v305 = vadd.f32 %v71, %v304
    %v306 = vpop.f32.mrb[0].mxu0
    %v307 = vadd.f32 %v75, %v306
    %308 = vmatprep.mubr.bf16.mxu0 0
    %309 = vmatmul.mubr.bf16.gmra.mrb[0].mxu0 %v185
    %v310 = vpop.f32.mrb[0].mxu0
    %v311 = vadd.f32 %v71, %v310
    %v312 = vpop.f32.mrb[0].mxu0
    %v313 = vadd.f32 %v75, %v312
    %v314 = vpop.f32.mrb[0].mxu0
    %v315 = vadd.f32 %v71, %v314
    %v316 = vpop.f32.mrb[0].mxu0
    %v317 = vadd.f32 %v75, %v316
    %318 = vmatprep.mubr.bf16.mxu0 0
    %319 = vmatmul.mubr.bf16.gmra.mrb[0].mxu0 %v188
    %v320 = vpop.f32.mrb[0].mxu0
    %v321 = vadd.f32 %v71, %v320
    %v322 = vpop.f32.mrb[0].mxu0
    %v323 = vadd.f32 %v75, %v322
    %v324 = vpop.f32.mrb[0].mxu0
    %v325 = vadd.f32 %v71, %v324
    %v326 = vpop.f32.mrb[0].mxu0
    %v327 = vadd.f32 %v75, %v326
    %328 = vmatprep.mubr.bf16.mxu0 0
    %329 = vmatmul.mubr.bf16.gmra.mrb[0].mxu0 %v191
    %v330 = vpop.f32.mrb[0].mxu0
    %v331 = vadd.f32 %v71, %v330
    %v332 = vpop.f32.mrb[0].mxu0
    %v333 = vadd.f32 %v75, %v332
    %v334 = vpop.f32.mrb[0].mxu0
    %v335 = vadd.f32 %v71, %v334
    %v336 = vpop.f32.mrb[0].mxu0
    %v337 = vadd.f32 %v75, %v336
    %338 = vdwg.mxu0
    %339 = vst [vmem:[#allocation2] sm:$0xff] %v228
    %340 = vst [vmem:[#allocation2 + $0x8] sm:$0xff] %v230
    %341 = vst [vmem:[#allocation2 + $0x10] sm:$0xff] %v301
    %342 = vst [vmem:[#allocation2 + $0x18] sm:$0xff] %v303
    %343 = vst [vmem:[#allocation2 + $0x20] sm:$0xff] %v232
    %344 = vst [vmem:[#allocation2 + $0x28] sm:$0xff] %v234
    %345 = vst [vmem:[#allocation2 + $0x30] sm:$0xff] %v305
    %346 = vst [vmem:[#allocation2 + $0x38] sm:$0xff] %v307
    %347 = vst [vmem:[#allocation2 + $0x40] sm:$0xff] %v238
    %348 = vst [vmem:[#allocation2 + $0x48] sm:$0xff] %v240
    %349 = vst [vmem:[#allocation2 + $0x50] sm:$0xff] %v311
    %350 = vst [vmem:[#allocation2 + $0x58] sm:$0xff] %v313
    %351 = vst [vmem:[#allocation2 + $0x60] sm:$0xff] %v242
    %352 = vst [vmem:[#allocation2 + $0x68] sm:$0xff] %v244
    %353 = vst [vmem:[#allocation2 + $0x70] sm:$0xff] %v315
    %354 = vst [vmem:[#allocation2 + $0x78] sm:$0xff] %v317
    %355 = vst [vmem:[#allocation2 + $0x80] sm:$0xff] %v248
    %356 = vst [vmem:[#allocation2 + $0x88] sm:$0xff] %v250
    %357 = vst [vmem:[#allocation2 + $0x90] sm:$0xff] %v321
    %358 = vst [vmem:[#allocation2 + $0x98] sm:$0xff] %v323
    %359 = vst [vmem:[#allocation2 + $0xa0] sm:$0xff] %v252
    %360 = vst [vmem:[#allocation2 + $0xa8] sm:$0xff] %v254
    %361 = vst [vmem:[#allocation2 + $0xb0] sm:$0xff] %v325
    %362 = vst [vmem:[#allocation2 + $0xb8] sm:$0xff] %v327
    %363 = vst [vmem:[#allocation2 + $0xc0] sm:$0xff] %v258
    %364 = vst [vmem:[#allocation2 + $0xc8] sm:$0xff] %v260
    %365 = vst [vmem:[#allocation2 + $0xd0] sm:$0xff] %v331
    %366 = vst [vmem:[#allocation2 + $0xd8] sm:$0xff] %v333
    %367 = vst [vmem:[#allocation2 + $0xe0] sm:$0xff] %v262
    %368 = vst [vmem:[#allocation2 + $0xe8] sm:$0xff] %v264
    %369 = vst [vmem:[#allocation2 + $0xf0] sm:$0xff] %v335
    %370 = vst [vmem:[#allocation2 + $0xf8] sm:$0xff] %v337
    %v371 = vld [vmem:[#allocation4 + $0x80] sm:$0xff]
    %v372 = vld [vmem:[#allocation4 + $0x88] sm:$0xff]
    %v373 = vld [vmem:[#allocation4 + $0x90] sm:$0xff]
    %v374 = vld [vmem:[#allocation4 + $0x98] sm:$0xff]
    %v375 = vld [vmem:[#allocation4 + $0xa0] sm:$0xff]
    %v376 = vld [vmem:[#allocation4 + $0xa8] sm:$0xff]
    %v377 = vld [vmem:[#allocation4 + $0xb0] sm:$0xff]
    %v378 = vld [vmem:[#allocation4 + $0xb8] sm:$0xff]
    %v379 = vld [vmem:[#allocation4 + $0xc0] sm:$0xff]
    %v380 = vld [vmem:[#allocation4 + $0xc8] sm:$0xff]
    %v381 = vld [vmem:[#allocation4 + $0xd0] sm:$0xff]
    %v382 = vld [vmem:[#allocation4 + $0xd8] sm:$0xff]
    %v383 = vld [vmem:[#allocation4 + $0xe0] sm:$0xff]
    %v384 = vld [vmem:[#allocation4 + $0xe8] sm:$0xff]
    %v385 = vld [vmem:[#allocation4 + $0xf0] sm:$0xff]
    %v386 = vld [vmem:[#allocation4 + $0xf8] sm:$0xff]
    %v387 = vld [vmem:[#allocation2] sm:$0xff]
    %v388 = vld [vmem:[#allocation2 + $0x8] sm:$0xff]
    %v389 = vld [vmem:[#allocation2 + $0x10] sm:$0xff]
    %v390 = vld [vmem:[#allocation2 + $0x18] sm:$0xff]
    %v407 = vunpack.c.l.b16 %v371
    %v408 = vunpack.c.h.b16 %v371
    %v409 = vunpack.c.l.b16 %v372
    %v410 = vunpack.c.h.b16 %v372
    %v411 = vunpack.c.l.b16 %v373
    %v412 = vunpack.c.h.b16 %v373
    %v413 = vunpack.c.l.b16 %v374
    %v414 = vunpack.c.h.b16 %v374
    %v415 = vunpack.c.l.b16 %v375
    %v416 = vunpack.c.h.b16 %v375
    %v417 = vunpack.c.l.b16 %v376
    %v418 = vunpack.c.h.b16 %v376
    %v419 = vunpack.c.l.b16 %v377
    %v420 = vunpack.c.h.b16 %v377
    %v421 = vunpack.c.l.b16 %v378
    %v422 = vunpack.c.h.b16 %v378
    %v423 = vunpack.c.l.b16 %v379
    %v424 = vunpack.c.h.b16 %v379
    %v425 = vunpack.c.l.b16 %v380
    %v426 = vunpack.c.h.b16 %v380
    %v427 = vunpack.c.l.b16 %v381
    %v428 = vunpack.c.h.b16 %v381
    %v429 = vunpack.c.l.b16 %v382
    %v430 = vunpack.c.h.b16 %v382
    %v431 = vunpack.c.l.b16 %v383
    %v432 = vunpack.c.h.b16 %v383
    %v433 = vunpack.c.l.b16 %v384
    %v434 = vunpack.c.h.b16 %v384
    %v435 = vunpack.c.l.b16 %v385
    %v436 = vunpack.c.h.b16 %v385
    %v437 = vunpack.c.l.b16 %v386
    %v438 = vunpack.c.h.b16 %v386
    %v439 = vpack.c.b16 %v411, %v407
    %v440 = vpack.c.b16 %v412, %v408
    %v441 = vpack.c.b16 %v413, %v409
    %v442 = vpack.c.b16 %v414, %v410
    %v443 = vpack.c.b16 %v419, %v415
    %v444 = vpack.c.b16 %v420, %v416
    %v445 = vpack.c.b16 %v421, %v417
    %v446 = vpack.c.b16 %v422, %v418
    %v447 = vpack.c.b16 %v427, %v423
    %v448 = vpack.c.b16 %v428, %v424
    %v449 = vpack.c.b16 %v429, %v425
    %v450 = vpack.c.b16 %v430, %v426
    %v451 = vpack.c.b16 %v435, %v431
    %v452 = vpack.c.b16 %v436, %v432
    %v453 = vpack.c.b16 %v437, %v433
    %v454 = vpack.c.b16 %v438, %v434
    %v472 = vsel %vm180, 0, 0
    %474 = vmatprep.subr.bf16.mxu0 %v440
    %475 = vmatpush1.bf16.msra.mxu0 %v439
    %476 = vmatprep.subr.bf16.mxu0 %v444
    %477 = vmatpush1.bf16.msra.mxu0 %v443
    %478 = vmatprep.subr.bf16.mxu0 %v448
    %479 = vmatpush1.bf16.msra.mxu0 %v447
    %480 = vmatprep.subr.bf16.mxu0 %v452
    %481 = vmatpush1.bf16.msra.mxu0 %v451
    %482 = vmatprep.subr.bf16.mxu0 0
    %483 = vmatpush1.bf16.msra.mxu0 0
    %484 = vmatprep.subr.bf16.mxu0 0
    %485 = vmatpush1.bf16.msra.mxu0 0
    %486 = vmatprep.subr.bf16.mxu0 0
    %487 = vmatpush1.bf16.msra.mxu0 0
    %488 = vmatprep.subr.bf16.mxu0 0
    %489 = vmatpush1.bf16.msra.mxu0 0
    %490 = vmatprep.subr.bf16.mxu0 0
    %491 = vmatpush1.bf16.msra.mxu0 0
    %492 = vmatprep.subr.bf16.mxu0 0
    %493 = vmatpush1.bf16.msra.mxu0 0
    %494 = vmatprep.subr.bf16.mxu0 0
    %495 = vmatpush1.bf16.msra.mxu0 0
    %496 = vmatprep.subr.bf16.mxu0 0
    %497 = vmatpush1.bf16.msra.mxu0 0
    %498 = vmatprep.subr.bf16.mxu0 0
    %499 = vmatpush1.bf16.msra.mxu0 0
    %500 = vmatprep.subr.bf16.mxu0 0
    %501 = vmatpush1.bf16.msra.mxu0 0
    %502 = vmatprep.subr.bf16.mxu0 0
    %503 = vmatpush1.bf16.msra.mxu0 0
    %504 = vmatprep.subr.bf16.mxu0 0
    %505 = vmatpush1.bf16.msra.mxu0 0
    %506 = vmatprep.mubr.bf16.mxu0 0
    %507 = vmatmul.mubr.bf16.gmra.mrb[0].mxu0 %v472
    %v508 = vpop.f32.mrb[0].mxu0
    %v509 = vadd.f32 0.0, %v508
    %v510 = vpop.f32.mrb[0].mxu0
    %v511 = vadd.f32 0.0, %v510
    %v512 = vpop.f32.mrb[0].mxu0
    %v513 = vpop.f32.mrb[0].mxu0
    %514 = vdwg.mxu0
    %515 = vmatprep.subr.bf16.mxu0 %v442
    %516 = vmatpush1.bf16.msra.mxu0 %v441
    %517 = vmatprep.subr.bf16.mxu0 %v446
    %518 = vmatpush1.bf16.msra.mxu0 %v445
    %519 = vmatprep.subr.bf16.mxu0 %v450
    %520 = vmatpush1.bf16.msra.mxu0 %v449
    %521 = vmatprep.subr.bf16.mxu0 %v454
    %522 = vmatpush1.bf16.msra.mxu0 %v453
    %523 = vmatprep.subr.bf16.mxu0 0
    %524 = vmatpush1.bf16.msra.mxu0 0
    %525 = vmatprep.subr.bf16.mxu0 0
    %526 = vmatpush1.bf16.msra.mxu0 0
    %527 = vmatprep.subr.bf16.mxu0 0
    %528 = vmatpush1.bf16.msra.mxu0 0
    %529 = vmatprep.subr.bf16.mxu0 0
    %530 = vmatpush1.bf16.msra.mxu0 0
    %531 = vmatprep.subr.bf16.mxu0 0
    %532 = vmatpush1.bf16.msra.mxu0 0
    %533 = vmatprep.subr.bf16.mxu0 0
    %534 = vmatpush1.bf16.msra.mxu0 0
    %535 = vmatprep.subr.bf16.mxu0 0
    %536 = vmatpush1.bf16.msra.mxu0 0
    %537 = vmatprep.subr.bf16.mxu0 0
    %538 = vmatpush1.bf16.msra.mxu0 0
    %539 = vmatprep.subr.bf16.mxu0 0
    %540 = vmatpush1.bf16.msra.mxu0 0
    %541 = vmatprep.subr.bf16.mxu0 0
    %542 = vmatpush1.bf16.msra.mxu0 0
    %543 = vmatprep.subr.bf16.mxu0 0
    %544 = vmatpush1.bf16.msra.mxu0 0
    %545 = vmatprep.subr.bf16.mxu0 0
    %546 = vmatpush1.bf16.msra.mxu0 0
    %547 = vmatprep.mubr.bf16.mxu0 0
    %548 = vmatmul.mubr.bf16.gmra.mrb[0].mxu0 %v472
    %v549 = vpop.f32.mrb[0].mxu0
    %v550 = vadd.f32 0.0, %v549
    %v551 = vpop.f32.mrb[0].mxu0
    %v552 = vadd.f32 0.0, %v551
    %v553 = vpop.f32.mrb[0].mxu0
    %v554 = vpop.f32.mrb[0].mxu0
    %555 = vdwg.mxu0
    %v556 = vadd.f32 %v387, %v509
    %v557 = vadd.f32 %v388, %v511
    %v558 = vadd.f32 %v389, %v550
    %v559 = vadd.f32 %v390, %v552
    %v560 = vxor.u32 %v556, 2147483648
    %v561 = vxor.u32 %v557, 2147483648
    %v562 = vxor.u32 %v558, 2147483648
    %v563 = vmul.f32 %v560, 1.442695
    %v564 = vpow.pop %v563
    %v565 = vmul.f32 %v561, 1.442695
    %v566 = vpow.pop %v565
    %v567 = vmul.f32 %v562, 1.442695
    %v568 = vpow.pop %v567
    %v569 = vadd.f32 %v564, 1.0
    %v570 = vadd.f32 %v566, 1.0
    %v571 = vadd.f32 %v568, 1.0
    %v572 = vrcp.pop %v569
    %v573 = vmul.f32 1.0, %v572
    %v574 = vrcp.pop %v570
    %v575 = vmul.f32 1.0, %v574
    %v576 = vrcp.pop %v571
    %v577 = vmul.f32 1.0, %v576
    %v578 = vtanh.pop %v559
    %v579 = vmul.f32 %v575, 0.0
    %v580 = vmul.f32 %v573, %v578
    %v581 = vadd.f32 %v579, %v580
    %v582 = vtanh.pop %v581
    %v583 = vmul.f32 %v577, %v582
    %v584 = vld [vmem:[#allocation2 + $0x20] sm:$0xff]
    %v585 = vld [vmem:[#allocation2 + $0x28] sm:$0xff]
    %v586 = vld [vmem:[#allocation2 + $0x30] sm:$0xff]
    %v587 = vld [vmem:[#allocation2 + $0x38] sm:$0xff]
    %v588 = vpack.c.bf16 %v583, %v583
    %v590 = vsel %vm180, %v588, 0
    %592 = vmatprep.subr.bf16.mxu0 %v440
    %593 = vmatpush1.bf16.msra.mxu0 %v439
    %594 = vmatprep.subr.bf16.mxu0 %v444
    %595 = vmatpush1.bf16.msra.mxu0 %v443
    %596 = vmatprep.subr.bf16.mxu0 %v448
    %597 = vmatpush1.bf16.msra.mxu0 %v447
    %598 = vmatprep.subr.bf16.mxu0 %v452
    %599 = vmatpush1.bf16.msra.mxu0 %v451
    %600 = vmatprep.subr.bf16.mxu0 0
    %601 = vmatpush1.bf16.msra.mxu0 0
    %602 = vmatprep.subr.bf16.mxu0 0
    %603 = vmatpush1.bf16.msra.mxu0 0
    %604 = vmatprep.subr.bf16.mxu0 0
    %605 = vmatpush1.bf16.msra.mxu0 0
    %606 = vmatprep.subr.bf16.mxu0 0
    %607 = vmatpush1.bf16.msra.mxu0 0
    %608 = vmatprep.subr.bf16.mxu0 0
    %609 = vmatpush1.bf16.msra.mxu0 0
    %610 = vmatprep.subr.bf16.mxu0 0
    %611 = vmatpush1.bf16.msra.mxu0 0
    %612 = vmatprep.subr.bf16.mxu0 0
    %613 = vmatpush1.bf16.msra.mxu0 0
    %614 = vmatprep.subr.bf16.mxu0 0
    %615 = vmatpush1.bf16.msra.mxu0 0
    %616 = vmatprep.subr.bf16.mxu0 0
    %617 = vmatpush1.bf16.msra.mxu0 0
    %618 = vmatprep.subr.bf16.mxu0 0
    %619 = vmatpush1.bf16.msra.mxu0 0
    %620 = vmatprep.subr.bf16.mxu0 0
    %621 = vmatpush1.bf16.msra.mxu0 0
    %622 = vmatprep.subr.bf16.mxu0 0
    %623 = vmatpush1.bf16.msra.mxu0 0
    %624 = vmatprep.mubr.bf16.mxu0 0
    %625 = vmatmul.mubr.bf16.gmra.mrb[0].mxu0 %v590
    %v626 = vpop.f32.mrb[0].mxu0
    %v627 = vadd.f32 0.0, %v626
    %v628 = vpop.f32.mrb[0].mxu0
    %v629 = vadd.f32 0.0, %v628
    %v630 = vpop.f32.mrb[0].mxu0
    %v631 = vpop.f32.mrb[0].mxu0
    %632 = vdwg.mxu0
    %633 = vmatprep.subr.bf16.mxu0 %v442
    %634 = vmatpush1.bf16.msra.mxu0 %v441
    %635 = vmatprep.subr.bf16.mxu0 %v446
    %636 = vmatpush1.bf16.msra.mxu0 %v445
    %637 = vmatprep.subr.bf16.mxu0 %v450
    %638 = vmatpush1.bf16.msra.mxu0 %v449
    %639 = vmatprep.subr.bf16.mxu0 %v454
    %640 = vmatpush1.bf16.msra.mxu0 %v453
    %641 = vmatprep.subr.bf16.mxu0 0
    %642 = vmatpush1.bf16.msra.mxu0 0
    %643 = vmatprep.subr.bf16.mxu0 0
    %644 = vmatpush1.bf16.msra.mxu0 0
    %645 = vmatprep.subr.bf16.mxu0 0
    %646 = vmatpush1.bf16.msra.mxu0 0
    %647 = vmatprep.subr.bf16.mxu0 0
    %648 = vmatpush1.bf16.msra.mxu0 0
    %649 = vmatprep.subr.bf16.mxu0 0
    %650 = vmatpush1.bf16.msra.mxu0 0
    %651 = vmatprep.subr.bf16.mxu0 0
    %652 = vmatpush1.bf16.msra.mxu0 0
    %653 = vmatprep.subr.bf16.mxu0 0
    %654 = vmatpush1.bf16.msra.mxu0 0
    %655 = vmatprep.subr.bf16.mxu0 0
    %656 = vmatpush1.bf16.msra.mxu0 0
    %657 = vmatprep.subr.bf16.mxu0 0
    %658 = vmatpush1.bf16.msra.mxu0 0
    %659 = vmatprep.subr.bf16.mxu0 0
    %660 = vmatpush1.bf16.msra.mxu0 0
    %661 = vmatprep.subr.bf16.mxu0 0
    %662 = vmatpush1.bf16.msra.mxu0 0
    %663 = vmatprep.subr.bf16.mxu0 0
    %664 = vmatpush1.bf16.msra.mxu0 0
    %665 = vmatprep.mubr.bf16.mxu0 0
    %666 = vmatmul.mubr.bf16.gmra.mrb[0].mxu0 %v590
    %v667 = vpop.f32.mrb[0].mxu0
    %v668 = vadd.f32 0.0, %v667
    %v669 = vpop.f32.mrb[0].mxu0
    %v670 = vadd.f32 0.0, %v669
    %v671 = vpop.f32.mrb[0].mxu0
    %v672 = vpop.f32.mrb[0].mxu0
    %673 = vdwg.mxu0
    %v674 = vadd.f32 %v584, %v627
    %v675 = vadd.f32 %v585, %v629
    %v676 = vadd.f32 %v586, %v668
    %v677 = vadd.f32 %v587, %v670
    %v678 = vxor.u32 %v674, 2147483648
    %v679 = vxor.u32 %v675, 2147483648
    %v680 = vxor.u32 %v676, 2147483648
    %v681 = vmul.f32 %v678, 1.442695
    %v682 = vpow.pop %v681
    %v683 = vmul.f32 %v679, 1.442695
    %v684 = vpow.pop %v683
    %v685 = vmul.f32 %v680, 1.442695
    %v686 = vpow.pop %v685
    %v687 = vadd.f32 %v682, 1.0
    %v688 = vadd.f32 %v684, 1.0
    %v689 = vadd.f32 %v686, 1.0
    %v690 = vrcp.pop %v687
    %v691 = vmul.f32 1.0, %v690
    %v692 = vrcp.pop %v688
    %v693 = vmul.f32 1.0, %v692
    %v694 = vrcp.pop %v689
    %v695 = vmul.f32 1.0, %v694
    %v696 = vtanh.pop %v677
    %v697 = vmul.f32 %v693, %v581
    %v698 = vmul.f32 %v691, %v696
    %v699 = vadd.f32 %v697, %v698
    %v700 = vtanh.pop %v699
    %v701 = vmul.f32 %v695, %v700
    %v702 = vld [vmem:[#allocation2 + $0x40] sm:$0xff]
    %v703 = vld [vmem:[#allocation2 + $0x48] sm:$0xff]
    %v704 = vld [vmem:[#allocation2 + $0x50] sm:$0xff]
    %v705 = vld [vmem:[#allocation2 + $0x58] sm:$0xff]
    %v706 = vpack.c.bf16 %v701, %v701
    %v708 = vsel %vm180, %v706, 0
    %710 = vmatprep.subr.bf16.mxu0 %v440
    %711 = vmatpush1.bf16.msra.mxu0 %v439
    %712 = vmatprep.subr.bf16.mxu0 %v444
    %713 = vmatpush1.bf16.msra.mxu0 %v443
    %714 = vmatprep.subr.bf16.mxu0 %v448
    %715 = vmatpush1.bf16.msra.mxu0 %v447
    %716 = vmatprep.subr.bf16.mxu0 %v452
    %717 = vmatpush1.bf16.msra.mxu0 %v451
    %718 = vmatprep.subr.bf16.mxu0 0
    %719 = vmatpush1.bf16.msra.mxu0 0
    %720 = vmatprep.subr.bf16.mxu0 0
    %721 = vmatpush1.bf16.msra.mxu0 0
    %722 = vmatprep.subr.bf16.mxu0 0
    %723 = vmatpush1.bf16.msra.mxu0 0
    %724 = vmatprep.subr.bf16.mxu0 0
    %725 = vmatpush1.bf16.msra.mxu0 0
    %726 = vmatprep.subr.bf16.mxu0 0
    %727 = vmatpush1.bf16.msra.mxu0 0
    %728 = vmatprep.subr.bf16.mxu0 0
    %729 = vmatpush1.bf16.msra.mxu0 0
    %730 = vmatprep.subr.bf16.mxu0 0
    %731 = vmatpush1.bf16.msra.mxu0 0
    %732 = vmatprep.subr.bf16.mxu0 0
    %733 = vmatpush1.bf16.msra.mxu0 0
    %734 = vmatprep.subr.bf16.mxu0 0
    %735 = vmatpush1.bf16.msra.mxu0 0
    %736 = vmatprep.subr.bf16.mxu0 0
    %737 = vmatpush1.bf16.msra.mxu0 0
    %738 = vmatprep.subr.bf16.mxu0 0
    %739 = vmatpush1.bf16.msra.mxu0 0
    %740 = vmatprep.subr.bf16.mxu0 0
    %741 = vmatpush1.bf16.msra.mxu0 0
    %742 = vmatprep.mubr.bf16.mxu0 0
    %743 = vmatmul.mubr.bf16.gmra.mrb[0].mxu0 %v708
    %v744 = vpop.f32.mrb[0].mxu0
    %v745 = vadd.f32 0.0, %v744
    %v746 = vpop.f32.mrb[0].mxu0
    %v747 = vadd.f32 0.0, %v746
    %v748 = vpop.f32.mrb[0].mxu0
    %v749 = vpop.f32.mrb[0].mxu0
    %750 = vdwg.mxu0
    %751 = vmatprep.subr.bf16.mxu0 %v442
    %752 = vmatpush1.bf16.msra.mxu0 %v441
    %753 = vmatprep.subr.bf16.mxu0 %v446
    %754 = vmatpush1.bf16.msra.mxu0 %v445
    %755 = vmatprep.subr.bf16.mxu0 %v450
    %756 = vmatpush1.bf16.msra.mxu0 %v449
    %757 = vmatprep.subr.bf16.mxu0 %v454
    %758 = vmatpush1.bf16.msra.mxu0 %v453
    %759 = vmatprep.subr.bf16.mxu0 0
    %760 = vmatpush1.bf16.msra.mxu0 0
    %761 = vmatprep.subr.bf16.mxu0 0
    %762 = vmatpush1.bf16.msra.mxu0 0
    %763 = vmatprep.subr.bf16.mxu0 0
    %764 = vmatpush1.bf16.msra.mxu0 0
    %765 = vmatprep.subr.bf16.mxu0 0
    %766 = vmatpush1.bf16.msra.mxu0 0
    %767 = vmatprep.subr.bf16.mxu0 0
    %768 = vmatpush1.bf16.msra.mxu0 0
    %769 = vmatprep.subr.bf16.mxu0 0
    %770 = vmatpush1.bf16.msra.mxu0 0
    %771 = vmatprep.subr.bf16.mxu0 0
    %772 = vmatpush1.bf16.msra.mxu0 0
    %773 = vmatprep.subr.bf16.mxu0 0
    %774 = vmatpush1.bf16.msra.mxu0 0
    %775 = vmatprep.subr.bf16.mxu0 0
    %776 = vmatpush1.bf16.msra.mxu0 0
    %777 = vmatprep.subr.bf16.mxu0 0
    %778 = vmatpush1.bf16.msra.mxu0 0
    %779 = vmatprep.subr.bf16.mxu0 0
    %780 = vmatpush1.bf16.msra.mxu0 0
    %781 = vmatprep.subr.bf16.mxu0 0
    %782 = vmatpush1.bf16.msra.mxu0 0
    %783 = vmatprep.mubr.bf16.mxu0 0
    %784 = vmatmul.mubr.bf16.gmra.mrb[0].mxu0 %v708
    %v785 = vpop.f32.mrb[0].mxu0
    %v786 = vadd.f32 0.0, %v785
    %v787 = vpop.f32.mrb[0].mxu0
    %v788 = vadd.f32 0.0, %v787
    %v789 = vpop.f32.mrb[0].mxu0
    %v790 = vpop.f32.mrb[0].mxu0
    %791 = vdwg.mxu0
    %v792 = vadd.f32 %v702, %v745
    %v793 = vadd.f32 %v703, %v747
    %v794 = vadd.f32 %v704, %v786
    %v795 = vadd.f32 %v705, %v788
    %v796 = vxor.u32 %v792, 2147483648
    %v797 = vxor.u32 %v793, 2147483648
    %v798 = vxor.u32 %v794, 2147483648
    %v799 = vmul.f32 %v796, 1.442695
    %v800 = vpow.pop %v799
    %v801 = vmul.f32 %v797, 1.442695
    %v802 = vpow.pop %v801
    %v803 = vmul.f32 %v798, 1.442695
    %v804 = vpow.pop %v803
    %v805 = vadd.f32 %v800, 1.0
    %v806 = vadd.f32 %v802, 1.0
    %v807 = vadd.f32 %v804, 1.0
    %v808 = vrcp.pop %v805
    %v809 = vmul.f32 1.0, %v808
    %v810 = vrcp.pop %v806
    %v811 = vmul.f32 1.0, %v810
    %v812 = vrcp.pop %v807
    %v813 = vmul.f32 1.0, %v812
    %v814 = vtanh.pop %v795
    %v815 = vmul.f32 %v811, %v699
    %v816 = vmul.f32 %v809, %v814
    %v817 = vadd.f32 %v815, %v816
    %v818 = vtanh.pop %v817
    %v819 = vmul.f32 %v813, %v818
    %v820 = vld [vmem:[#allocation2 + $0x60] sm:$0xff]
    %v821 = vld [vmem:[#allocation2 + $0x68] sm:$0xff]
    %v822 = vld [vmem:[#allocation2 + $0x70] sm:$0xff]
    %v823 = vld [vmem:[#allocation2 + $0x78] sm:$0xff]
    %v824 = vpack.c.bf16 %v819, %v819
    %v826 = vsel %vm180, %v824, 0
    %828 = vmatprep.subr.bf16.mxu0 %v440
    %829 = vmatpush1.bf16.msra.mxu0 %v439
    %830 = vmatprep.subr.bf16.mxu0 %v444
    %831 = vmatpush1.bf16.msra.mxu0 %v443
    %832 = vmatprep.subr.bf16.mxu0 %v448
    %833 = vmatpush1.bf16.msra.mxu0 %v447
    %834 = vmatprep.subr.bf16.mxu0 %v452
    %835 = vmatpush1.bf16.msra.mxu0 %v451
    %836 = vmatprep.subr.bf16.mxu0 0
    %837 = vmatpush1.bf16.msra.mxu0 0
    %838 = vmatprep.subr.bf16.mxu0 0
    %839 = vmatpush1.bf16.msra.mxu0 0
    %840 = vmatprep.subr.bf16.mxu0 0
    %841 = vmatpush1.bf16.msra.mxu0 0
    %842 = vmatprep.subr.bf16.mxu0 0
    %843 = vmatpush1.bf16.msra.mxu0 0
    %844 = vmatprep.subr.bf16.mxu0 0
    %845 = vmatpush1.bf16.msra.mxu0 0
    %846 = vmatprep.subr.bf16.mxu0 0
    %847 = vmatpush1.bf16.msra.mxu0 0
    %848 = vmatprep.subr.bf16.mxu0 0
    %849 = vmatpush1.bf16.msra.mxu0 0
    %850 = vmatprep.subr.bf16.mxu0 0
    %851 = vmatpush1.bf16.msra.mxu0 0
    %852 = vmatprep.subr.bf16.mxu0 0
    %853 = vmatpush1.bf16.msra.mxu0 0
    %854 = vmatprep.subr.bf16.mxu0 0
    %855 = vmatpush1.bf16.msra.mxu0 0
    %856 = vmatprep.subr.bf16.mxu0 0
    %857 = vmatpush1.bf16.msra.mxu0 0
    %858 = vmatprep.subr.bf16.mxu0 0
    %859 = vmatpush1.bf16.msra.mxu0 0
    %860 = vmatprep.mubr.bf16.mxu0 0
    %861 = vmatmul.mubr.bf16.gmra.mrb[0].mxu0 %v826
    %v862 = vpop.f32.mrb[0].mxu0
    %v863 = vadd.f32 0.0, %v862
    %v864 = vpop.f32.mrb[0].mxu0
    %v865 = vadd.f32 0.0, %v864
    %v866 = vpop.f32.mrb[0].mxu0
    %v867 = vpop.f32.mrb[0].mxu0
    %868 = vdwg.mxu0
    %869 = vmatprep.subr.bf16.mxu0 %v442
    %870 = vmatpush1.bf16.msra.mxu0 %v441
    %871 = vmatprep.subr.bf16.mxu0 %v446
    %872 = vmatpush1.bf16.msra.mxu0 %v445
    %873 = vmatprep.subr.bf16.mxu0 %v450
    %874 = vmatpush1.bf16.msra.mxu0 %v449
    %875 = vmatprep.subr.bf16.mxu0 %v454
    %876 = vmatpush1.bf16.msra.mxu0 %v453
    %877 = vmatprep.subr.bf16.mxu0 0
    %878 = vmatpush1.bf16.msra.mxu0 0
    %879 = vmatprep.subr.bf16.mxu0 0
    %880 = vmatpush1.bf16.msra.mxu0 0
    %881 = vmatprep.subr.bf16.mxu0 0
    %882 = vmatpush1.bf16.msra.mxu0 0
    %883 = vmatprep.subr.bf16.mxu0 0
    %884 = vmatpush1.bf16.msra.mxu0 0
    %885 = vmatprep.subr.bf16.mxu0 0
    %886 = vmatpush1.bf16.msra.mxu0 0
    %887 = vmatprep.subr.bf16.mxu0 0
    %888 = vmatpush1.bf16.msra.mxu0 0
    %889 = vmatprep.subr.bf16.mxu0 0
    %890 = vmatpush1.bf16.msra.mxu0 0
    %891 = vmatprep.subr.bf16.mxu0 0
    %892 = vmatpush1.bf16.msra.mxu0 0
    %893 = vmatprep.subr.bf16.mxu0 0
    %894 = vmatpush1.bf16.msra.mxu0 0
    %895 = vmatprep.subr.bf16.mxu0 0
    %896 = vmatpush1.bf16.msra.mxu0 0
    %897 = vmatprep.subr.bf16.mxu0 0
    %898 = vmatpush1.bf16.msra.mxu0 0
    %899 = vmatprep.subr.bf16.mxu0 0
    %900 = vmatpush1.bf16.msra.mxu0 0
    %901 = vmatprep.mubr.bf16.mxu0 0
    %902 = vmatmul.mubr.bf16.gmra.mrb[0].mxu0 %v826
    %v903 = vpop.f32.mrb[0].mxu0
    %v904 = vadd.f32 0.0, %v903
    %v905 = vpop.f32.mrb[0].mxu0
    %v906 = vadd.f32 0.0, %v905
    %v907 = vpop.f32.mrb[0].mxu0
    %v908 = vpop.f32.mrb[0].mxu0
    %909 = vdwg.mxu0
    %v910 = vadd.f32 %v820, %v863
    %v911 = vadd.f32 %v821, %v865
    %v912 = vadd.f32 %v822, %v904
    %v913 = vadd.f32 %v823, %v906
    %v914 = vxor.u32 %v910, 2147483648
    %v915 = vxor.u32 %v911, 2147483648
    %v916 = vxor.u32 %v912, 2147483648
    %v917 = vmul.f32 %v914, 1.442695
    %v918 = vpow.pop %v917
    %v919 = vmul.f32 %v915, 1.442695
    %v920 = vpow.pop %v919
    %v921 = vmul.f32 %v916, 1.442695
    %v922 = vpow.pop %v921
    %v923 = vadd.f32 %v918, 1.0
    %v924 = vadd.f32 %v920, 1.0
    %v925 = vadd.f32 %v922, 1.0
    %v926 = vrcp.pop %v923
    %v927 = vmul.f32 1.0, %v926
    %v928 = vrcp.pop %v924
    %v929 = vmul.f32 1.0, %v928
    %v930 = vrcp.pop %v925
    %v931 = vmul.f32 1.0, %v930
    %v932 = vtanh.pop %v913
    %v933 = vmul.f32 %v929, %v817
    %v934 = vmul.f32 %v927, %v932
    %v935 = vadd.f32 %v933, %v934
    %v936 = vtanh.pop %v935
    %v937 = vmul.f32 %v931, %v936
    %v938 = vld [vmem:[#allocation2 + $0x80] sm:$0xff]
    %v939 = vld [vmem:[#allocation2 + $0x88] sm:$0xff]
    %v940 = vld [vmem:[#allocation2 + $0x90] sm:$0xff]
    %v941 = vld [vmem:[#allocation2 + $0x98] sm:$0xff]
    %v942 = vpack.c.bf16 %v937, %v937
    %v944 = vsel %vm180, %v942, 0
    %946 = vmatprep.subr.bf16.mxu0 %v440
    %947 = vmatpush1.bf16.msra.mxu0 %v439
    %948 = vmatprep.subr.bf16.mxu0 %v444
    %949 = vmatpush1.bf16.msra.mxu0 %v443
    %950 = vmatprep.subr.bf16.mxu0 %v448
    %951 = vmatpush1.bf16.msra.mxu0 %v447
    %952 = vmatprep.subr.bf16.mxu0 %v452
    %953 = vmatpush1.bf16.msra.mxu0 %v451
    %954 = vmatprep.subr.bf16.mxu0 0
    %955 = vmatpush1.bf16.msra.mxu0 0
    %956 = vmatprep.subr.bf16.mxu0 0
    %957 = vmatpush1.bf16.msra.mxu0 0
    %958 = vmatprep.subr.bf16.mxu0 0
    %959 = vmatpush1.bf16.msra.mxu0 0
    %960 = vmatprep.subr.bf16.mxu0 0
    %961 = vmatpush1.bf16.msra.mxu0 0
    %962 = vmatprep.subr.bf16.mxu0 0
    %963 = vmatpush1.bf16.msra.mxu0 0
    %964 = vmatprep.subr.bf16.mxu0 0
    %965 = vmatpush1.bf16.msra.mxu0 0
    %966 = vmatprep.subr.bf16.mxu0 0
    %967 = vmatpush1.bf16.msra.mxu0 0
    %968 = vmatprep.subr.bf16.mxu0 0
    %969 = vmatpush1.bf16.msra.mxu0 0
    %970 = vmatprep.subr.bf16.mxu0 0
    %971 = vmatpush1.bf16.msra.mxu0 0
    %972 = vmatprep.subr.bf16.mxu0 0
    %973 = vmatpush1.bf16.msra.mxu0 0
    %974 = vmatprep.subr.bf16.mxu0 0
    %975 = vmatpush1.bf16.msra.mxu0 0
    %976 = vmatprep.subr.bf16.mxu0 0
    %977 = vmatpush1.bf16.msra.mxu0 0
    %978 = vmatprep.mubr.bf16.mxu0 0
    %979 = vmatmul.mubr.bf16.gmra.mrb[0].mxu0 %v944
    %v980 = vpop.f32.mrb[0].mxu0
    %v981 = vadd.f32 0.0, %v980
    %v982 = vpop.f32.mrb[0].mxu0
    %v983 = vadd.f32 0.0, %v982
    %v984 = vpop.f32.mrb[0].mxu0
    %v985 = vpop.f32.mrb[0].mxu0
    %986 = vdwg.mxu0
    %987 = vmatprep.subr.bf16.mxu0 %v442
    %988 = vmatpush1.bf16.msra.mxu0 %v441
    %989 = vmatprep.subr.bf16.mxu0 %v446
    %990 = vmatpush1.bf16.msra.mxu0 %v445
    %991 = vmatprep.subr.bf16.mxu0 %v450
    %992 = vmatpush1.bf16.msra.mxu0 %v449
    %993 = vmatprep.subr.bf16.mxu0 %v454
    %994 = vmatpush1.bf16.msra.mxu0 %v453
    %995 = vmatprep.subr.bf16.mxu0 0
    %996 = vmatpush1.bf16.msra.mxu0 0
    %997 = vmatprep.subr.bf16.mxu0 0
    %998 = vmatpush1.bf16.msra.mxu0 0
    %999 = vmatprep.subr.bf16.mxu0 0
    %1000 = vmatpush1.bf16.msra.mxu0 0
    %1001 = vmatprep.subr.bf16.mxu0 0
    %1002 = vmatpush1.bf16.msra.mxu0 0
    %1003 = vmatprep.subr.bf16.mxu0 0
    %1004 = vmatpush1.bf16.msra.mxu0 0
    %1005 = vmatprep.subr.bf16.mxu0 0
    %1006 = vmatpush1.bf16.msra.mxu0 0
    %1007 = vmatprep.subr.bf16.mxu0 0
    %1008 = vmatpush1.bf16.msra.mxu0 0
    %1009 = vmatprep.subr.bf16.mxu0 0
    %1010 = vmatpush1.bf16.msra.mxu0 0
    %1011 = vmatprep.subr.bf16.mxu0 0
    %1012 = vmatpush1.bf16.msra.mxu0 0
    %1013 = vmatprep.subr.bf16.mxu0 0
    %1014 = vmatpush1.bf16.msra.mxu0 0
    %1015 = vmatprep.subr.bf16.mxu0 0
    %1016 = vmatpush1.bf16.msra.mxu0 0
    %1017 = vmatprep.subr.bf16.mxu0 0
    %1018 = vmatpush1.bf16.msra.mxu0 0
    %1019 = vmatprep.mubr.bf16.mxu0 0
    %1020 = vmatmul.mubr.bf16.gmra.mrb[0].mxu0 %v944
    %v1021 = vpop.f32.mrb[0].mxu0
    %v1022 = vadd.f32 0.0, %v1021
    %v1023 = vpop.f32.mrb[0].mxu0
    %v1024 = vadd.f32 0.0, %v1023
    %v1025 = vpop.f32.mrb[0].mxu0
    %v1026 = vpop.f32.mrb[0].mxu0
    %1027 = vdwg.mxu0
    %v1028 = vadd.f32 %v938, %v981
    %v1029 = vadd.f32 %v939, %v983
    %v1030 = vadd.f32 %v940, %v1022
    %v1031 = vadd.f32 %v941, %v1024
    %v1032 = vxor.u32 %v1028, 2147483648
    %v1033 = vxor.u32 %v1029, 2147483648
    %v1034 = vxor.u32 %v1030, 2147483648
    %v1035 = vmul.f32 %v1032, 1.442695
    %v1036 = vpow.pop %v1035
    %v1037 = vmul.f32 %v1033, 1.442695
    %v1038 = vpow.pop %v1037
    %v1039 = vmul.f32 %v1034, 1.442695
    %v1040 = vpow.pop %v1039
    %v1041 = vadd.f32 %v1036, 1.0
    %v1042 = vadd.f32 %v1038, 1.0
    %v1043 = vadd.f32 %v1040, 1.0
    %v1044 = vrcp.pop %v1041
    %v1045 = vmul.f32 1.0, %v1044
    %v1046 = vrcp.pop %v1042
    %v1047 = vmul.f32 1.0, %v1046
    %v1048 = vrcp.pop %v1043
    %v1049 = vmul.f32 1.0, %v1048
    %v1050 = vtanh.pop %v1031
    %v1051 = vmul.f32 %v1047, %v935
    %v1052 = vmul.f32 %v1045, %v1050
    %v1053 = vadd.f32 %v1051, %v1052
    %v1054 = vtanh.pop %v1053
    %v1055 = vmul.f32 %v1049, %v1054
    %v1056 = vld [vmem:[#allocation2 + $0xa0] sm:$0xff]
    %v1057 = vld [vmem:[#allocation2 + $0xa8] sm:$0xff]
    %v1058 = vld [vmem:[#allocation2 + $0xb0] sm:$0xff]
    %v1059 = vld [vmem:[#allocation2 + $0xb8] sm:$0xff]
    %v1060 = vpack.c.bf16 %v1055, %v1055
    %v1062 = vsel %vm180, %v1060, 0
    %1064 = vmatprep.subr.bf16.mxu0 %v440
    %1065 = vmatpush1.bf16.msra.mxu0 %v439
    %1066 = vmatprep.subr.bf16.mxu0 %v444
    %1067 = vmatpush1.bf16.msra.mxu0 %v443
    %1068 = vmatprep.subr.bf16.mxu0 %v448
    %1069 = vmatpush1.bf16.msra.mxu0 %v447
    %1070 = vmatprep.subr.bf16.mxu0 %v452
    %1071 = vmatpush1.bf16.msra.mxu0 %v451
    %1072 = vmatprep.subr.bf16.mxu0 0
    %1073 = vmatpush1.bf16.msra.mxu0 0
    %1074 = vmatprep.subr.bf16.mxu0 0
    %1075 = vmatpush1.bf16.msra.mxu0 0
    %1076 = vmatprep.subr.bf16.mxu0 0
    %1077 = vmatpush1.bf16.msra.mxu0 0
    %1078 = vmatprep.subr.bf16.mxu0 0
    %1079 = vmatpush1.bf16.msra.mxu0 0
    %1080 = vmatprep.subr.bf16.mxu0 0
    %1081 = vmatpush1.bf16.msra.mxu0 0
    %1082 = vmatprep.subr.bf16.mxu0 0
    %1083 = vmatpush1.bf16.msra.mxu0 0
    %1084 = vmatprep.subr.bf16.mxu0 0
    %1085 = vmatpush1.bf16.msra.mxu0 0
    %1086 = vmatprep.subr.bf16.mxu0 0
    %1087 = vmatpush1.bf16.msra.mxu0 0
    %1088 = vmatprep.subr.bf16.mxu0 0
    %1089 = vmatpush1.bf16.msra.mxu0 0
    %1090 = vmatprep.subr.bf16.mxu0 0
    %1091 = vmatpush1.bf16.msra.mxu0 0
    %1092 = vmatprep.subr.bf16.mxu0 0
    %1093 = vmatpush1.bf16.msra.mxu0 0
    %1094 = vmatprep.subr.bf16.mxu0 0
    %1095 = vmatpush1.bf16.msra.mxu0 0
    %1096 = vmatprep.mubr.bf16.mxu0 0
    %1097 = vmatmul.mubr.bf16.gmra.mrb[0].mxu0 %v1062
    %v1098 = vpop.f32.mrb[0].mxu0
    %v1099 = vadd.f32 0.0, %v1098
    %v1100 = vpop.f32.mrb[0].mxu0
    %v1101 = vadd.f32 0.0, %v1100
    %v1102 = vpop.f32.mrb[0].mxu0
    %v1103 = vpop.f32.mrb[0].mxu0
    %1104 = vdwg.mxu0
    %1105 = vmatprep.subr.bf16.mxu0 %v442
    %1106 = vmatpush1.bf16.msra.mxu0 %v441
    %1107 = vmatprep.subr.bf16.mxu0 %v446
    %1108 = vmatpush1.bf16.msra.mxu0 %v445
    %1109 = vmatprep.subr.bf16.mxu0 %v450
    %1110 = vmatpush1.bf16.msra.mxu0 %v449
    %1111 = vmatprep.subr.bf16.mxu0 %v454
    %1112 = vmatpush1.bf16.msra.mxu0 %v453
    %1113 = vmatprep.subr.bf16.mxu0 0
    %1114 = vmatpush1.bf16.msra.mxu0 0
    %1115 = vmatprep.subr.bf16.mxu0 0
    %1116 = vmatpush1.bf16.msra.mxu0 0
    %1117 = vmatprep.subr.bf16.mxu0 0
    %1118 = vmatpush1.bf16.msra.mxu0 0
    %1119 = vmatprep.subr.bf16.mxu0 0
    %1120 = vmatpush1.bf16.msra.mxu0 0
    %1121 = vmatprep.subr.bf16.mxu0 0
    %1122 = vmatpush1.bf16.msra.mxu0 0
    %1123 = vmatprep.subr.bf16.mxu0 0
    %1124 = vmatpush1.bf16.msra.mxu0 0
    %1125 = vmatprep.subr.bf16.mxu0 0
    %1126 = vmatpush1.bf16.msra.mxu0 0
    %1127 = vmatprep.subr.bf16.mxu0 0
    %1128 = vmatpush1.bf16.msra.mxu0 0
    %1129 = vmatprep.subr.bf16.mxu0 0
    %1130 = vmatpush1.bf16.msra.mxu0 0
    %1131 = vmatprep.subr.bf16.mxu0 0
    %1132 = vmatpush1.bf16.msra.mxu0 0
    %1133 = vmatprep.subr.bf16.mxu0 0
    %1134 = vmatpush1.bf16.msra.mxu0 0
    %1135 = vmatprep.subr.bf16.mxu0 0
    %1136 = vmatpush1.bf16.msra.mxu0 0
    %1137 = vmatprep.mubr.bf16.mxu0 0
    %1138 = vmatmul.mubr.bf16.gmra.mrb[0].mxu0 %v1062
    %v1139 = vpop.f32.mrb[0].mxu0
    %v1140 = vadd.f32 0.0, %v1139
    %v1141 = vpop.f32.mrb[0].mxu0
    %v1142 = vadd.f32 0.0, %v1141
    %v1143 = vpop.f32.mrb[0].mxu0
    %v1144 = vpop.f32.mrb[0].mxu0
    %1145 = vdwg.mxu0
    %v1146 = vadd.f32 %v1056, %v1099
    %v1147 = vadd.f32 %v1057, %v1101
    %v1148 = vadd.f32 %v1058, %v1140
    %v1149 = vadd.f32 %v1059, %v1142
    %v1150 = vxor.u32 %v1146, 2147483648
    %v1151 = vxor.u32 %v1147, 2147483648
    %v1152 = vxor.u32 %v1148, 2147483648
    %v1153 = vmul.f32 %v1150, 1.442695
    %v1154 = vpow.pop %v1153
    %v1155 = vmul.f32 %v1151, 1.442695
    %v1156 = vpow.pop %v1155
    %v1157 = vmul.f32 %v1152, 1.442695
    %v1158 = vpow.pop %v1157
    %v1159 = vadd.f32 %v1154, 1.0
    %v1160 = vadd.f32 %v1156, 1.0
    %v1161 = vadd.f32 %v1158, 1.0
    %v1162 = vrcp.pop %v1159
    %v1163 = vmul.f32 1.0, %v1162
    %v1164 = vrcp.pop %v1160
    %v1165 = vmul.f32 1.0, %v1164
    %v1166 = vrcp.pop %v1161
    %v1167 = vmul.f32 1.0, %v1166
    %v1168 = vtanh.pop %v1149
    %v1169 = vmul.f32 %v1165, %v1053
    %v1170 = vmul.f32 %v1163, %v1168
    %v1171 = vadd.f32 %v1169, %v1170
    %v1172 = vtanh.pop %v1171
    %v1173 = vmul.f32 %v1167, %v1172
    %v1174 = vld [vmem:[#allocation2 + $0xc0] sm:$0xff]
    %v1175 = vld [vmem:[#allocation2 + $0xc8] sm:$0xff]
    %v1176 = vld [vmem:[#allocation2 + $0xd0] sm:$0xff]
    %v1177 = vld [vmem:[#allocation2 + $0xd8] sm:$0xff]
    %v1178 = vpack.c.bf16 %v1173, %v1173
    %v1180 = vsel %vm180, %v1178, 0
    %1182 = vmatprep.subr.bf16.mxu0 %v440
    %1183 = vmatpush1.bf16.msra.mxu0 %v439
    %1184 = vmatprep.subr.bf16.mxu0 %v444
    %1185 = vmatpush1.bf16.msra.mxu0 %v443
    %1186 = vmatprep.subr.bf16.mxu0 %v448
    %1187 = vmatpush1.bf16.msra.mxu0 %v447
    %1188 = vmatprep.subr.bf16.mxu0 %v452
    %1189 = vmatpush1.bf16.msra.mxu0 %v451
    %1190 = vmatprep.subr.bf16.mxu0 0
    %1191 = vmatpush1.bf16.msra.mxu0 0
    %1192 = vmatprep.subr.bf16.mxu0 0
    %1193 = vmatpush1.bf16.msra.mxu0 0
    %1194 = vmatprep.subr.bf16.mxu0 0
    %1195 = vmatpush1.bf16.msra.mxu0 0
    %1196 = vmatprep.subr.bf16.mxu0 0
    %1197 = vmatpush1.bf16.msra.mxu0 0
    %1198 = vmatprep.subr.bf16.mxu0 0
    %1199 = vmatpush1.bf16.msra.mxu0 0
    %1200 = vmatprep.subr.bf16.mxu0 0
    %1201 = vmatpush1.bf16.msra.mxu0 0
    %1202 = vmatprep.subr.bf16.mxu0 0
    %1203 = vmatpush1.bf16.msra.mxu0 0
    %1204 = vmatprep.subr.bf16.mxu0 0
    %1205 = vmatpush1.bf16.msra.mxu0 0
    %1206 = vmatprep.subr.bf16.mxu0 0
    %1207 = vmatpush1.bf16.msra.mxu0 0
    %1208 = vmatprep.subr.bf16.mxu0 0
    %1209 = vmatpush1.bf16.msra.mxu0 0
    %1210 = vmatprep.subr.bf16.mxu0 0
    %1211 = vmatpush1.bf16.msra.mxu0 0
    %1212 = vmatprep.subr.bf16.mxu0 0
    %1213 = vmatpush1.bf16.msra.mxu0 0
    %1214 = vmatprep.mubr.bf16.mxu0 0
    %1215 = vmatmul.mubr.bf16.gmra.mrb[0].mxu0 %v1180
    %v1216 = vpop.f32.mrb[0].mxu0
    %v1217 = vadd.f32 0.0, %v1216
    %v1218 = vpop.f32.mrb[0].mxu0
    %v1219 = vadd.f32 0.0, %v1218
    %v1220 = vpop.f32.mrb[0].mxu0
    %v1221 = vpop.f32.mrb[0].mxu0
    %1222 = vdwg.mxu0
    %1223 = vmatprep.subr.bf16.mxu0 %v442
    %1224 = vmatpush1.bf16.msra.mxu0 %v441
    %1225 = vmatprep.subr.bf16.mxu0 %v446
    %1226 = vmatpush1.bf16.msra.mxu0 %v445
    %1227 = vmatprep.subr.bf16.mxu0 %v450
    %1228 = vmatpush1.bf16.msra.mxu0 %v449
    %1229 = vmatprep.subr.bf16.mxu0 %v454
    %1230 = vmatpush1.bf16.msra.mxu0 %v453
    %1231 = vmatprep.subr.bf16.mxu0 0
    %1232 = vmatpush1.bf16.msra.mxu0 0
    %1233 = vmatprep.subr.bf16.mxu0 0
    %1234 = vmatpush1.bf16.msra.mxu0 0
    %1235 = vmatprep.subr.bf16.mxu0 0
    %1236 = vmatpush1.bf16.msra.mxu0 0
    %1237 = vmatprep.subr.bf16.mxu0 0
    %1238 = vmatpush1.bf16.msra.mxu0 0
    %1239 = vmatprep.subr.bf16.mxu0 0
    %1240 = vmatpush1.bf16.msra.mxu0 0
    %1241 = vmatprep.subr.bf16.mxu0 0
    %1242 = vmatpush1.bf16.msra.mxu0 0
    %1243 = vmatprep.subr.bf16.mxu0 0
    %1244 = vmatpush1.bf16.msra.mxu0 0
    %1245 = vmatprep.subr.bf16.mxu0 0
    %1246 = vmatpush1.bf16.msra.mxu0 0
    %1247 = vmatprep.subr.bf16.mxu0 0
    %1248 = vmatpush1.bf16.msra.mxu0 0
    %1249 = vmatprep.subr.bf16.mxu0 0
    %1250 = vmatpush1.bf16.msra.mxu0 0
    %1251 = vmatprep.subr.bf16.mxu0 0
    %1252 = vmatpush1.bf16.msra.mxu0 0
    %1253 = vmatprep.subr.bf16.mxu0 0
    %1254 = vmatpush1.bf16.msra.mxu0 0
    %1255 = vmatprep.mubr.bf16.mxu0 0
    %1256 = vmatmul.mubr.bf16.gmra.mrb[0].mxu0 %v1180
    %v1257 = vpop.f32.mrb[0].mxu0
    %v1258 = vadd.f32 0.0, %v1257
    %v1259 = vpop.f32.mrb[0].mxu0
    %v1260 = vadd.f32 0.0, %v1259
    %v1261 = vpop.f32.mrb[0].mxu0
    %v1262 = vpop.f32.mrb[0].mxu0
    %1263 = vdwg.mxu0
    %v1264 = vadd.f32 %v1174, %v1217
    %v1265 = vadd.f32 %v1175, %v1219
    %v1266 = vadd.f32 %v1176, %v1258
    %v1267 = vadd.f32 %v1177, %v1260
    %v1268 = vxor.u32 %v1264, 2147483648
    %v1269 = vxor.u32 %v1265, 2147483648
    %v1270 = vxor.u32 %v1266, 2147483648
    %v1271 = vmul.f32 %v1268, 1.442695
    %v1272 = vpow.pop %v1271
    %v1273 = vmul.f32 %v1269, 1.442695
    %v1274 = vpow.pop %v1273
    %v1275 = vmul.f32 %v1270, 1.442695
    %v1276 = vpow.pop %v1275
    %v1277 = vadd.f32 %v1272, 1.0
    %v1278 = vadd.f32 %v1274, 1.0
    %v1279 = vadd.f32 %v1276, 1.0
    %v1280 = vrcp.pop %v1277
    %v1281 = vmul.f32 1.0, %v1280
    %v1282 = vrcp.pop %v1278
    %v1283 = vmul.f32 1.0, %v1282
    %v1284 = vrcp.pop %v1279
    %v1285 = vmul.f32 1.0, %v1284
    %v1286 = vtanh.pop %v1267
    %v1287 = vmul.f32 %v1283, %v1171
    %v1288 = vmul.f32 %v1281, %v1286
    %v1289 = vadd.f32 %v1287, %v1288
    %v1290 = vtanh.pop %v1289
    %v1291 = vmul.f32 %v1285, %v1290
    %v1292 = vld [vmem:[#allocation2 + $0xe0] sm:$0xff]
    %v1293 = vld [vmem:[#allocation2 + $0xe8] sm:$0xff]
    %v1294 = vld [vmem:[#allocation2 + $0xf0] sm:$0xff]
    %v1295 = vld [vmem:[#allocation2 + $0xf8] sm:$0xff]
    %v1296 = vpack.c.bf16 %v1291, %v1291
    %v1298 = vsel %vm180, %v1296, 0
    %1300 = vmatprep.subr.bf16.mxu0 %v440
    %1301 = vmatpush1.bf16.msra.mxu0 %v439
    %1302 = vmatprep.subr.bf16.mxu0 %v444
    %1303 = vmatpush1.bf16.msra.mxu0 %v443
    %1304 = vmatprep.subr.bf16.mxu0 %v448
    %1305 = vmatpush1.bf16.msra.mxu0 %v447
    %1306 = vmatprep.subr.bf16.mxu0 %v452
    %1307 = vmatpush1.bf16.msra.mxu0 %v451
    %1308 = vmatprep.subr.bf16.mxu0 0
    %1309 = vmatpush1.bf16.msra.mxu0 0
    %1310 = vmatprep.subr.bf16.mxu0 0
    %1311 = vmatpush1.bf16.msra.mxu0 0
    %1312 = vmatprep.subr.bf16.mxu0 0
    %1313 = vmatpush1.bf16.msra.mxu0 0
    %1314 = vmatprep.subr.bf16.mxu0 0
    %1315 = vmatpush1.bf16.msra.mxu0 0
    %1316 = vmatprep.subr.bf16.mxu0 0
    %1317 = vmatpush1.bf16.msra.mxu0 0
    %1318 = vmatprep.subr.bf16.mxu0 0
    %1319 = vmatpush1.bf16.msra.mxu0 0
    %1320 = vmatprep.subr.bf16.mxu0 0
    %1321 = vmatpush1.bf16.msra.mxu0 0
    %1322 = vmatprep.subr.bf16.mxu0 0
    %1323 = vmatpush1.bf16.msra.mxu0 0
    %1324 = vmatprep.subr.bf16.mxu0 0
    %1325 = vmatpush1.bf16.msra.mxu0 0
    %1326 = vmatprep.subr.bf16.mxu0 0
    %1327 = vmatpush1.bf16.msra.mxu0 0
    %1328 = vmatprep.subr.bf16.mxu0 0
    %1329 = vmatpush1.bf16.msra.mxu0 0
    %1330 = vmatprep.subr.bf16.mxu0 0
    %1331 = vmatpush1.bf16.msra.mxu0 0
    %1332 = vmatprep.mubr.bf16.mxu0 0
    %1333 = vmatmul.mubr.bf16.gmra.mrb[0].mxu0 %v1298
    %v1334 = vpop.f32.mrb[0].mxu0
    %v1335 = vadd.f32 0.0, %v1334
    %v1336 = vpop.f32.mrb[0].mxu0
    %v1337 = vadd.f32 0.0, %v1336
    %v1338 = vpop.f32.mrb[0].mxu0
    %v1339 = vpop.f32.mrb[0].mxu0
    %1340 = vdwg.mxu0
    %1341 = vmatprep.subr.bf16.mxu0 %v442
    %1342 = vmatpush1.bf16.msra.mxu0 %v441
    %1343 = vmatprep.subr.bf16.mxu0 %v446
    %1344 = vmatpush1.bf16.msra.mxu0 %v445
    %1345 = vmatprep.subr.bf16.mxu0 %v450
    %1346 = vmatpush1.bf16.msra.mxu0 %v449
    %1347 = vmatprep.subr.bf16.mxu0 %v454
    %1348 = vmatpush1.bf16.msra.mxu0 %v453
    %1349 = vmatprep.subr.bf16.mxu0 0
    %1350 = vmatpush1.bf16.msra.mxu0 0
    %1351 = vmatprep.subr.bf16.mxu0 0
    %1352 = vmatpush1.bf16.msra.mxu0 0
    %1353 = vmatprep.subr.bf16.mxu0 0
    %1354 = vmatpush1.bf16.msra.mxu0 0
    %1355 = vmatprep.subr.bf16.mxu0 0
    %1356 = vmatpush1.bf16.msra.mxu0 0
    %1357 = vmatprep.subr.bf16.mxu0 0
    %1358 = vmatpush1.bf16.msra.mxu0 0
    %1359 = vmatprep.subr.bf16.mxu0 0
    %1360 = vmatpush1.bf16.msra.mxu0 0
    %1361 = vmatprep.subr.bf16.mxu0 0
    %1362 = vmatpush1.bf16.msra.mxu0 0
    %1363 = vmatprep.subr.bf16.mxu0 0
    %1364 = vmatpush1.bf16.msra.mxu0 0
    %1365 = vmatprep.subr.bf16.mxu0 0
    %1366 = vmatpush1.bf16.msra.mxu0 0
    %1367 = vmatprep.subr.bf16.mxu0 0
    %1368 = vmatpush1.bf16.msra.mxu0 0
    %1369 = vmatprep.subr.bf16.mxu0 0
    %1370 = vmatpush1.bf16.msra.mxu0 0
    %1371 = vmatprep.subr.bf16.mxu0 0
    %1372 = vmatpush1.bf16.msra.mxu0 0
    %1373 = vmatprep.mubr.bf16.mxu0 0
    %1374 = vmatmul.mubr.bf16.gmra.mrb[0].mxu0 %v1298
    %v1375 = vpop.f32.mrb[0].mxu0
    %v1376 = vadd.f32 0.0, %v1375
    %v1377 = vpop.f32.mrb[0].mxu0
    %v1378 = vadd.f32 0.0, %v1377
    %v1379 = vpop.f32.mrb[0].mxu0
    %v1380 = vpop.f32.mrb[0].mxu0
    %1381 = vdwg.mxu0
    %v1382 = vadd.f32 %v1292, %v1335
    %v1383 = vadd.f32 %v1293, %v1337
    %v1384 = vadd.f32 %v1294, %v1376
    %v1385 = vadd.f32 %v1295, %v1378
    %v1386 = vxor.u32 %v1382, 2147483648
    %v1387 = vxor.u32 %v1383, 2147483648
    %v1388 = vxor.u32 %v1384, 2147483648
    %v1389 = vmul.f32 %v1386, 1.442695
    %v1390 = vpow.pop %v1389
    %v1391 = vmul.f32 %v1387, 1.442695
    %v1392 = vpow.pop %v1391
    %v1393 = vmul.f32 %v1388, 1.442695
    %v1394 = vpow.pop %v1393
    %v1395 = vadd.f32 %v1390, 1.0
    %v1396 = vadd.f32 %v1392, 1.0
    %v1397 = vadd.f32 %v1394, 1.0
    %v1398 = vrcp.pop %v1395
    %v1399 = vmul.f32 1.0, %v1398
    %v1400 = vrcp.pop %v1396
    %v1401 = vmul.f32 1.0, %v1400
    %v1402 = vrcp.pop %v1397
    %v1403 = vmul.f32 1.0, %v1402
    %v1404 = vtanh.pop %v1385
    %v1405 = vmul.f32 %v1401, %v1289
    %v1406 = vmul.f32 %v1399, %v1404
    %v1407 = vadd.f32 %v1405, %v1406
    %v1408 = vtanh.pop %v1407
    %v1409 = vmul.f32 %v1403, %v1408
    %vm1410 = vcmask 261120
    %v1411 = vsel %vm1410, %v583, %v1409
    %v1412 = vsel %vm1410, %v701, %v1291
    %v1413 = vsel %vm1410, %v819, %v1173
    %v1414 = vsel %vm1410, %v937, %v1055
    %v1415 = vsel %vm1410, %v1055, %v937
    %v1416 = vsel %vm1410, %v1173, %v819
    %v1417 = vsel %vm1410, %v1291, %v701
    %v1418 = vsel %vm1410, %v1409, %v583
    %v1419 = vpack.c.bf16 %v1412, %v1411
    %v1420 = vpack.c.bf16 %v1414, %v1413
    %v1421 = vpack.c.bf16 %v1416, %v1415
    %v1422 = vpack.c.bf16 %v1418, %v1417
    %v1423 = vld [vmem:[#allocation4 + $0x100] sm:$0xf]
    %v1424 = vld [vmem:[#allocation4 + $0x110] sm:$0xf]
    %v1425 = vld [vmem:[#allocation4 + $0x120] sm:$0xf]
    %v1426 = vld [vmem:[#allocation4 + $0x130] sm:$0xf]
    %v1427 = vld [vmem:[#allocation4 + $0x140] sm:$0xf]
    %v1428 = vld [vmem:[#allocation4 + $0x150] sm:$0xf]
    %v1429 = vld [vmem:[#allocation4 + $0x160] sm:$0xf]
    %v1430 = vld [vmem:[#allocation4 + $0x170] sm:$0xf]
    %v1431 = vld [vmem:[%s3 + $0x20] ss:$0 sm:$0xff]
    %v1440 = vunpack.c.l.b16 %v1423
    %v1441 = vunpack.c.l.b16 %v1424
    %v1442 = vunpack.c.l.b16 %v1425
    %v1443 = vunpack.c.l.b16 %v1426
    %v1444 = vunpack.c.l.b16 %v1427
    %v1445 = vunpack.c.l.b16 %v1428
    %v1446 = vunpack.c.l.b16 %v1429
    %v1447 = vunpack.c.l.b16 %v1430
    %v1448 = vpack.c.b16 %v1441, %v1440
    %v1449 = vpack.c.b16 %v1443, %v1442
    %v1450 = vpack.c.b16 %v1445, %v1444
    %v1451 = vpack.c.b16 %v1447, %v1446
    %v1457 = vsel %vm180, %v1419, 0
    %v1460 = vsel %vm180, %v1420, 0
    %v1463 = vsel %vm180, %v1421, 0
    %v1466 = vsel %vm180, %v1422, 0
    %1468 = vmatprep.subr.bf16.mxu0 0
    %1469 = vmatpush1.bf16.msra.mxu0 %v1448
    %1470 = vmatprep.subr.bf16.mxu0 0
    %1471 = vmatpush1.bf16.msra.mxu0 %v1449
    %1472 = vmatprep.subr.bf16.mxu0 0
    %1473 = vmatpush1.bf16.msra.mxu0 %v1450
    %1474 = vmatprep.subr.bf16.mxu0 0
    %1475 = vmatpush1.bf16.msra.mxu0 %v1451
    %1476 = vmatprep.subr.bf16.mxu0 0
    %1477 = vmatpush1.bf16.msra.mxu0 0
    %1478 = vmatprep.subr.bf16.mxu0 0
    %1479 = vmatpush1.bf16.msra.mxu0 0
    %1480 = vmatprep.subr.bf16.mxu0 0
    %1481 = vmatpush1.bf16.msra.mxu0 0
    %1482 = vmatprep.subr.bf16.mxu0 0
    %1483 = vmatpush1.bf16.msra.mxu0 0
    %1484 = vmatprep.subr.bf16.mxu0 0
    %1485 = vmatpush1.bf16.msra.mxu0 0
    %1486 = vmatprep.subr.bf16.mxu0 0
    %1487 = vmatpush1.bf16.msra.mxu0 0
    %1488 = vmatprep.subr.bf16.mxu0 0
    %1489 = vmatpush1.bf16.msra.mxu0 0
    %1490 = vmatprep.subr.bf16.mxu0 0
    %1491 = vmatpush1.bf16.msra.mxu0 0
    %1492 = vmatprep.subr.bf16.mxu0 0
    %1493 = vmatpush1.bf16.msra.mxu0 0
    %1494 = vmatprep.subr.bf16.mxu0 0
    %1495 = vmatpush1.bf16.msra.mxu0 0
    %1496 = vmatprep.subr.bf16.mxu0 0
    %1497 = vmatpush1.bf16.msra.mxu0 0
    %1498 = vmatprep.subr.bf16.mxu0 0
    %1499 = vmatpush1.bf16.msra.mxu0 0
    %1500 = vmatprep.mubr.bf16.mxu0 0
    %1501 = vmatmul.mubr.bf16.gmra.mrb[0].mxu0 %v1457
    %v1502 = vpop.f32.mrb[0].mxu0
    %v1503 = vadd.f32 %v1431, %v1502
    %v1504 = vpop.f32.mrb[0].mxu0
    %v1505 = vpop.f32.mrb[0].mxu0
    %v1506 = vadd.f32 %v1431, %v1505
    %v1507 = vpop.f32.mrb[0].mxu0
    %1508 = vmatprep.mubr.bf16.mxu0 0
    %1509 = vmatmul.mubr.bf16.gmra.mrb[0].mxu0 %v1460
    %v1510 = vpop.f32.mrb[0].mxu0
    %v1511 = vadd.f32 %v1431, %v1510
    %v1512 = vpop.f32.mrb[0].mxu0
    %v1513 = vpop.f32.mrb[0].mxu0
    %v1514 = vadd.f32 %v1431, %v1513
    %v1515 = vpop.f32.mrb[0].mxu0
    %1516 = vmatprep.mubr.bf16.mxu0 0
    %1517 = vmatmul.mubr.bf16.gmra.mrb[0].mxu0 %v1463
    %v1518 = vpop.f32.mrb[0].mxu0
    %v1519 = vadd.f32 %v1431, %v1518
    %v1520 = vpop.f32.mrb[0].mxu0
    %v1521 = vpop.f32.mrb[0].mxu0
    %v1522 = vadd.f32 %v1431, %v1521
    %v1523 = vpop.f32.mrb[0].mxu0
    %1524 = vmatprep.mubr.bf16.mxu0 0
    %1525 = vmatmul.mubr.bf16.gmra.mrb[0].mxu0 %v1466
    %v1526 = vpop.f32.mrb[0].mxu0
    %v1527 = vadd.f32 %v1431, %v1526
    %v1528 = vpop.f32.mrb[0].mxu0
    %v1529 = vpop.f32.mrb[0].mxu0
    %v1530 = vadd.f32 %v1431, %v1529
    %v1531 = vpop.f32.mrb[0].mxu0
    %1532 = vdwg.mxu0
    %vm1533 = vcmask 64512
    %1534 = vst.msk [vmem:[%s4] sm:$0xff] %vm1533, %v1503
    %1535 = vst.msk [vmem:[%s4 + $0x8] sm:$0xff] %vm1533, %v1506
    %1536 = vst.msk [vmem:[%s4 + $0x10] sm:$0xff] %vm1533, %v1511
    %1537 = vst.msk [vmem:[%s4 + $0x18] sm:$0xff] %vm1533, %v1514
    %1538 = vst.msk [vmem:[%s4 + $0x20] sm:$0xff] %vm1533, %v1519
    %1539 = vst.msk [vmem:[%s4 + $0x28] sm:$0xff] %vm1533, %v1522
    %1540 = vst.msk [vmem:[%s4 + $0x30] sm:$0xff] %vm1533, %v1527
    %1541 = vst.msk [vmem:[%s4 + $0x38] sm:$0xff] %vm1533, %v1530
    %v1542 = vsel %vm1533, %v1503, -inf
    %1543 = vmax.xlane.f32.xlu0 %v1542
    %v1544 = vpop.xlane.xlu0 %1543
    %v1545 = vsel %vm1533, %v1506, -inf
    %1546 = vmax.xlane.f32.xlu0 %v1545
    %v1547 = vpop.xlane.xlu0 %1546
    %v1548 = vsel %vm1533, %v1511, -inf
    %1549 = vmax.xlane.f32.xlu0 %v1548
    %v1550 = vpop.xlane.xlu0 %1549
    %v1551 = vsel %vm1533, %v1514, -inf
    %1552 = vmax.xlane.f32.xlu0 %v1551
    %v1553 = vpop.xlane.xlu0 %1552
    %v1554 = vsel %vm1533, %v1519, -inf
    %1555 = vmax.xlane.f32.xlu0 %v1554
    %v1556 = vpop.xlane.xlu0 %1555
    %v1557 = vsel %vm1533, %v1522, -inf
    %1558 = vmax.xlane.f32.xlu0 %v1557
    %v1559 = vpop.xlane.xlu0 %1558
    %v1560 = vsel %vm1533, %v1527, -inf
    %1561 = vmax.xlane.f32.xlu0 %v1560
    %v1562 = vpop.xlane.xlu0 %1561
    %v1563 = vsel %vm1533, %v1530, -inf
    %1564 = vmax.xlane.f32.xlu0 %v1563
    %v1565 = vpop.xlane.xlu0 %1564
    %v1566 = vlaneseq
    %v1567 = vand.u32 %v1566, 127
    %v1568 = vcvt.s32.f32 %v1567
    %vm1569 = vcmp.eq.f32.partialorder %v1503, %v1544
    %vm1570 = vcmp.eq.f32.partialorder %v1506, %v1547
    %vm1571 = vcmp.eq.f32.partialorder %v1511, %v1550
    %vm1572 = vcmp.eq.f32.partialorder %v1514, %v1553
    %vm1573 = vcmp.eq.f32.partialorder %v1519, %v1556
    %vm1574 = vcmp.eq.f32.partialorder %v1522, %v1559
    %vm1575 = vcmp.eq.f32.partialorder %v1527, %v1562
    %vm1576 = vcmp.eq.f32.partialorder %v1530, %v1565
    %v1577 = vsel %vm1569, %v1568, 8.0
    %v1578 = vsel %vm1570, %v1568, 8.0
    %v1579 = vsel %vm1571, %v1568, 8.0
    %v1580 = vsel %vm1572, %v1568, 8.0
    %v1581 = vsel %vm1573, %v1568, 8.0
    %v1582 = vsel %vm1574, %v1568, 8.0
    %v1583 = vsel %vm1575, %v1568, 8.0
    %v1584 = vsel %vm1576, %v1568, 8.0
    %v1585 = vsel %vm1533, %v1577, inf
    %1586 = vmin.xlane.f32.xlu0 %v1585
    %v1587 = vpop.xlane.xlu0 %1586
    %v1588 = vsel %vm1533, %v1578, inf
    %1589 = vmin.xlane.f32.xlu0 %v1588
    %v1590 = vpop.xlane.xlu0 %1589
    %v1591 = vsel %vm1533, %v1579, inf
    %1592 = vmin.xlane.f32.xlu0 %v1591
    %v1593 = vpop.xlane.xlu0 %1592
    %v1594 = vsel %vm1533, %v1580, inf
    %1595 = vmin.xlane.f32.xlu0 %v1594
    %v1596 = vpop.xlane.xlu0 %1595
    %v1597 = vsel %vm1533, %v1581, inf
    %1598 = vmin.xlane.f32.xlu0 %v1597
    %v1599 = vpop.xlane.xlu0 %1598
    %v1600 = vsel %vm1533, %v1582, inf
    %1601 = vmin.xlane.f32.xlu0 %v1600
    %v1602 = vpop.xlane.xlu0 %1601
    %v1603 = vsel %vm1533, %v1583, inf
    %1604 = vmin.xlane.f32.xlu0 %v1603
    %v1605 = vpop.xlane.xlu0 %1604
    %v1606 = vsel %vm1533, %v1584, inf
    %1607 = vmin.xlane.f32.xlu0 %v1606
    %v1608 = vpop.xlane.xlu0 %1607
    %vm1609 = vcmp.eq.f32.partialorder %v1568, %v1587
    %vm1610 = vcmp.eq.f32.partialorder %v1568, %v1590
    %vm1611 = vcmp.eq.f32.partialorder %v1568, %v1593
    %vm1612 = vcmp.eq.f32.partialorder %v1568, %v1596
    %vm1613 = vcmp.eq.f32.partialorder %v1568, %v1599
    %vm1614 = vcmp.eq.f32.partialorder %v1568, %v1602
    %vm1615 = vcmp.eq.f32.partialorder %v1568, %v1605
    %vm1616 = vcmp.eq.f32.partialorder %v1568, %v1608
    %v1617 = vsel %vm1609, 1, 0
    %v1618 = vsel %vm1610, 1, 0
    %v1619 = vsel %vm1611, 1, 0
    %v1620 = vsel %vm1612, 1, 0
    %v1621 = vsel %vm1613, 1, 0
    %v1622 = vsel %vm1614, 1, 0
    %v1623 = vsel %vm1615, 1, 0
    %v1624 = vsel %vm1616, 1, 0
    %v1625 = vcvt.s32.f32 %v1617
    %v1626 = vcvt.s32.f32 %v1618
    %v1627 = vcvt.s32.f32 %v1619
    %v1628 = vcvt.s32.f32 %v1620
    %v1629 = vcvt.s32.f32 %v1621
    %v1630 = vcvt.s32.f32 %v1622
    %v1631 = vcvt.s32.f32 %v1623
    %v1632 = vcvt.s32.f32 %v1624
    %v1633 = vpack.c.bf16 %v1626, %v1625
    %v1634 = vpack.c.bf16 %v1628, %v1627
    %v1635 = vpack.c.bf16 %v1630, %v1629
    %v1636 = vpack.c.bf16 %v1632, %v1631
    %v1637 = vld [vmem:[#allocation4 + $0x180] sm:$0xf]
    %v1639 = vsel %vm1533, %v1633, 0
    %v1642 = vsel %vm1533, %v1634, 0
    %v1645 = vsel %vm1533, %v1635, 0
    %v1648 = vsel %vm1533, %v1636, 0
    %vm1650 = vcmask 1043456
    %v1652 = vsel %vm1650, %v1637, 0
    %1654 = vmatprep.subr.bf16.mxu0 0
    %1655 = vmatpush1.bf16.msra.mxu0 %v1652
    %1656 = vmatprep.subr.bf16.mxu0 0
    %1657 = vmatpush1.bf16.msra.mxu0 0
    %1658 = vmatprep.subr.bf16.mxu0 0
    %1659 = vmatpush1.bf16.msra.mxu0 0
    %1660 = vmatprep.subr.bf16.mxu0 0
    %1661 = vmatpush1.bf16.msra.mxu0 0
    %1662 = vmatprep.subr.bf16.mxu0 0
    %1663 = vmatpush1.bf16.msra.mxu0 0
    %1664 = vmatprep.subr.bf16.mxu0 0
    %1665 = vmatpush1.bf16.msra.mxu0 0
    %1666 = vmatprep.subr.bf16.mxu0 0
    %1667 = vmatpush1.bf16.msra.mxu0 0
    %1668 = vmatprep.subr.bf16.mxu0 0
    %1669 = vmatpush1.bf16.msra.mxu0 0
    %1670 = vmatprep.subr.bf16.mxu0 0
    %1671 = vmatpush1.bf16.msra.mxu0 0
    %1672 = vmatprep.subr.bf16.mxu0 0
    %1673 = vmatpush1.bf16.msra.mxu0 0
    %1674 = vmatprep.subr.bf16.mxu0 0
    %1675 = vmatpush1.bf16.msra.mxu0 0
    %1676 = vmatprep.subr.bf16.mxu0 0
    %1677 = vmatpush1.bf16.msra.mxu0 0
    %1678 = vmatprep.subr.bf16.mxu0 0
    %1679 = vmatpush1.bf16.msra.mxu0 0
    %1680 = vmatprep.subr.bf16.mxu0 0
    %1681 = vmatpush1.bf16.msra.mxu0 0
    %1682 = vmatprep.subr.bf16.mxu0 0
    %1683 = vmatpush1.bf16.msra.mxu0 0
    %1684 = vmatprep.subr.bf16.mxu0 0
    %1685 = vmatpush1.bf16.msra.mxu0 0
    %1686 = vmatprep.mubr.bf16.mxu0 0
    %1687 = vmatmul.mubr.bf16.gmra.mrb[0].mxu0 %v1639
    %v1688 = vpop.f32.mrb[0].mxu0
    %v1689 = vadd.f32 0.0, %v1688
    %v1690 = vpop.f32.mrb[0].mxu0
    %v1691 = vpop.f32.mrb[0].mxu0
    %v1692 = vadd.f32 0.0, %v1691
    %v1693 = vpop.f32.mrb[0].mxu0
    %1694 = vmatprep.mubr.bf16.mxu0 0
    %1695 = vmatmul.mubr.bf16.gmra.mrb[0].mxu0 %v1642
    %v1696 = vpop.f32.mrb[0].mxu0
    %v1697 = vadd.f32 0.0, %v1696
    %v1698 = vpop.f32.mrb[0].mxu0
    %v1699 = vpop.f32.mrb[0].mxu0
    %v1700 = vadd.f32 0.0, %v1699
    %v1701 = vpop.f32.mrb[0].mxu0
    %1702 = vmatprep.mubr.bf16.mxu0 0
    %1703 = vmatmul.mubr.bf16.gmra.mrb[0].mxu0 %v1645
    %v1704 = vpop.f32.mrb[0].mxu0
    %v1705 = vadd.f32 0.0, %v1704
    %v1706 = vpop.f32.mrb[0].mxu0
    %v1707 = vpop.f32.mrb[0].mxu0
    %v1708 = vadd.f32 0.0, %v1707
    %v1709 = vpop.f32.mrb[0].mxu0
    %1710 = vmatprep.mubr.bf16.mxu0 0
    %1711 = vmatmul.mubr.bf16.gmra.mrb[0].mxu0 %v1648
    %v1712 = vpop.f32.mrb[0].mxu0
    %v1713 = vadd.f32 0.0, %v1712
    %v1714 = vpop.f32.mrb[0].mxu0
    %v1715 = vpop.f32.mrb[0].mxu0
    %v1716 = vadd.f32 0.0, %v1715
    %v1717 = vpop.f32.mrb[0].mxu0
    %1718 = vdwg.mxu0
    %v1719 = vpack.c.bf16 %v1692, %v1689
    %v1720 = vpack.c.bf16 %v1700, %v1697
    %v1721 = vpack.c.bf16 %v1708, %v1705
    %v1722 = vpack.c.bf16 %v1716, %v1713
    %v1723 = vld [vmem:[%s1] sm:$0xf]
    %v1724 = vld [vmem:[%s1 + $0x4] sm:$0xf]
    %v1725 = vld [vmem:[%s1 + $0x8] sm:$0xf]
    %v1726 = vld [vmem:[%s1 + $0xc] sm:$0xf]
    %v1727 = vld [vmem:[%s1 + $0x10] sm:$0xf]
    %v1728 = vld [vmem:[%s1 + $0x14] sm:$0xf]
    %v1729 = vld [vmem:[%s1 + $0x18] sm:$0xf]
    %v1730 = vld [vmem:[%s1 + $0x1c] sm:$0xf]
    %v1739 = vunpack.c.l.b16 %v1723
    %v1740 = vunpack.c.l.b16 %v1724
    %v1741 = vunpack.c.l.b16 %v1725
    %v1742 = vunpack.c.l.b16 %v1726
    %v1743 = vunpack.c.l.b16 %v1727
    %v1744 = vunpack.c.l.b16 %v1728
    %v1745 = vunpack.c.l.b16 %v1729
    %v1746 = vunpack.c.l.b16 %v1730
    %v1747 = vpack.c.b16 %v1740, %v1739
    %v1748 = vpack.c.b16 %v1742, %v1741
    %v1749 = vpack.c.b16 %v1744, %v1743
    %v1750 = vpack.c.b16 %v1746, %v1745
    %v1751 = vld [vmem:[#allocation4 + $0x190] sm:$0xff]
    %v1752 = vld [vmem:[#allocation4 + $0x198] sm:$0xff]
    %v1753 = vld [vmem:[#allocation4 + $0x1a0] sm:$0xff]
    %v1754 = vld [vmem:[#allocation4 + $0x1a8] sm:$0xff]
    %v1755 = vld [vmem:[#allocation4 + $0x1b0] sm:$0xff]
    %v1756 = vld [vmem:[#allocation4 + $0x1b8] sm:$0xff]
    %v1757 = vld [vmem:[#allocation4 + $0x1c0] sm:$0xff]
    %v1758 = vld [vmem:[#allocation4 + $0x1c8] sm:$0xff]
    %s1759 = scalar_lea.vmem %s3, 64
    %v1760 = vld [vmem:[%s1759] ss:$8 sm:$0xf]
    %v1762 = vlaneseq
    %v1763 = vshrl.u32 %v1762, 7
    %v1764 = vsub.s32 0, %v1763
    %v1765 = vrot.slane %v1760, %v1764
    %v1766 = vlaneseq
    %v1767 = vshrl.u32 %v1766, 7
    %v1768 = vsub.s32 1, %v1767
    %v1769 = vrot.slane %v1760, %v1768
    %v1770 = vlaneseq
    %v1771 = vshrl.u32 %v1770, 7
    %v1772 = vsub.s32 2, %v1771
    %v1773 = vrot.slane %v1760, %v1772
    %v1774 = vlaneseq
    %v1775 = vshrl.u32 %v1774, 7
    %v1776 = vsub.s32 3, %v1775
    %v1777 = vrot.slane %v1760, %v1776
    %v1790 = vunpack.c.l.b16 %v1751
    %v1791 = vunpack.c.h.b16 %v1751
    %v1792 = vunpack.c.l.b16 %v1752
    %v1793 = vunpack.c.h.b16 %v1752
    %v1794 = vunpack.c.l.b16 %v1753
    %v1795 = vunpack.c.h.b16 %v1753
    %v1796 = vunpack.c.l.b16 %v1754
    %v1797 = vunpack.c.h.b16 %v1754
    %v1798 = vunpack.c.l.b16 %v1755
    %v1799 = vunpack.c.h.b16 %v1755
    %v1800 = vunpack.c.l.b16 %v1756
    %v1801 = vunpack.c.h.b16 %v1756
    %v1802 = vunpack.c.l.b16 %v1757
    %v1803 = vunpack.c.h.b16 %v1757
    %v1804 = vunpack.c.l.b16 %v1758
    %v1805 = vunpack.c.h.b16 %v1758
    %v1806 = vpack.c.b16 %v1794, %v1790
    %v1807 = vpack.c.b16 %v1795, %v1791
    %v1808 = vpack.c.b16 %v1796, %v1792
    %v1809 = vpack.c.b16 %v1797, %v1793
    %v1810 = vpack.c.b16 %v1802, %v1798
    %v1811 = vpack.c.b16 %v1803, %v1799
    %v1812 = vpack.c.b16 %v1804, %v1800
    %v1813 = vpack.c.b16 %v1805, %v1801
    %v1823 = vsel %vm1410, %v1747, 0
    %v1826 = vsel %vm1410, %v1748, 0
    %v1829 = vsel %vm1410, %v1749, 0
    %v1832 = vsel %vm1410, %v1750, 0
    %v1835 = vsel %vm1410, %v1719, 0
    %v1838 = vsel %vm1410, %v1720, 0
    %v1841 = vsel %vm1410, %v1721, 0
    %v1844 = vsel %vm1410, %v1722, 0
    %1846 = vmatprep.subr.bf16.mxu0 %v1807
    %1847 = vmatpush1.bf16.msra.mxu0 %v1806
    %1848 = vmatprep.subr.bf16.mxu0 %v1811
    %1849 = vmatpush1.bf16.msra.mxu0 %v1810
    %1850 = vmatprep.subr.bf16.mxu0 0
    %1851 = vmatpush1.bf16.msra.mxu0 0
    %1852 = vmatprep.subr.bf16.mxu0 0
    %1853 = vmatpush1.bf16.msra.mxu0 0
    %1854 = vmatprep.subr.bf16.mxu0 0
    %1855 = vmatpush1.bf16.msra.mxu0 0
    %1856 = vmatprep.subr.bf16.mxu0 0
    %1857 = vmatpush1.bf16.msra.mxu0 0
    %1858 = vmatprep.subr.bf16.mxu0 0
    %1859 = vmatpush1.bf16.msra.mxu0 0
    %1860 = vmatprep.subr.bf16.mxu0 0
    %1861 = vmatpush1.bf16.msra.mxu0 0
    %1862 = vmatprep.subr.bf16.mxu0 0
    %1863 = vmatpush1.bf16.msra.mxu0 0
    %1864 = vmatprep.subr.bf16.mxu0 0
    %1865 = vmatpush1.bf16.msra.mxu0 0
    %1866 = vmatprep.subr.bf16.mxu0 0
    %1867 = vmatpush1.bf16.msra.mxu0 0
    %1868 = vmatprep.subr.bf16.mxu0 0
    %1869 = vmatpush1.bf16.msra.mxu0 0
    %1870 = vmatprep.subr.bf16.mxu0 0
    %1871 = vmatpush1.bf16.msra.mxu0 0
    %1872 = vmatprep.subr.bf16.mxu0 0
    %1873 = vmatpush1.bf16.msra.mxu0 0
    %1874 = vmatprep.subr.bf16.mxu0 0
    %1875 = vmatpush1.bf16.msra.mxu0 0
    %1876 = vmatprep.subr.bf16.mxu0 0
    %1877 = vmatpush1.bf16.msra.mxu0 0
    %1878 = vmatprep.mubr.bf16.mxu0 0
    %1879 = vmatmul.mubr.bf16.gmra.mrb[0].mxu0 %v1823
    %v1880 = vpop.f32.mrb[0].mxu0
    %v1881 = vadd.f32 %v1765, %v1880
    %v1882 = vpop.f32.mrb[0].mxu0
    %v1883 = vadd.f32 %v1769, %v1882
    %v1884 = vpop.f32.mrb[0].mxu0
    %v1885 = vadd.f32 %v1765, %v1884
    %v1886 = vpop.f32.mrb[0].mxu0
    %v1887 = vadd.f32 %v1769, %v1886
    %1888 = vmatprep.mubr.bf16.mxu0 0
    %1889 = vmatmul.mubr.bf16.gmra.mrb[0].mxu0 %v1826
    %v1890 = vpop.f32.mrb[0].mxu0
    %v1891 = vadd.f32 %v1765, %v1890
    %v1892 = vpop.f32.mrb[0].mxu0
    %v1893 = vadd.f32 %v1769, %v1892
    %v1894 = vpop.f32.mrb[0].mxu0
    %v1895 = vadd.f32 %v1765, %v1894
    %v1896 = vpop.f32.mrb[0].mxu0
    %v1897 = vadd.f32 %v1769, %v1896
    %1898 = vmatprep.mubr.bf16.mxu0 0
    %1899 = vmatmul.mubr.bf16.gmra.mrb[0].mxu0 %v1829
    %v1900 = vpop.f32.mrb[0].mxu0
    %v1901 = vadd.f32 %v1765, %v1900
    %v1902 = vpop.f32.mrb[0].mxu0
    %v1903 = vadd.f32 %v1769, %v1902
    %v1904 = vpop.f32.mrb[0].mxu0
    %v1905 = vadd.f32 %v1765, %v1904
    %v1906 = vpop.f32.mrb[0].mxu0
    %v1907 = vadd.f32 %v1769, %v1906
    %1908 = vmatprep.mubr.bf16.mxu0 0
    %1909 = vmatmul.mubr.bf16.gmra.mrb[0].mxu0 %v1832
    %v1910 = vpop.f32.mrb[0].mxu0
    %v1911 = vadd.f32 %v1765, %v1910
    %v1912 = vpop.f32.mrb[0].mxu0
    %v1913 = vadd.f32 %v1769, %v1912
    %v1914 = vpop.f32.mrb[0].mxu0
    %v1915 = vadd.f32 %v1765, %v1914
    %v1916 = vpop.f32.mrb[0].mxu0
    %v1917 = vadd.f32 %v1769, %v1916
    %1918 = vmatprep.mubr.bf16.mxu0 0
    %1919 = vmatmul.mubr.bf16.gmra.mrb[0].mxu0 %v1835
    %v1920 = vpop.f32.mrb[0].mxu0
    %v1921 = vadd.f32 %v1765, %v1920
    %v1922 = vpop.f32.mrb[0].mxu0
    %v1923 = vadd.f32 %v1769, %v1922
    %v1924 = vpop.f32.mrb[0].mxu0
    %v1925 = vadd.f32 %v1765, %v1924
    %v1926 = vpop.f32.mrb[0].mxu0
    %v1927 = vadd.f32 %v1769, %v1926
    %1928 = vmatprep.mubr.bf16.mxu0 0
    %1929 = vmatmul.mubr.bf16.gmra.mrb[0].mxu0 %v1838
    %v1930 = vpop.f32.mrb[0].mxu0
    %v1931 = vadd.f32 %v1765, %v1930
    %v1932 = vpop.f32.mrb[0].mxu0
    %v1933 = vadd.f32 %v1769, %v1932
    %v1934 = vpop.f32.mrb[0].mxu0
    %v1935 = vadd.f32 %v1765, %v1934
    %v1936 = vpop.f32.mrb[0].mxu0
    %v1937 = vadd.f32 %v1769, %v1936
    %1938 = vmatprep.mubr.bf16.mxu0 0
    %1939 = vmatmul.mubr.bf16.gmra.mrb[0].mxu0 %v1841
    %v1940 = vpop.f32.mrb[0].mxu0
    %v1941 = vadd.f32 %v1765, %v1940
    %v1942 = vpop.f32.mrb[0].mxu0
    %v1943 = vadd.f32 %v1769, %v1942
    %v1944 = vpop.f32.mrb[0].mxu0
    %v1945 = vadd.f32 %v1765, %v1944
    %v1946 = vpop.f32.mrb[0].mxu0
    %v1947 = vadd.f32 %v1769, %v1946
    %1948 = vmatprep.mubr.bf16.mxu0 0
    %1949 = vmatmul.mubr.bf16.gmra.mrb[0].mxu0 %v1844
    %v1950 = vpop.f32.mrb[0].mxu0
    %v1951 = vadd.f32 %v1765, %v1950
    %v1952 = vpop.f32.mrb[0].mxu0
    %v1953 = vadd.f32 %v1769, %v1952
    %v1954 = vpop.f32.mrb[0].mxu0
    %v1955 = vadd.f32 %v1765, %v1954
    %v1956 = vpop.f32.mrb[0].mxu0
    %v1957 = vadd.f32 %v1769, %v1956
    %1958 = vdwg.mxu0
    %1959 = vmatprep.subr.bf16.mxu0 %v1809
    %1960 = vmatpush1.bf16.msra.mxu0 %v1808
    %1961 = vmatprep.subr.bf16.mxu0 %v1813
    %1962 = vmatpush1.bf16.msra.mxu0 %v1812
    %1963 = vmatprep.subr.bf16.mxu0 0
    %1964 = vmatpush1.bf16.msra.mxu0 0
    %1965 = vmatprep.subr.bf16.mxu0 0
    %1966 = vmatpush1.bf16.msra.mxu0 0
    %1967 = vmatprep.subr.bf16.mxu0 0
    %1968 = vmatpush1.bf16.msra.mxu0 0
    %1969 = vmatprep.subr.bf16.mxu0 0
    %1970 = vmatpush1.bf16.msra.mxu0 0
    %1971 = vmatprep.subr.bf16.mxu0 0
    %1972 = vmatpush1.bf16.msra.mxu0 0
    %1973 = vmatprep.subr.bf16.mxu0 0
    %1974 = vmatpush1.bf16.msra.mxu0 0
    %1975 = vmatprep.subr.bf16.mxu0 0
    %1976 = vmatpush1.bf16.msra.mxu0 0
    %1977 = vmatprep.subr.bf16.mxu0 0
    %1978 = vmatpush1.bf16.msra.mxu0 0
    %1979 = vmatprep.subr.bf16.mxu0 0
    %1980 = vmatpush1.bf16.msra.mxu0 0
    %1981 = vmatprep.subr.bf16.mxu0 0
    %1982 = vmatpush1.bf16.msra.mxu0 0
    %1983 = vmatprep.subr.bf16.mxu0 0
    %1984 = vmatpush1.bf16.msra.mxu0 0
    %1985 = vmatprep.subr.bf16.mxu0 0
    %1986 = vmatpush1.bf16.msra.mxu0 0
    %1987 = vmatprep.subr.bf16.mxu0 0
    %1988 = vmatpush1.bf16.msra.mxu0 0
    %1989 = vmatprep.subr.bf16.mxu0 0
    %1990 = vmatpush1.bf16.msra.mxu0 0
    %1991 = vmatprep.mubr.bf16.mxu0 0
    %1992 = vmatmul.mubr.bf16.gmra.mrb[0].mxu0 %v1823
    %v1993 = vpop.f32.mrb[0].mxu0
    %v1994 = vadd.f32 %v1773, %v1993
    %v1995 = vpop.f32.mrb[0].mxu0
    %v1996 = vadd.f32 %v1777, %v1995
    %v1997 = vpop.f32.mrb[0].mxu0
    %v1998 = vadd.f32 %v1773, %v1997
    %v1999 = vpop.f32.mrb[0].mxu0
    %v2000 = vadd.f32 %v1777, %v1999
    %2001 = vmatprep.mubr.bf16.mxu0 0
    %2002 = vmatmul.mubr.bf16.gmra.mrb[0].mxu0 %v1826
    %v2003 = vpop.f32.mrb[0].mxu0
    %v2004 = vadd.f32 %v1773, %v2003
    %v2005 = vpop.f32.mrb[0].mxu0
    %v2006 = vadd.f32 %v1777, %v2005
    %v2007 = vpop.f32.mrb[0].mxu0
    %v2008 = vadd.f32 %v1773, %v2007
    %v2009 = vpop.f32.mrb[0].mxu0
    %v2010 = vadd.f32 %v1777, %v2009
    %2011 = vmatprep.mubr.bf16.mxu0 0
    %2012 = vmatmul.mubr.bf16.gmra.mrb[0].mxu0 %v1829
    %v2013 = vpop.f32.mrb[0].mxu0
    %v2014 = vadd.f32 %v1773, %v2013
    %v2015 = vpop.f32.mrb[0].mxu0
    %v2016 = vadd.f32 %v1777, %v2015
    %v2017 = vpop.f32.mrb[0].mxu0
    %v2018 = vadd.f32 %v1773, %v2017
    %v2019 = vpop.f32.mrb[0].mxu0
    %v2020 = vadd.f32 %v1777, %v2019
    %2021 = vmatprep.mubr.bf16.mxu0 0
    %2022 = vmatmul.mubr.bf16.gmra.mrb[0].mxu0 %v1832
    %v2023 = vpop.f32.mrb[0].mxu0
    %v2024 = vadd.f32 %v1773, %v2023
    %v2025 = vpop.f32.mrb[0].mxu0
    %v2026 = vadd.f32 %v1777, %v2025
    %v2027 = vpop.f32.mrb[0].mxu0
    %v2028 = vadd.f32 %v1773, %v2027
    %v2029 = vpop.f32.mrb[0].mxu0
    %v2030 = vadd.f32 %v1777, %v2029
    %2031 = vmatprep.mubr.bf16.mxu0 0
    %2032 = vmatmul.mubr.bf16.gmra.mrb[0].mxu0 %v1835
    %v2033 = vpop.f32.mrb[0].mxu0
    %v2034 = vadd.f32 %v1773, %v2033
    %v2035 = vpop.f32.mrb[0].mxu0
    %v2036 = vadd.f32 %v1777, %v2035
    %v2037 = vpop.f32.mrb[0].mxu0
    %v2038 = vadd.f32 %v1773, %v2037
    %v2039 = vpop.f32.mrb[0].mxu0
    %v2040 = vadd.f32 %v1777, %v2039
    %2041 = vmatprep.mubr.bf16.mxu0 0
    %2042 = vmatmul.mubr.bf16.gmra.mrb[0].mxu0 %v1838
    %v2043 = vpop.f32.mrb[0].mxu0
    %v2044 = vadd.f32 %v1773, %v2043
    %v2045 = vpop.f32.mrb[0].mxu0
    %v2046 = vadd.f32 %v1777, %v2045
    %v2047 = vpop.f32.mrb[0].mxu0
    %v2048 = vadd.f32 %v1773, %v2047
    %v2049 = vpop.f32.mrb[0].mxu0
    %v2050 = vadd.f32 %v1777, %v2049
    %2051 = vmatprep.mubr.bf16.mxu0 0
    %2052 = vmatmul.mubr.bf16.gmra.mrb[0].mxu0 %v1841
    %v2053 = vpop.f32.mrb[0].mxu0
    %v2054 = vadd.f32 %v1773, %v2053
    %v2055 = vpop.f32.mrb[0].mxu0
    %v2056 = vadd.f32 %v1777, %v2055
    %v2057 = vpop.f32.mrb[0].mxu0
    %v2058 = vadd.f32 %v1773, %v2057
    %v2059 = vpop.f32.mrb[0].mxu0
    %v2060 = vadd.f32 %v1777, %v2059
    %2061 = vmatprep.mubr.bf16.mxu0 0
    %2062 = vmatmul.mubr.bf16.gmra.mrb[0].mxu0 %v1844
    %v2063 = vpop.f32.mrb[0].mxu0
    %v2064 = vadd.f32 %v1773, %v2063
    %v2065 = vpop.f32.mrb[0].mxu0
    %v2066 = vadd.f32 %v1777, %v2065
    %v2067 = vpop.f32.mrb[0].mxu0
    %v2068 = vadd.f32 %v1773, %v2067
    %v2069 = vpop.f32.mrb[0].mxu0
    %v2070 = vadd.f32 %v1777, %v2069
    %2071 = vdwg.mxu0
    %2072 = vst [vmem:[#allocation3] sm:$0xff] %v1881
    %2073 = vst [vmem:[#allocation3 + $0x8] sm:$0xff] %v1883
    %2074 = vst [vmem:[#allocation3 + $0x10] sm:$0xff] %v1994
    %2075 = vst [vmem:[#allocation3 + $0x18] sm:$0xff] %v1996
    %2076 = vst [vmem:[#allocation3 + $0x20] sm:$0xff] %v1885
    %2077 = vst [vmem:[#allocation3 + $0x28] sm:$0xff] %v1887
    %2078 = vst [vmem:[#allocation3 + $0x30] sm:$0xff] %v1998
    %2079 = vst [vmem:[#allocation3 + $0x38] sm:$0xff] %v2000
    %2080 = vst [vmem:[#allocation3 + $0x40] sm:$0xff] %v1891
    %2081 = vst [vmem:[#allocation3 + $0x48] sm:$0xff] %v1893
    %2082 = vst [vmem:[#allocation3 + $0x50] sm:$0xff] %v2004
    %2083 = vst [vmem:[#allocation3 + $0x58] sm:$0xff] %v2006
    %2084 = vst [vmem:[#allocation3 + $0x60] sm:$0xff] %v1895
    %2085 = vst [vmem:[#allocation3 + $0x68] sm:$0xff] %v1897
    %2086 = vst [vmem:[#allocation3 + $0x70] sm:$0xff] %v2008
    %2087 = vst [vmem:[#allocation3 + $0x78] sm:$0xff] %v2010
    %2088 = vst [vmem:[#allocation3 + $0x80] sm:$0xff] %v1901
    %2089 = vst [vmem:[#allocation3 + $0x88] sm:$0xff] %v1903
    %2090 = vst [vmem:[#allocation3 + $0x90] sm:$0xff] %v2014
    %2091 = vst [vmem:[#allocation3 + $0x98] sm:$0xff] %v2016
    %2092 = vst [vmem:[#allocation3 + $0xa0] sm:$0xff] %v1905
    %2093 = vst [vmem:[#allocation3 + $0xa8] sm:$0xff] %v1907
    %2094 = vst [vmem:[#allocation3 + $0xb0] sm:$0xff] %v2018
    %2095 = vst [vmem:[#allocation3 + $0xb8] sm:$0xff] %v2020
    %2096 = vst [vmem:[#allocation3 + $0xc0] sm:$0xff] %v1911
    %2097 = vst [vmem:[#allocation3 + $0xc8] sm:$0xff] %v1913
    %2098 = vst [vmem:[#allocation3 + $0xd0] sm:$0xff] %v2024
    %2099 = vst [vmem:[#allocation3 + $0xd8] sm:$0xff] %v2026
    %2100 = vst [vmem:[#allocation3 + $0xe0] sm:$0xff] %v1915
    %2101 = vst [vmem:[#allocation3 + $0xe8] sm:$0xff] %v1917
    %2102 = vst [vmem:[#allocation3 + $0xf0] sm:$0xff] %v2028
    %2103 = vst [vmem:[#allocation3 + $0xf8] sm:$0xff] %v2030
    %2104 = vst [vmem:[#allocation3 + $0x100] sm:$0xff] %v1921
    %2105 = vst [vmem:[#allocation3 + $0x108] sm:$0xff] %v1923
    %2106 = vst [vmem:[#allocation3 + $0x110] sm:$0xff] %v2034
    %2107 = vst [vmem:[#allocation3 + $0x118] sm:$0xff] %v2036
    %2108 = vst [vmem:[#allocation3 + $0x120] sm:$0xff] %v1925
    %2109 = vst [vmem:[#allocation3 + $0x128] sm:$0xff] %v1927
    %2110 = vst [vmem:[#allocation3 + $0x130] sm:$0xff] %v2038
    %2111 = vst [vmem:[#allocation3 + $0x138] sm:$0xff] %v2040
    %2112 = vst [vmem:[#allocation3 + $0x140] sm:$0xff] %v1931
    %2113 = vst [vmem:[#allocation3 + $0x148] sm:$0xff] %v1933
    %2114 = vst [vmem:[#allocation3 + $0x150] sm:$0xff] %v2044
    %2115 = vst [vmem:[#allocation3 + $0x158] sm:$0xff] %v2046
    %2116 = vst [vmem:[#allocation3 + $0x160] sm:$0xff] %v1935
    %2117 = vst [vmem:[#allocation3 + $0x168] sm:$0xff] %v1937
    %2118 = vst [vmem:[#allocation3 + $0x170] sm:$0xff] %v2048
    %2119 = vst [vmem:[#allocation3 + $0x178] sm:$0xff] %v2050
    %2120 = vst [vmem:[#allocation3 + $0x180] sm:$0xff] %v1941
    %2121 = vst [vmem:[#allocation3 + $0x188] sm:$0xff] %v1943
    %2122 = vst [vmem:[#allocation3 + $0x190] sm:$0xff] %v2054
    %2123 = vst [vmem:[#allocation3 + $0x198] sm:$0xff] %v2056
    %2124 = vst [vmem:[#allocation3 + $0x1a0] sm:$0xff] %v1945
    %2125 = vst [vmem:[#allocation3 + $0x1a8] sm:$0xff] %v1947
    %2126 = vst [vmem:[#allocation3 + $0x1b0] sm:$0xff] %v2058
    %2127 = vst [vmem:[#allocation3 + $0x1b8] sm:$0xff] %v2060
    %2128 = vst [vmem:[#allocation3 + $0x1c0] sm:$0xff] %v1951
    %2129 = vst [vmem:[#allocation3 + $0x1c8] sm:$0xff] %v1953
    %2130 = vst [vmem:[#allocation3 + $0x1d0] sm:$0xff] %v2064
    %2131 = vst [vmem:[#allocation3 + $0x1d8] sm:$0xff] %v2066
    %2132 = vst [vmem:[#allocation3 + $0x1e0] sm:$0xff] %v1955
    %2133 = vst [vmem:[#allocation3 + $0x1e8] sm:$0xff] %v1957
    %2134 = vst [vmem:[#allocation3 + $0x1f0] sm:$0xff] %v2068
    %2135 = vst [vmem:[#allocation3 + $0x1f8] sm:$0xff] %v2070
    %v2136 = vld [vmem:[#allocation4 + $0x1d0] sm:$0xff]
    %v2137 = vld [vmem:[#allocation4 + $0x1d8] sm:$0xff]
    %v2138 = vld [vmem:[#allocation4 + $0x1e0] sm:$0xff]
    %v2139 = vld [vmem:[#allocation4 + $0x1e8] sm:$0xff]
    %v2140 = vld [vmem:[#allocation4 + $0x1f0] sm:$0xff]
    %v2141 = vld [vmem:[#allocation4 + $0x1f8] sm:$0xff]
    %v2142 = vld [vmem:[#allocation4 + $0x200] sm:$0xff]
    %v2143 = vld [vmem:[#allocation4 + $0x208] sm:$0xff]
    %v2144 = vld [vmem:[#allocation4 + $0x210] sm:$0xff]
    %v2145 = vld [vmem:[#allocation4 + $0x218] sm:$0xff]
    %v2146 = vld [vmem:[#allocation4 + $0x220] sm:$0xff]
    %v2147 = vld [vmem:[#allocation4 + $0x228] sm:$0xff]
    %v2148 = vld [vmem:[#allocation4 + $0x230] sm:$0xff]
    %v2149 = vld [vmem:[#allocation4 + $0x238] sm:$0xff]
    %v2150 = vld [vmem:[#allocation4 + $0x240] sm:$0xff]
    %v2151 = vld [vmem:[#allocation4 + $0x248] sm:$0xff]
    %v2152 = vld [vmem:[#allocation4 + $0x250] sm:$0xff]
    %v2153 = vld [vmem:[#allocation4 + $0x258] sm:$0xff]
    %v2154 = vld [vmem:[#allocation4 + $0x260] sm:$0xff]
    %v2155 = vld [vmem:[#allocation4 + $0x268] sm:$0xff]
    %v2156 = vld [vmem:[#allocation4 + $0x270] sm:$0xff]
    %v2157 = vld [vmem:[#allocation4 + $0x278] sm:$0xff]
    %v2158 = vld [vmem:[#allocation4 + $0x280] sm:$0xff]
    %v2159 = vld [vmem:[#allocation4 + $0x288] sm:$0xff]
    %v2160 = vld [vmem:[#allocation3] sm:$0xff]
    %v2161 = vld [vmem:[#allocation3 + $0x8] sm:$0xff]
    %v2162 = vld [vmem:[#allocation3 + $0x10] sm:$0xff]
    %v2163 = vld [vmem:[#allocation3 + $0x18] sm:$0xff]
    %v2188 = vunpack.c.l.b16 %v2136
    %v2189 = vunpack.c.h.b16 %v2136
    %v2190 = vunpack.c.l.b16 %v2137
    %v2191 = vunpack.c.h.b16 %v2137
    %v2192 = vunpack.c.l.b16 %v2138
    %v2193 = vunpack.c.h.b16 %v2138
    %v2194 = vunpack.c.l.b16 %v2139
    %v2195 = vunpack.c.h.b16 %v2139
    %v2196 = vunpack.c.l.b16 %v2140
    %v2197 = vunpack.c.h.b16 %v2140
    %v2198 = vunpack.c.l.b16 %v2141
    %v2199 = vunpack.c.h.b16 %v2141
    %v2200 = vunpack.c.l.b16 %v2142
    %v2201 = vunpack.c.h.b16 %v2142
    %v2202 = vunpack.c.l.b16 %v2143
    %v2203 = vunpack.c.h.b16 %v2143
    %v2204 = vunpack.c.l.b16 %v2144
    %v2205 = vunpack.c.h.b16 %v2144
    %v2206 = vunpack.c.l.b16 %v2145
    %v2207 = vunpack.c.h.b16 %v2145
    %v2208 = vunpack.c.l.b16 %v2146
    %v2209 = vunpack.c.h.b16 %v2146
    %v2210 = vunpack.c.l.b16 %v2147
    %v2211 = vunpack.c.h.b16 %v2147
    %v2212 = vunpack.c.l.b16 %v2148
    %v2213 = vunpack.c.h.b16 %v2148
    %v2214 = vunpack.c.l.b16 %v2149
    %v2215 = vunpack.c.h.b16 %v2149
    %v2216 = vunpack.c.l.b16 %v2150
    %v2217 = vunpack.c.h.b16 %v2150
    %v2218 = vunpack.c.l.b16 %v2151
    %v2219 = vunpack.c.h.b16 %v2151
    %v2220 = vunpack.c.l.b16 %v2152
    %v2221 = vunpack.c.h.b16 %v2152
    %v2222 = vunpack.c.l.b16 %v2153
    %v2223 = vunpack.c.h.b16 %v2153
    %v2224 = vunpack.c.l.b16 %v2154
    %v2225 = vunpack.c.h.b16 %v2154
    %v2226 = vunpack.c.l.b16 %v2155
    %v2227 = vunpack.c.h.b16 %v2155
    %v2228 = vunpack.c.l.b16 %v2156
    %v2229 = vunpack.c.h.b16 %v2156
    %v2230 = vunpack.c.l.b16 %v2157
    %v2231 = vunpack.c.h.b16 %v2157
    %v2232 = vunpack.c.l.b16 %v2158
    %v2233 = vunpack.c.h.b16 %v2158
    %v2234 = vunpack.c.l.b16 %v2159
    %v2235 = vunpack.c.h.b16 %v2159
    %v2236 = vpack.c.b16 %v2192, %v2188
    %v2237 = vpack.c.b16 %v2193, %v2189
    %v2238 = vpack.c.b16 %v2194, %v2190
    %v2239 = vpack.c.b16 %v2195, %v2191
    %v2240 = vpack.c.b16 %v2200, %v2196
    %v2241 = vpack.c.b16 %v2201, %v2197
    %v2242 = vpack.c.b16 %v2202, %v2198
    %v2243 = vpack.c.b16 %v2203, %v2199
    %v2244 = vpack.c.b16 %v2208, %v2204
    %v2245 = vpack.c.b16 %v2209, %v2205
    %v2246 = vpack.c.b16 %v2210, %v2206
    %v2247 = vpack.c.b16 %v2211, %v2207
    %v2248 = vpack.c.b16 %v2216, %v2212
    %v2249 = vpack.c.b16 %v2217, %v2213
    %v2250 = vpack.c.b16 %v2218, %v2214
    %v2251 = vpack.c.b16 %v2219, %v2215
    %v2252 = vpack.c.b16 %v2224, %v2220
    %v2253 = vpack.c.b16 %v2225, %v2221
    %v2254 = vpack.c.b16 %v2226, %v2222
    %v2255 = vpack.c.b16 %v2227, %v2223
    %v2256 = vpack.c.b16 %v2232, %v2228
    %v2257 = vpack.c.b16 %v2233, %v2229
    %v2258 = vpack.c.b16 %v2234, %v2230
    %v2259 = vpack.c.b16 %v2235, %v2231
    %vm2284 = vcmask 785408
    %v2285 = vsel %vm2284, 0, 0
    %2287 = vmatprep.subr.bf16.mxu0 %v2237
    %2288 = vmatpush1.bf16.msra.mxu0 %v2236
    %2289 = vmatprep.subr.bf16.mxu0 %v2241
    %2290 = vmatpush1.bf16.msra.mxu0 %v2240
    %2291 = vmatprep.subr.bf16.mxu0 %v2245
    %2292 = vmatpush1.bf16.msra.mxu0 %v2244
    %2293 = vmatprep.subr.bf16.mxu0 %v2249
    %2294 = vmatpush1.bf16.msra.mxu0 %v2248
    %2295 = vmatprep.subr.bf16.mxu0 %v2253
    %2296 = vmatpush1.bf16.msra.mxu0 %v2252
    %2297 = vmatprep.subr.bf16.mxu0 %v2257
    %2298 = vmatpush1.bf16.msra.mxu0 %v2256
    %2299 = vmatprep.subr.bf16.mxu0 0
    %2300 = vmatpush1.bf16.msra.mxu0 0
    %2301 = vmatprep.subr.bf16.mxu0 0
    %2302 = vmatpush1.bf16.msra.mxu0 0
    %2303 = vmatprep.subr.bf16.mxu0 0
    %2304 = vmatpush1.bf16.msra.mxu0 0
    %2305 = vmatprep.subr.bf16.mxu0 0
    %2306 = vmatpush1.bf16.msra.mxu0 0
    %2307 = vmatprep.subr.bf16.mxu0 0
    %2308 = vmatpush1.bf16.msra.mxu0 0
    %2309 = vmatprep.subr.bf16.mxu0 0
    %2310 = vmatpush1.bf16.msra.mxu0 0
    %2311 = vmatprep.subr.bf16.mxu0 0
    %2312 = vmatpush1.bf16.msra.mxu0 0
    %2313 = vmatprep.subr.bf16.mxu0 0
    %2314 = vmatpush1.bf16.msra.mxu0 0
    %2315 = vmatprep.subr.bf16.mxu0 0
    %2316 = vmatpush1.bf16.msra.mxu0 0
    %2317 = vmatprep.subr.bf16.mxu0 0
    %2318 = vmatpush1.bf16.msra.mxu0 0
    %2319 = vmatprep.mubr.bf16.mxu0 0
    %2320 = vmatmul.mubr.bf16.gmra.mrb[0].mxu0 %v2285
    %v2321 = vpop.f32.mrb[0].mxu0
    %v2322 = vadd.f32 0.0, %v2321
    %v2323 = vpop.f32.mrb[0].mxu0
    %v2324 = vadd.f32 0.0, %v2323
    %v2325 = vpop.f32.mrb[0].mxu0
    %v2326 = vpop.f32.mrb[0].mxu0
    %2327 = vdwg.mxu0
    %2328 = vmatprep.subr.bf16.mxu0 %v2239
    %2329 = vmatpush1.bf16.msra.mxu0 %v2238
    %2330 = vmatprep.subr.bf16.mxu0 %v2243
    %2331 = vmatpush1.bf16.msra.mxu0 %v2242
    %2332 = vmatprep.subr.bf16.mxu0 %v2247
    %2333 = vmatpush1.bf16.msra.mxu0 %v2246
    %2334 = vmatprep.subr.bf16.mxu0 %v2251
    %2335 = vmatpush1.bf16.msra.mxu0 %v2250
    %2336 = vmatprep.subr.bf16.mxu0 %v2255
    %2337 = vmatpush1.bf16.msra.mxu0 %v2254
    %2338 = vmatprep.subr.bf16.mxu0 %v2259
    %2339 = vmatpush1.bf16.msra.mxu0 %v2258
    %2340 = vmatprep.subr.bf16.mxu0 0
    %2341 = vmatpush1.bf16.msra.mxu0 0
    %2342 = vmatprep.subr.bf16.mxu0 0
    %2343 = vmatpush1.bf16.msra.mxu0 0
    %2344 = vmatprep.subr.bf16.mxu0 0
    %2345 = vmatpush1.bf16.msra.mxu0 0
    %2346 = vmatprep.subr.bf16.mxu0 0
    %2347 = vmatpush1.bf16.msra.mxu0 0
    %2348 = vmatprep.subr.bf16.mxu0 0
    %2349 = vmatpush1.bf16.msra.mxu0 0
    %2350 = vmatprep.subr.bf16.mxu0 0
    %2351 = vmatpush1.bf16.msra.mxu0 0
    %2352 = vmatprep.subr.bf16.mxu0 0
    %2353 = vmatpush1.bf16.msra.mxu0 0
    %2354 = vmatprep.subr.bf16.mxu0 0
    %2355 = vmatpush1.bf16.msra.mxu0 0
    %2356 = vmatprep.subr.bf16.mxu0 0
    %2357 = vmatpush1.bf16.msra.mxu0 0
    %2358 = vmatprep.subr.bf16.mxu0 0
    %2359 = vmatpush1.bf16.msra.mxu0 0
    %2360 = vmatprep.mubr.bf16.mxu0 0
    %2361 = vmatmul.mubr.bf16.gmra.mrb[0].mxu0 %v2285
    %v2362 = vpop.f32.mrb[0].mxu0
    %v2363 = vadd.f32 0.0, %v2362
    %v2364 = vpop.f32.mrb[0].mxu0
    %v2365 = vadd.f32 0.0, %v2364
    %v2366 = vpop.f32.mrb[0].mxu0
    %v2367 = vpop.f32.mrb[0].mxu0
    %2368 = vdwg.mxu0
    %v2369 = vadd.f32 %v2160, %v2322
    %v2370 = vadd.f32 %v2161, %v2324
    %v2371 = vadd.f32 %v2162, %v2363
    %v2372 = vadd.f32 %v2163, %v2365
    %v2373 = vxor.u32 %v2369, 2147483648
    %v2374 = vxor.u32 %v2370, 2147483648
    %v2375 = vxor.u32 %v2371, 2147483648
    %v2376 = vmul.f32 %v2373, 1.442695
    %v2377 = vpow.pop %v2376
    %v2378 = vmul.f32 %v2374, 1.442695
    %v2379 = vpow.pop %v2378
    %v2380 = vmul.f32 %v2375, 1.442695
    %v2381 = vpow.pop %v2380
    %v2382 = vadd.f32 %v2377, 1.0
    %v2383 = vadd.f32 %v2379, 1.0
    %v2384 = vadd.f32 %v2381, 1.0
    %v2385 = vrcp.pop %v2382
    %v2386 = vmul.f32 1.0, %v2385
    %v2387 = vrcp.pop %v2383
    %v2388 = vmul.f32 1.0, %v2387
    %v2389 = vrcp.pop %v2384
    %v2390 = vmul.f32 1.0, %v2389
    %v2391 = vtanh.pop %v2372
    %v2392 = vmul.f32 %v2388, 0.0
    %v2393 = vmul.f32 %v2386, %v2391
    %v2394 = vadd.f32 %v2392, %v2393
    %v2395 = vtanh.pop %v2394
    %v2396 = vmul.f32 %v2390, %v2395
    %v2397 = vsel %vm1410, %v2396, 0.0
    %v2398 = vsel %vm1410, %v2394, 0.0
    %v2399 = vld [vmem:[#allocation3 + $0x20] sm:$0xff]
    %v2400 = vld [vmem:[#allocation3 + $0x28] sm:$0xff]
    %v2401 = vld [vmem:[#allocation3 + $0x30] sm:$0xff]
    %v2402 = vld [vmem:[#allocation3 + $0x38] sm:$0xff]
    %v2403 = vpack.c.bf16 %v2397, %v2397
    %v2405 = vsel %vm2284, %v2403, 0
    %2407 = vmatprep.subr.bf16.mxu0 %v2237
    %2408 = vmatpush1.bf16.msra.mxu0 %v2236
    %2409 = vmatprep.subr.bf16.mxu0 %v2241
    %2410 = vmatpush1.bf16.msra.mxu0 %v2240
    %2411 = vmatprep.subr.bf16.mxu0 %v2245
    %2412 = vmatpush1.bf16.msra.mxu0 %v2244
    %2413 = vmatprep.subr.bf16.mxu0 %v2249
    %2414 = vmatpush1.bf16.msra.mxu0 %v2248
    %2415 = vmatprep.subr.bf16.mxu0 %v2253
    %2416 = vmatpush1.bf16.msra.mxu0 %v2252
    %2417 = vmatprep.subr.bf16.mxu0 %v2257
    %2418 = vmatpush1.bf16.msra.mxu0 %v2256
    %2419 = vmatprep.subr.bf16.mxu0 0
    %2420 = vmatpush1.bf16.msra.mxu0 0
    %2421 = vmatprep.subr.bf16.mxu0 0
    %2422 = vmatpush1.bf16.msra.mxu0 0
    %2423 = vmatprep.subr.bf16.mxu0 0
    %2424 = vmatpush1.bf16.msra.mxu0 0
    %2425 = vmatprep.subr.bf16.mxu0 0
    %2426 = vmatpush1.bf16.msra.mxu0 0
    %2427 = vmatprep.subr.bf16.mxu0 0
    %2428 = vmatpush1.bf16.msra.mxu0 0
    %2429 = vmatprep.subr.bf16.mxu0 0
    %2430 = vmatpush1.bf16.msra.mxu0 0
    %2431 = vmatprep.subr.bf16.mxu0 0
    %2432 = vmatpush1.bf16.msra.mxu0 0
    %2433 = vmatprep.subr.bf16.mxu0 0
    %2434 = vmatpush1.bf16.msra.mxu0 0
    %2435 = vmatprep.subr.bf16.mxu0 0
    %2436 = vmatpush1.bf16.msra.mxu0 0
    %2437 = vmatprep.subr.bf16.mxu0 0
    %2438 = vmatpush1.bf16.msra.mxu0 0
    %2439 = vmatprep.mubr.bf16.mxu0 0
    %2440 = vmatmul.mubr.bf16.gmra.mrb[0].mxu0 %v2405
    %v2441 = vpop.f32.mrb[0].mxu0
    %v2442 = vadd.f32 0.0, %v2441
    %v2443 = vpop.f32.mrb[0].mxu0
    %v2444 = vadd.f32 0.0, %v2443
    %v2445 = vpop.f32.mrb[0].mxu0
    %v2446 = vpop.f32.mrb[0].mxu0
    %2447 = vdwg.mxu0
    %2448 = vmatprep.subr.bf16.mxu0 %v2239
    %2449 = vmatpush1.bf16.msra.mxu0 %v2238
    %2450 = vmatprep.subr.bf16.mxu0 %v2243
    %2451 = vmatpush1.bf16.msra.mxu0 %v2242
    %2452 = vmatprep.subr.bf16.mxu0 %v2247
    %2453 = vmatpush1.bf16.msra.mxu0 %v2246
    %2454 = vmatprep.subr.bf16.mxu0 %v2251
    %2455 = vmatpush1.bf16.msra.mxu0 %v2250
    %2456 = vmatprep.subr.bf16.mxu0 %v2255
    %2457 = vmatpush1.bf16.msra.mxu0 %v2254
    %2458 = vmatprep.subr.bf16.mxu0 %v2259
    %2459 = vmatpush1.bf16.msra.mxu0 %v2258
    %2460 = vmatprep.subr.bf16.mxu0 0
    %2461 = vmatpush1.bf16.msra.mxu0 0
    %2462 = vmatprep.subr.bf16.mxu0 0
    %2463 = vmatpush1.bf16.msra.mxu0 0
    %2464 = vmatprep.subr.bf16.mxu0 0
    %2465 = vmatpush1.bf16.msra.mxu0 0
    %2466 = vmatprep.subr.bf16.mxu0 0
    %2467 = vmatpush1.bf16.msra.mxu0 0
    %2468 = vmatprep.subr.bf16.mxu0 0
    %2469 = vmatpush1.bf16.msra.mxu0 0
    %2470 = vmatprep.subr.bf16.mxu0 0
    %2471 = vmatpush1.bf16.msra.mxu0 0
    %2472 = vmatprep.subr.bf16.mxu0 0
    %2473 = vmatpush1.bf16.msra.mxu0 0
    %2474 = vmatprep.subr.bf16.mxu0 0
    %2475 = vmatpush1.bf16.msra.mxu0 0
    %2476 = vmatprep.subr.bf16.mxu0 0
    %2477 = vmatpush1.bf16.msra.mxu0 0
    %2478 = vmatprep.subr.bf16.mxu0 0
    %2479 = vmatpush1.bf16.msra.mxu0 0
    %2480 = vmatprep.mubr.bf16.mxu0 0
    %2481 = vmatmul.mubr.bf16.gmra.mrb[0].mxu0 %v2405
    %v2482 = vpop.f32.mrb[0].mxu0
    %v2483 = vadd.f32 0.0, %v2482
    %v2484 = vpop.f32.mrb[0].mxu0
    %v2485 = vadd.f32 0.0, %v2484
    %v2486 = vpop.f32.mrb[0].mxu0
    %v2487 = vpop.f32.mrb[0].mxu0
    %2488 = vdwg.mxu0
    %v2489 = vadd.f32 %v2399, %v2442
    %v2490 = vadd.f32 %v2400, %v2444
    %v2491 = vadd.f32 %v2401, %v2483
    %v2492 = vadd.f32 %v2402, %v2485
    %v2493 = vxor.u32 %v2489, 2147483648
    %v2494 = vxor.u32 %v2490, 2147483648
    %v2495 = vxor.u32 %v2491, 2147483648
    %v2496 = vmul.f32 %v2493, 1.442695
    %v2497 = vpow.pop %v2496
    %v2498 = vmul.f32 %v2494, 1.442695
    %v2499 = vpow.pop %v2498
    %v2500 = vmul.f32 %v2495, 1.442695
    %v2501 = vpow.pop %v2500
    %v2502 = vadd.f32 %v2497, 1.0
    %v2503 = vadd.f32 %v2499, 1.0
    %v2504 = vadd.f32 %v2501, 1.0
    %v2505 = vrcp.pop %v2502
    %v2506 = vmul.f32 1.0, %v2505
    %v2507 = vrcp.pop %v2503
    %v2508 = vmul.f32 1.0, %v2507
    %v2509 = vrcp.pop %v2504
    %v2510 = vmul.f32 1.0, %v2509
    %v2511 = vtanh.pop %v2492
    %v2512 = vmul.f32 %v2508, %v2398
    %v2513 = vmul.f32 %v2506, %v2511
    %v2514 = vadd.f32 %v2512, %v2513
    %v2515 = vtanh.pop %v2514
    %v2516 = vmul.f32 %v2510, %v2515
    %v2517 = vsel %vm180, %v2516, 0.0
    %v2518 = vsel %vm180, %v2514, 0.0
    %v2519 = vld [vmem:[#allocation3 + $0x40] sm:$0xff]
    %v2520 = vld [vmem:[#allocation3 + $0x48] sm:$0xff]
    %v2521 = vld [vmem:[#allocation3 + $0x50] sm:$0xff]
    %v2522 = vld [vmem:[#allocation3 + $0x58] sm:$0xff]
    %v2523 = vpack.c.bf16 %v2517, %v2517
    %v2525 = vsel %vm2284, %v2523, 0
    %2527 = vmatprep.subr.bf16.mxu0 %v2237
    %2528 = vmatpush1.bf16.msra.mxu0 %v2236
    %2529 = vmatprep.subr.bf16.mxu0 %v2241
    %2530 = vmatpush1.bf16.msra.mxu0 %v2240
    %2531 = vmatprep.subr.bf16.mxu0 %v2245
    %2532 = vmatpush1.bf16.msra.mxu0 %v2244
    %2533 = vmatprep.subr.bf16.mxu0 %v2249
    %2534 = vmatpush1.bf16.msra.mxu0 %v2248
    %2535 = vmatprep.subr.bf16.mxu0 %v2253
    %2536 = vmatpush1.bf16.msra.mxu0 %v2252
    %2537 = vmatprep.subr.bf16.mxu0 %v2257
    %2538 = vmatpush1.bf16.msra.mxu0 %v2256
    %2539 = vmatprep.subr.bf16.mxu0 0
    %2540 = vmatpush1.bf16.msra.mxu0 0
    %2541 = vmatprep.subr.bf16.mxu0 0
    %2542 = vmatpush1.bf16.msra.mxu0 0
    %2543 = vmatprep.subr.bf16.mxu0 0
    %2544 = vmatpush1.bf16.msra.mxu0 0
    %2545 = vmatprep.subr.bf16.mxu0 0
    %2546 = vmatpush1.bf16.msra.mxu0 0
    %2547 = vmatprep.subr.bf16.mxu0 0
    %2548 = vmatpush1.bf16.msra.mxu0 0
    %2549 = vmatprep.subr.bf16.mxu0 0
    %2550 = vmatpush1.bf16.msra.mxu0 0
    %2551 = vmatprep.subr.bf16.mxu0 0
    %2552 = vmatpush1.bf16.msra.mxu0 0
    %2553 = vmatprep.subr.bf16.mxu0 0
    %2554 = vmatpush1.bf16.msra.mxu0 0
    %2555 = vmatprep.subr.bf16.mxu0 0
    %2556 = vmatpush1.bf16.msra.mxu0 0
    %2557 = vmatprep.subr.bf16.mxu0 0
    %2558 = vmatpush1.bf16.msra.mxu0 0
    %2559 = vmatprep.mubr.bf16.mxu0 0
    %2560 = vmatmul.mubr.bf16.gmra.mrb[0].mxu0 %v2525
    %v2561 = vpop.f32.mrb[0].mxu0
    %v2562 = vadd.f32 0.0, %v2561
    %v2563 = vpop.f32.mrb[0].mxu0
    %v2564 = vadd.f32 0.0, %v2563
    %v2565 = vpop.f32.mrb[0].mxu0
    %v2566 = vpop.f32.mrb[0].mxu0
    %2567 = vdwg.mxu0
    %2568 = vmatprep.subr.bf16.mxu0 %v2239
    %2569 = vmatpush1.bf16.msra.mxu0 %v2238
    %2570 = vmatprep.subr.bf16.mxu0 %v2243
    %2571 = vmatpush1.bf16.msra.mxu0 %v2242
    %2572 = vmatprep.subr.bf16.mxu0 %v2247
    %2573 = vmatpush1.bf16.msra.mxu0 %v2246
    %2574 = vmatprep.subr.bf16.mxu0 %v2251
    %2575 = vmatpush1.bf16.msra.mxu0 %v2250
    %2576 = vmatprep.subr.bf16.mxu0 %v2255
    %2577 = vmatpush1.bf16.msra.mxu0 %v2254
    %2578 = vmatprep.subr.bf16.mxu0 %v2259
    %2579 = vmatpush1.bf16.msra.mxu0 %v2258
    %2580 = vmatprep.subr.bf16.mxu0 0
    %2581 = vmatpush1.bf16.msra.mxu0 0
    %2582 = vmatprep.subr.bf16.mxu0 0
    %2583 = vmatpush1.bf16.msra.mxu0 0
    %2584 = vmatprep.subr.bf16.mxu0 0
    %2585 = vmatpush1.bf16.msra.mxu0 0
    %2586 = vmatprep.subr.bf16.mxu0 0
    %2587 = vmatpush1.bf16.msra.mxu0 0
    %2588 = vmatprep.subr.bf16.mxu0 0
    %2589 = vmatpush1.bf16.msra.mxu0 0
    %2590 = vmatprep.subr.bf16.mxu0 0
    %2591 = vmatpush1.bf16.msra.mxu0 0
    %2592 = vmatprep.subr.bf16.mxu0 0
    %2593 = vmatpush1.bf16.msra.mxu0 0
    %2594 = vmatprep.subr.bf16.mxu0 0
    %2595 = vmatpush1.bf16.msra.mxu0 0
    %2596 = vmatprep.subr.bf16.mxu0 0
    %2597 = vmatpush1.bf16.msra.mxu0 0
    %2598 = vmatprep.subr.bf16.mxu0 0
    %2599 = vmatpush1.bf16.msra.mxu0 0
    %2600 = vmatprep.mubr.bf16.mxu0 0
    %2601 = vmatmul.mubr.bf16.gmra.mrb[0].mxu0 %v2525
    %v2602 = vpop.f32.mrb[0].mxu0
    %v2603 = vadd.f32 0.0, %v2602
    %v2604 = vpop.f32.mrb[0].mxu0
    %v2605 = vadd.f32 0.0, %v2604
    %v2606 = vpop.f32.mrb[0].mxu0
    %v2607 = vpop.f32.mrb[0].mxu0
    %2608 = vdwg.mxu0
    %v2609 = vadd.f32 %v2519, %v2562
    %v2610 = vadd.f32 %v2520, %v2564
    %v2611 = vadd.f32 %v2521, %v2603
    %v2612 = vadd.f32 %v2522, %v2605
    %v2613 = vxor.u32 %v2609, 2147483648
    %v2614 = vxor.u32 %v2610, 2147483648
    %v2615 = vxor.u32 %v2611, 2147483648
    %v2616 = vmul.f32 %v2613, 1.442695
    %v2617 = vpow.pop %v2616
    %v2618 = vmul.f32 %v2614, 1.442695
    %v2619 = vpow.pop %v2618
    %v2620 = vmul.f32 %v2615, 1.442695
    %v2621 = vpow.pop %v2620
    %v2622 = vadd.f32 %v2617, 1.0
    %v2623 = vadd.f32 %v2619, 1.0
    %v2624 = vadd.f32 %v2621, 1.0
    %v2625 = vrcp.pop %v2622
    %v2626 = vmul.f32 1.0, %v2625
    %v2627 = vrcp.pop %v2623
    %v2628 = vmul.f32 1.0, %v2627
    %v2629 = vrcp.pop %v2624
    %v2630 = vmul.f32 1.0, %v2629
    %v2631 = vtanh.pop %v2612
    %v2632 = vmul.f32 %v2628, %v2518
    %v2633 = vmul.f32 %v2626, %v2631
    %v2634 = vadd.f32 %v2632, %v2633
    %v2635 = vtanh.pop %v2634
    %v2636 = vmul.f32 %v2630, %v2635
    %v2637 = vadd.f32 %v2636, 0.0
    %v2638 = vld [vmem:[#allocation3 + $0x60] sm:$0xff]
    %v2639 = vld [vmem:[#allocation3 + $0x68] sm:$0xff]
    %v2640 = vld [vmem:[#allocation3 + $0x70] sm:$0xff]
    %v2641 = vld [vmem:[#allocation3 + $0x78] sm:$0xff]
    %v2642 = vpack.c.bf16 %v2636, %v2636
    %v2644 = vsel %vm2284, %v2642, 0
    %2646 = vmatprep.subr.bf16.mxu0 %v2237
    %2647 = vmatpush1.bf16.msra.mxu0 %v2236
    %2648 = vmatprep.subr.bf16.mxu0 %v2241
    %2649 = vmatpush1.bf16.msra.mxu0 %v2240
    %2650 = vmatprep.subr.bf16.mxu0 %v2245
    %2651 = vmatpush1.bf16.msra.mxu0 %v2244
    %2652 = vmatprep.subr.bf16.mxu0 %v2249
    %2653 = vmatpush1.bf16.msra.mxu0 %v2248
    %2654 = vmatprep.subr.bf16.mxu0 %v2253
    %2655 = vmatpush1.bf16.msra.mxu0 %v2252
    %2656 = vmatprep.subr.bf16.mxu0 %v2257
    %2657 = vmatpush1.bf16.msra.mxu0 %v2256
    %2658 = vmatprep.subr.bf16.mxu0 0
    %2659 = vmatpush1.bf16.msra.mxu0 0
    %2660 = vmatprep.subr.bf16.mxu0 0
    %2661 = vmatpush1.bf16.msra.mxu0 0
    %2662 = vmatprep.subr.bf16.mxu0 0
    %2663 = vmatpush1.bf16.msra.mxu0 0
    %2664 = vmatprep.subr.bf16.mxu0 0
    %2665 = vmatpush1.bf16.msra.mxu0 0
    %2666 = vmatprep.subr.bf16.mxu0 0
    %2667 = vmatpush1.bf16.msra.mxu0 0
    %2668 = vmatprep.subr.bf16.mxu0 0
    %2669 = vmatpush1.bf16.msra.mxu0 0
    %2670 = vmatprep.subr.bf16.mxu0 0
    %2671 = vmatpush1.bf16.msra.mxu0 0
    %2672 = vmatprep.subr.bf16.mxu0 0
    %2673 = vmatpush1.bf16.msra.mxu0 0
    %2674 = vmatprep.subr.bf16.mxu0 0
    %2675 = vmatpush1.bf16.msra.mxu0 0
    %2676 = vmatprep.subr.bf16.mxu0 0
    %2677 = vmatpush1.bf16.msra.mxu0 0
    %2678 = vmatprep.mubr.bf16.mxu0 0
    %2679 = vmatmul.mubr.bf16.gmra.mrb[0].mxu0 %v2644
    %v2680 = vpop.f32.mrb[0].mxu0
    %v2681 = vadd.f32 0.0, %v2680
    %v2682 = vpop.f32.mrb[0].mxu0
    %v2683 = vadd.f32 0.0, %v2682
    %v2684 = vpop.f32.mrb[0].mxu0
    %v2685 = vpop.f32.mrb[0].mxu0
    %2686 = vdwg.mxu0
    %2687 = vmatprep.subr.bf16.mxu0 %v2239
    %2688 = vmatpush1.bf16.msra.mxu0 %v2238
    %2689 = vmatprep.subr.bf16.mxu0 %v2243
    %2690 = vmatpush1.bf16.msra.mxu0 %v2242
    %2691 = vmatprep.subr.bf16.mxu0 %v2247
    %2692 = vmatpush1.bf16.msra.mxu0 %v2246
    %2693 = vmatprep.subr.bf16.mxu0 %v2251
    %2694 = vmatpush1.bf16.msra.mxu0 %v2250
    %2695 = vmatprep.subr.bf16.mxu0 %v2255
    %2696 = vmatpush1.bf16.msra.mxu0 %v2254
    %2697 = vmatprep.subr.bf16.mxu0 %v2259
    %2698 = vmatpush1.bf16.msra.mxu0 %v2258
    %2699 = vmatprep.subr.bf16.mxu0 0
    %2700 = vmatpush1.bf16.msra.mxu0 0
    %2701 = vmatprep.subr.bf16.mxu0 0
    %2702 = vmatpush1.bf16.msra.mxu0 0
    %2703 = vmatprep.subr.bf16.mxu0 0
    %2704 = vmatpush1.bf16.msra.mxu0 0
    %2705 = vmatprep.subr.bf16.mxu0 0
    %2706 = vmatpush1.bf16.msra.mxu0 0
    %2707 = vmatprep.subr.bf16.mxu0 0
    %2708 = vmatpush1.bf16.msra.mxu0 0
    %2709 = vmatprep.subr.bf16.mxu0 0
    %2710 = vmatpush1.bf16.msra.mxu0 0
    %2711 = vmatprep.subr.bf16.mxu0 0
    %2712 = vmatpush1.bf16.msra.mxu0 0
    %2713 = vmatprep.subr.bf16.mxu0 0
    %2714 = vmatpush1.bf16.msra.mxu0 0
    %2715 = vmatprep.subr.bf16.mxu0 0
    %2716 = vmatpush1.bf16.msra.mxu0 0
    %2717 = vmatprep.subr.bf16.mxu0 0
    %2718 = vmatpush1.bf16.msra.mxu0 0
    %2719 = vmatprep.mubr.bf16.mxu0 0
    %2720 = vmatmul.mubr.bf16.gmra.mrb[0].mxu0 %v2644
    %v2721 = vpop.f32.mrb[0].mxu0
    %v2722 = vadd.f32 0.0, %v2721
    %v2723 = vpop.f32.mrb[0].mxu0
    %v2724 = vadd.f32 0.0, %v2723
    %v2725 = vpop.f32.mrb[0].mxu0
    %v2726 = vpop.f32.mrb[0].mxu0
    %2727 = vdwg.mxu0
    %v2728 = vadd.f32 %v2638, %v2681
    %v2729 = vadd.f32 %v2639, %v2683
    %v2730 = vadd.f32 %v2640, %v2722
    %v2731 = vadd.f32 %v2641, %v2724
    %v2732 = vxor.u32 %v2728, 2147483648
    %v2733 = vxor.u32 %v2729, 2147483648
    %v2734 = vxor.u32 %v2730, 2147483648
    %v2735 = vmul.f32 %v2732, 1.442695
    %v2736 = vpow.pop %v2735
    %v2737 = vmul.f32 %v2733, 1.442695
    %v2738 = vpow.pop %v2737
    %v2739 = vmul.f32 %v2734, 1.442695
    %v2740 = vpow.pop %v2739
    %v2741 = vadd.f32 %v2736, 1.0
    %v2742 = vadd.f32 %v2738, 1.0
    %v2743 = vadd.f32 %v2740, 1.0
    %v2744 = vrcp.pop %v2741
    %v2745 = vmul.f32 1.0, %v2744
    %v2746 = vrcp.pop %v2742
    %v2747 = vmul.f32 1.0, %v2746
    %v2748 = vrcp.pop %v2743
    %v2749 = vmul.f32 1.0, %v2748
    %v2750 = vtanh.pop %v2731
    %v2751 = vmul.f32 %v2747, %v2634
    %v2752 = vmul.f32 %v2745, %v2750
    %v2753 = vadd.f32 %v2751, %v2752
    %v2754 = vtanh.pop %v2753
    %v2755 = vmul.f32 %v2749, %v2754
    %v2756 = vadd.f32 %v2637, %v2755
    %v2757 = vld [vmem:[#allocation3 + $0x80] sm:$0xff]
    %v2758 = vld [vmem:[#allocation3 + $0x88] sm:$0xff]
    %v2759 = vld [vmem:[#allocation3 + $0x90] sm:$0xff]
    %v2760 = vld [vmem:[#allocation3 + $0x98] sm:$0xff]
    %v2761 = vpack.c.bf16 %v2755, %v2755
    %v2763 = vsel %vm2284, %v2761, 0
    %2765 = vmatprep.subr.bf16.mxu0 %v2237
    %2766 = vmatpush1.bf16.msra.mxu0 %v2236
    %2767 = vmatprep.subr.bf16.mxu0 %v2241
    %2768 = vmatpush1.bf16.msra.mxu0 %v2240
    %2769 = vmatprep.subr.bf16.mxu0 %v2245
    %2770 = vmatpush1.bf16.msra.mxu0 %v2244
    %2771 = vmatprep.subr.bf16.mxu0 %v2249
    %2772 = vmatpush1.bf16.msra.mxu0 %v2248
    %2773 = vmatprep.subr.bf16.mxu0 %v2253
    %2774 = vmatpush1.bf16.msra.mxu0 %v2252
    %2775 = vmatprep.subr.bf16.mxu0 %v2257
    %2776 = vmatpush1.bf16.msra.mxu0 %v2256
    %2777 = vmatprep.subr.bf16.mxu0 0
    %2778 = vmatpush1.bf16.msra.mxu0 0
    %2779 = vmatprep.subr.bf16.mxu0 0
    %2780 = vmatpush1.bf16.msra.mxu0 0
    %2781 = vmatprep.subr.bf16.mxu0 0
    %2782 = vmatpush1.bf16.msra.mxu0 0
    %2783 = vmatprep.subr.bf16.mxu0 0
    %2784 = vmatpush1.bf16.msra.mxu0 0
    %2785 = vmatprep.subr.bf16.mxu0 0
    %2786 = vmatpush1.bf16.msra.mxu0 0
    %2787 = vmatprep.subr.bf16.mxu0 0
    %2788 = vmatpush1.bf16.msra.mxu0 0
    %2789 = vmatprep.subr.bf16.mxu0 0
    %2790 = vmatpush1.bf16.msra.mxu0 0
    %2791 = vmatprep.subr.bf16.mxu0 0
    %2792 = vmatpush1.bf16.msra.mxu0 0
    %2793 = vmatprep.subr.bf16.mxu0 0
    %2794 = vmatpush1.bf16.msra.mxu0 0
    %2795 = vmatprep.subr.bf16.mxu0 0
    %2796 = vmatpush1.bf16.msra.mxu0 0
    %2797 = vmatprep.mubr.bf16.mxu0 0
    %2798 = vmatmul.mubr.bf16.gmra.mrb[0].mxu0 %v2763
    %v2799 = vpop.f32.mrb[0].mxu0
    %v2800 = vadd.f32 0.0, %v2799
    %v2801 = vpop.f32.mrb[0].mxu0
    %v2802 = vadd.f32 0.0, %v2801
    %v2803 = vpop.f32.mrb[0].mxu0
    %v2804 = vpop.f32.mrb[0].mxu0
    %2805 = vdwg.mxu0
    %2806 = vmatprep.subr.bf16.mxu0 %v2239
    %2807 = vmatpush1.bf16.msra.mxu0 %v2238
    %2808 = vmatprep.subr.bf16.mxu0 %v2243
    %2809 = vmatpush1.bf16.msra.mxu0 %v2242
    %2810 = vmatprep.subr.bf16.mxu0 %v2247
    %2811 = vmatpush1.bf16.msra.mxu0 %v2246
    %2812 = vmatprep.subr.bf16.mxu0 %v2251
    %2813 = vmatpush1.bf16.msra.mxu0 %v2250
    %2814 = vmatprep.subr.bf16.mxu0 %v2255
    %2815 = vmatpush1.bf16.msra.mxu0 %v2254
    %2816 = vmatprep.subr.bf16.mxu0 %v2259
    %2817 = vmatpush1.bf16.msra.mxu0 %v2258
    %2818 = vmatprep.subr.bf16.mxu0 0
    %2819 = vmatpush1.bf16.msra.mxu0 0
    %2820 = vmatprep.subr.bf16.mxu0 0
    %2821 = vmatpush1.bf16.msra.mxu0 0
    %2822 = vmatprep.subr.bf16.mxu0 0
    %2823 = vmatpush1.bf16.msra.mxu0 0
    %2824 = vmatprep.subr.bf16.mxu0 0
    %2825 = vmatpush1.bf16.msra.mxu0 0
    %2826 = vmatprep.subr.bf16.mxu0 0
    %2827 = vmatpush1.bf16.msra.mxu0 0
    %2828 = vmatprep.subr.bf16.mxu0 0
    %2829 = vmatpush1.bf16.msra.mxu0 0
    %2830 = vmatprep.subr.bf16.mxu0 0
    %2831 = vmatpush1.bf16.msra.mxu0 0
    %2832 = vmatprep.subr.bf16.mxu0 0
    %2833 = vmatpush1.bf16.msra.mxu0 0
    %2834 = vmatprep.subr.bf16.mxu0 0
    %2835 = vmatpush1.bf16.msra.mxu0 0
    %2836 = vmatprep.subr.bf16.mxu0 0
    %2837 = vmatpush1.bf16.msra.mxu0 0
    %2838 = vmatprep.mubr.bf16.mxu0 0
    %2839 = vmatmul.mubr.bf16.gmra.mrb[0].mxu0 %v2763
    %v2840 = vpop.f32.mrb[0].mxu0
    %v2841 = vadd.f32 0.0, %v2840
    %v2842 = vpop.f32.mrb[0].mxu0
    %v2843 = vadd.f32 0.0, %v2842
    %v2844 = vpop.f32.mrb[0].mxu0
    %v2845 = vpop.f32.mrb[0].mxu0
    %2846 = vdwg.mxu0
    %v2847 = vadd.f32 %v2757, %v2800
    %v2848 = vadd.f32 %v2758, %v2802
    %v2849 = vadd.f32 %v2759, %v2841
    %v2850 = vadd.f32 %v2760, %v2843
    %v2851 = vxor.u32 %v2847, 2147483648
    %v2852 = vxor.u32 %v2848, 2147483648
    %v2853 = vxor.u32 %v2849, 2147483648
    %v2854 = vmul.f32 %v2851, 1.442695
    %v2855 = vpow.pop %v2854
    %v2856 = vmul.f32 %v2852, 1.442695
    %v2857 = vpow.pop %v2856
    %v2858 = vmul.f32 %v2853, 1.442695
    %v2859 = vpow.pop %v2858
    %v2860 = vadd.f32 %v2855, 1.0
    %v2861 = vadd.f32 %v2857, 1.0
    %v2862 = vadd.f32 %v2859, 1.0
    %v2863 = vrcp.pop %v2860
    %v2864 = vmul.f32 1.0, %v2863
    %v2865 = vrcp.pop %v2861
    %v2866 = vmul.f32 1.0, %v2865
    %v2867 = vrcp.pop %v2862
    %v2868 = vmul.f32 1.0, %v2867
    %v2869 = vtanh.pop %v2850
    %v2870 = vmul.f32 %v2866, %v2753
    %v2871 = vmul.f32 %v2864, %v2869
    %v2872 = vadd.f32 %v2870, %v2871
    %v2873 = vtanh.pop %v2872
    %v2874 = vmul.f32 %v2868, %v2873
    %v2875 = vadd.f32 %v2756, %v2874
    %v2876 = vld [vmem:[#allocation3 + $0xa0] sm:$0xff]
    %v2877 = vld [vmem:[#allocation3 + $0xa8] sm:$0xff]
    %v2878 = vld [vmem:[#allocation3 + $0xb0] sm:$0xff]
    %v2879 = vld [vmem:[#allocation3 + $0xb8] sm:$0xff]
    %v2880 = vpack.c.bf16 %v2874, %v2874
    %v2882 = vsel %vm2284, %v2880, 0
    %2884 = vmatprep.subr.bf16.mxu0 %v2237
    %2885 = vmatpush1.bf16.msra.mxu0 %v2236
    %2886 = vmatprep.subr.bf16.mxu0 %v2241
    %2887 = vmatpush1.bf16.msra.mxu0 %v2240
    %2888 = vmatprep.subr.bf16.mxu0 %v2245
    %2889 = vmatpush1.bf16.msra.mxu0 %v2244
    %2890 = vmatprep.subr.bf16.mxu0 %v2249
    %2891 = vmatpush1.bf16.msra.mxu0 %v2248
    %2892 = vmatprep.subr.bf16.mxu0 %v2253
    %2893 = vmatpush1.bf16.msra.mxu0 %v2252
    %2894 = vmatprep.subr.bf16.mxu0 %v2257
    %2895 = vmatpush1.bf16.msra.mxu0 %v2256
    %2896 = vmatprep.subr.bf16.mxu0 0
    %2897 = vmatpush1.bf16.msra.mxu0 0
    %2898 = vmatprep.subr.bf16.mxu0 0
    %2899 = vmatpush1.bf16.msra.mxu0 0
    %2900 = vmatprep.subr.bf16.mxu0 0
    %2901 = vmatpush1.bf16.msra.mxu0 0
    %2902 = vmatprep.subr.bf16.mxu0 0
    %2903 = vmatpush1.bf16.msra.mxu0 0
    %2904 = vmatprep.subr.bf16.mxu0 0
    %2905 = vmatpush1.bf16.msra.mxu0 0
    %2906 = vmatprep.subr.bf16.mxu0 0
    %2907 = vmatpush1.bf16.msra.mxu0 0
    %2908 = vmatprep.subr.bf16.mxu0 0
    %2909 = vmatpush1.bf16.msra.mxu0 0
    %2910 = vmatprep.subr.bf16.mxu0 0
    %2911 = vmatpush1.bf16.msra.mxu0 0
    %2912 = vmatprep.subr.bf16.mxu0 0
    %2913 = vmatpush1.bf16.msra.mxu0 0
    %2914 = vmatprep.subr.bf16.mxu0 0
    %2915 = vmatpush1.bf16.msra.mxu0 0
    %2916 = vmatprep.mubr.bf16.mxu0 0
    %2917 = vmatmul.mubr.bf16.gmra.mrb[0].mxu0 %v2882
    %v2918 = vpop.f32.mrb[0].mxu0
    %v2919 = vadd.f32 0.0, %v2918
    %v2920 = vpop.f32.mrb[0].mxu0
    %v2921 = vadd.f32 0.0, %v2920
    %v2922 = vpop.f32.mrb[0].mxu0
    %v2923 = vpop.f32.mrb[0].mxu0
    %2924 = vdwg.mxu0
    %2925 = vmatprep.subr.bf16.mxu0 %v2239
    %2926 = vmatpush1.bf16.msra.mxu0 %v2238
    %2927 = vmatprep.subr.bf16.mxu0 %v2243
    %2928 = vmatpush1.bf16.msra.mxu0 %v2242
    %2929 = vmatprep.subr.bf16.mxu0 %v2247
    %2930 = vmatpush1.bf16.msra.mxu0 %v2246
    %2931 = vmatprep.subr.bf16.mxu0 %v2251
    %2932 = vmatpush1.bf16.msra.mxu0 %v2250
    %2933 = vmatprep.subr.bf16.mxu0 %v2255
    %2934 = vmatpush1.bf16.msra.mxu0 %v2254
    %2935 = vmatprep.subr.bf16.mxu0 %v2259
    %2936 = vmatpush1.bf16.msra.mxu0 %v2258
    %2937 = vmatprep.subr.bf16.mxu0 0
    %2938 = vmatpush1.bf16.msra.mxu0 0
    %2939 = vmatprep.subr.bf16.mxu0 0
    %2940 = vmatpush1.bf16.msra.mxu0 0
    %2941 = vmatprep.subr.bf16.mxu0 0
    %2942 = vmatpush1.bf16.msra.mxu0 0
    %2943 = vmatprep.subr.bf16.mxu0 0
    %2944 = vmatpush1.bf16.msra.mxu0 0
    %2945 = vmatprep.subr.bf16.mxu0 0
    %2946 = vmatpush1.bf16.msra.mxu0 0
    %2947 = vmatprep.subr.bf16.mxu0 0
    %2948 = vmatpush1.bf16.msra.mxu0 0
    %2949 = vmatprep.subr.bf16.mxu0 0
    %2950 = vmatpush1.bf16.msra.mxu0 0
    %2951 = vmatprep.subr.bf16.mxu0 0
    %2952 = vmatpush1.bf16.msra.mxu0 0
    %2953 = vmatprep.subr.bf16.mxu0 0
    %2954 = vmatpush1.bf16.msra.mxu0 0
    %2955 = vmatprep.subr.bf16.mxu0 0
    %2956 = vmatpush1.bf16.msra.mxu0 0
    %2957 = vmatprep.mubr.bf16.mxu0 0
    %2958 = vmatmul.mubr.bf16.gmra.mrb[0].mxu0 %v2882
    %v2959 = vpop.f32.mrb[0].mxu0
    %v2960 = vadd.f32 0.0, %v2959
    %v2961 = vpop.f32.mrb[0].mxu0
    %v2962 = vadd.f32 0.0, %v2961
    %v2963 = vpop.f32.mrb[0].mxu0
    %v2964 = vpop.f32.mrb[0].mxu0
    %2965 = vdwg.mxu0
    %v2966 = vadd.f32 %v2876, %v2919
    %v2967 = vadd.f32 %v2877, %v2921
    %v2968 = vadd.f32 %v2878, %v2960
    %v2969 = vadd.f32 %v2879, %v2962
    %v2970 = vxor.u32 %v2966, 2147483648
    %v2971 = vxor.u32 %v2967, 2147483648
    %v2972 = vxor.u32 %v2968, 2147483648
    %v2973 = vmul.f32 %v2970, 1.442695
    %v2974 = vpow.pop %v2973
    %v2975 = vmul.f32 %v2971, 1.442695
    %v2976 = vpow.pop %v2975
    %v2977 = vmul.f32 %v2972, 1.442695
    %v2978 = vpow.pop %v2977
    %v2979 = vadd.f32 %v2974, 1.0
    %v2980 = vadd.f32 %v2976, 1.0
    %v2981 = vadd.f32 %v2978, 1.0
    %v2982 = vrcp.pop %v2979
    %v2983 = vmul.f32 1.0, %v2982
    %v2984 = vrcp.pop %v2980
    %v2985 = vmul.f32 1.0, %v2984
    %v2986 = vrcp.pop %v2981
    %v2987 = vmul.f32 1.0, %v2986
    %v2988 = vtanh.pop %v2969
    %v2989 = vmul.f32 %v2985, %v2872
    %v2990 = vmul.f32 %v2983, %v2988
    %v2991 = vadd.f32 %v2989, %v2990
    %v2992 = vtanh.pop %v2991
    %v2993 = vmul.f32 %v2987, %v2992
    %v2994 = vadd.f32 %v2875, %v2993
    %v2995 = vld [vmem:[#allocation3 + $0xc0] sm:$0xff]
    %v2996 = vld [vmem:[#allocation3 + $0xc8] sm:$0xff]
    %v2997 = vld [vmem:[#allocation3 + $0xd0] sm:$0xff]
    %v2998 = vld [vmem:[#allocation3 + $0xd8] sm:$0xff]
    %v2999 = vpack.c.bf16 %v2993, %v2993
    %v3001 = vsel %vm2284, %v2999, 0
    %3003 = vmatprep.subr.bf16.mxu0 %v2237
    %3004 = vmatpush1.bf16.msra.mxu0 %v2236
    %3005 = vmatprep.subr.bf16.mxu0 %v2241
    %3006 = vmatpush1.bf16.msra.mxu0 %v2240
    %3007 = vmatprep.subr.bf16.mxu0 %v2245
    %3008 = vmatpush1.bf16.msra.mxu0 %v2244
    %3009 = vmatprep.subr.bf16.mxu0 %v2249
    %3010 = vmatpush1.bf16.msra.mxu0 %v2248
    %3011 = vmatprep.subr.bf16.mxu0 %v2253
    %3012 = vmatpush1.bf16.msra.mxu0 %v2252
    %3013 = vmatprep.subr.bf16.mxu0 %v2257
    %3014 = vmatpush1.bf16.msra.mxu0 %v2256
    %3015 = vmatprep.subr.bf16.mxu0 0
    %3016 = vmatpush1.bf16.msra.mxu0 0
    %3017 = vmatprep.subr.bf16.mxu0 0
    %3018 = vmatpush1.bf16.msra.mxu0 0
    %3019 = vmatprep.subr.bf16.mxu0 0
    %3020 = vmatpush1.bf16.msra.mxu0 0
    %3021 = vmatprep.subr.bf16.mxu0 0
    %3022 = vmatpush1.bf16.msra.mxu0 0
    %3023 = vmatprep.subr.bf16.mxu0 0
    %3024 = vmatpush1.bf16.msra.mxu0 0
    %3025 = vmatprep.subr.bf16.mxu0 0
    %3026 = vmatpush1.bf16.msra.mxu0 0
    %3027 = vmatprep.subr.bf16.mxu0 0
    %3028 = vmatpush1.bf16.msra.mxu0 0
    %3029 = vmatprep.subr.bf16.mxu0 0
    %3030 = vmatpush1.bf16.msra.mxu0 0
    %3031 = vmatprep.subr.bf16.mxu0 0
    %3032 = vmatpush1.bf16.msra.mxu0 0
    %3033 = vmatprep.subr.bf16.mxu0 0
    %3034 = vmatpush1.bf16.msra.mxu0 0
    %3035 = vmatprep.mubr.bf16.mxu0 0
    %3036 = vmatmul.mubr.bf16.gmra.mrb[0].mxu0 %v3001
    %v3037 = vpop.f32.mrb[0].mxu0
    %v3038 = vadd.f32 0.0, %v3037
    %v3039 = vpop.f32.mrb[0].mxu0
    %v3040 = vadd.f32 0.0, %v3039
    %v3041 = vpop.f32.mrb[0].mxu0
    %v3042 = vpop.f32.mrb[0].mxu0
    %3043 = vdwg.mxu0
    %3044 = vmatprep.subr.bf16.mxu0 %v2239
    %3045 = vmatpush1.bf16.msra.mxu0 %v2238
    %3046 = vmatprep.subr.bf16.mxu0 %v2243
    %3047 = vmatpush1.bf16.msra.mxu0 %v2242
    %3048 = vmatprep.subr.bf16.mxu0 %v2247
    %3049 = vmatpush1.bf16.msra.mxu0 %v2246
    %3050 = vmatprep.subr.bf16.mxu0 %v2251
    %3051 = vmatpush1.bf16.msra.mxu0 %v2250
    %3052 = vmatprep.subr.bf16.mxu0 %v2255
    %3053 = vmatpush1.bf16.msra.mxu0 %v2254
    %3054 = vmatprep.subr.bf16.mxu0 %v2259
    %3055 = vmatpush1.bf16.msra.mxu0 %v2258
    %3056 = vmatprep.subr.bf16.mxu0 0
    %3057 = vmatpush1.bf16.msra.mxu0 0
    %3058 = vmatprep.subr.bf16.mxu0 0
    %3059 = vmatpush1.bf16.msra.mxu0 0
    %3060 = vmatprep.subr.bf16.mxu0 0
    %3061 = vmatpush1.bf16.msra.mxu0 0
    %3062 = vmatprep.subr.bf16.mxu0 0
    %3063 = vmatpush1.bf16.msra.mxu0 0
    %3064 = vmatprep.subr.bf16.mxu0 0
    %3065 = vmatpush1.bf16.msra.mxu0 0
    %3066 = vmatprep.subr.bf16.mxu0 0
    %3067 = vmatpush1.bf16.msra.mxu0 0
    %3068 = vmatprep.subr.bf16.mxu0 0
    %3069 = vmatpush1.bf16.msra.mxu0 0
    %3070 = vmatprep.subr.bf16.mxu0 0
    %3071 = vmatpush1.bf16.msra.mxu0 0
    %3072 = vmatprep.subr.bf16.mxu0 0
    %3073 = vmatpush1.bf16.msra.mxu0 0
    %3074 = vmatprep.subr.bf16.mxu0 0
    %3075 = vmatpush1.bf16.msra.mxu0 0
    %3076 = vmatprep.mubr.bf16.mxu0 0
    %3077 = vmatmul.mubr.bf16.gmra.mrb[0].mxu0 %v3001
    %v3078 = vpop.f32.mrb[0].mxu0
    %v3079 = vadd.f32 0.0, %v3078
    %v3080 = vpop.f32.mrb[0].mxu0
    %v3081 = vadd.f32 0.0, %v3080
    %v3082 = vpop.f32.mrb[0].mxu0
    %v3083 = vpop.f32.mrb[0].mxu0
    %3084 = vdwg.mxu0
    %v3085 = vadd.f32 %v2995, %v3038
    %v3086 = vadd.f32 %v2996, %v3040
    %v3087 = vadd.f32 %v2997, %v3079
    %v3088 = vadd.f32 %v2998, %v3081
    %v3089 = vxor.u32 %v3085, 2147483648
    %v3090 = vxor.u32 %v3086, 2147483648
    %v3091 = vxor.u32 %v3087, 2147483648
    %v3092 = vmul.f32 %v3089, 1.442695
    %v3093 = vpow.pop %v3092
    %v3094 = vmul.f32 %v3090, 1.442695
    %v3095 = vpow.pop %v3094
    %v3096 = vmul.f32 %v3091, 1.442695
    %v3097 = vpow.pop %v3096
    %v3098 = vadd.f32 %v3093, 1.0
    %v3099 = vadd.f32 %v3095, 1.0
    %v3100 = vadd.f32 %v3097, 1.0
    %v3101 = vrcp.pop %v3098
    %v3102 = vmul.f32 1.0, %v3101
    %v3103 = vrcp.pop %v3099
    %v3104 = vmul.f32 1.0, %v3103
    %v3105 = vrcp.pop %v3100
    %v3106 = vmul.f32 1.0, %v3105
    %v3107 = vtanh.pop %v3088
    %v3108 = vmul.f32 %v3104, %v2991
    %v3109 = vmul.f32 %v3102, %v3107
    %v3110 = vadd.f32 %v3108, %v3109
    %v3111 = vtanh.pop %v3110
    %v3112 = vmul.f32 %v3106, %v3111
    %v3113 = vadd.f32 %v2994, %v3112
    %v3114 = vld [vmem:[#allocation3 + $0xe0] sm:$0xff]
    %v3115 = vld [vmem:[#allocation3 + $0xe8] sm:$0xff]
    %v3116 = vld [vmem:[#allocation3 + $0xf0] sm:$0xff]
    %v3117 = vld [vmem:[#allocation3 + $0xf8] sm:$0xff]
    %v3118 = vpack.c.bf16 %v3112, %v3112
    %v3120 = vsel %vm2284, %v3118, 0
    %3122 = vmatprep.subr.bf16.mxu0 %v2237
    %3123 = vmatpush1.bf16.msra.mxu0 %v2236
    %3124 = vmatprep.subr.bf16.mxu0 %v2241
    %3125 = vmatpush1.bf16.msra.mxu0 %v2240
    %3126 = vmatprep.subr.bf16.mxu0 %v2245
    %3127 = vmatpush1.bf16.msra.mxu0 %v2244
    %3128 = vmatprep.subr.bf16.mxu0 %v2249
    %3129 = vmatpush1.bf16.msra.mxu0 %v2248
    %3130 = vmatprep.subr.bf16.mxu0 %v2253
    %3131 = vmatpush1.bf16.msra.mxu0 %v2252
    %3132 = vmatprep.subr.bf16.mxu0 %v2257
    %3133 = vmatpush1.bf16.msra.mxu0 %v2256
    %3134 = vmatprep.subr.bf16.mxu0 0
    %3135 = vmatpush1.bf16.msra.mxu0 0
    %3136 = vmatprep.subr.bf16.mxu0 0
    %3137 = vmatpush1.bf16.msra.mxu0 0
    %3138 = vmatprep.subr.bf16.mxu0 0
    %3139 = vmatpush1.bf16.msra.mxu0 0
    %3140 = vmatprep.subr.bf16.mxu0 0
    %3141 = vmatpush1.bf16.msra.mxu0 0
    %3142 = vmatprep.subr.bf16.mxu0 0
    %3143 = vmatpush1.bf16.msra.mxu0 0
    %3144 = vmatprep.subr.bf16.mxu0 0
    %3145 = vmatpush1.bf16.msra.mxu0 0
    %3146 = vmatprep.subr.bf16.mxu0 0
    %3147 = vmatpush1.bf16.msra.mxu0 0
    %3148 = vmatprep.subr.bf16.mxu0 0
    %3149 = vmatpush1.bf16.msra.mxu0 0
    %3150 = vmatprep.subr.bf16.mxu0 0
    %3151 = vmatpush1.bf16.msra.mxu0 0
    %3152 = vmatprep.subr.bf16.mxu0 0
    %3153 = vmatpush1.bf16.msra.mxu0 0
    %3154 = vmatprep.mubr.bf16.mxu0 0
    %3155 = vmatmul.mubr.bf16.gmra.mrb[0].mxu0 %v3120
    %v3156 = vpop.f32.mrb[0].mxu0
    %v3157 = vadd.f32 0.0, %v3156
    %v3158 = vpop.f32.mrb[0].mxu0
    %v3159 = vadd.f32 0.0, %v3158
    %v3160 = vpop.f32.mrb[0].mxu0
    %v3161 = vpop.f32.mrb[0].mxu0
    %3162 = vdwg.mxu0
    %3163 = vmatprep.subr.bf16.mxu0 %v2239
    %3164 = vmatpush1.bf16.msra.mxu0 %v2238
    %3165 = vmatprep.subr.bf16.mxu0 %v2243
    %3166 = vmatpush1.bf16.msra.mxu0 %v2242
    %3167 = vmatprep.subr.bf16.mxu0 %v2247
    %3168 = vmatpush1.bf16.msra.mxu0 %v2246
    %3169 = vmatprep.subr.bf16.mxu0 %v2251
    %3170 = vmatpush1.bf16.msra.mxu0 %v2250
    %3171 = vmatprep.subr.bf16.mxu0 %v2255
    %3172 = vmatpush1.bf16.msra.mxu0 %v2254
    %3173 = vmatprep.subr.bf16.mxu0 %v2259
    %3174 = vmatpush1.bf16.msra.mxu0 %v2258
    %3175 = vmatprep.subr.bf16.mxu0 0
    %3176 = vmatpush1.bf16.msra.mxu0 0
    %3177 = vmatprep.subr.bf16.mxu0 0
    %3178 = vmatpush1.bf16.msra.mxu0 0
    %3179 = vmatprep.subr.bf16.mxu0 0
    %3180 = vmatpush1.bf16.msra.mxu0 0
    %3181 = vmatprep.subr.bf16.mxu0 0
    %3182 = vmatpush1.bf16.msra.mxu0 0
    %3183 = vmatprep.subr.bf16.mxu0 0
    %3184 = vmatpush1.bf16.msra.mxu0 0
    %3185 = vmatprep.subr.bf16.mxu0 0
    %3186 = vmatpush1.bf16.msra.mxu0 0
    %3187 = vmatprep.subr.bf16.mxu0 0
    %3188 = vmatpush1.bf16.msra.mxu0 0
    %3189 = vmatprep.subr.bf16.mxu0 0
    %3190 = vmatpush1.bf16.msra.mxu0 0
    %3191 = vmatprep.subr.bf16.mxu0 0
    %3192 = vmatpush1.bf16.msra.mxu0 0
    %3193 = vmatprep.subr.bf16.mxu0 0
    %3194 = vmatpush1.bf16.msra.mxu0 0
    %3195 = vmatprep.mubr.bf16.mxu0 0
    %3196 = vmatmul.mubr.bf16.gmra.mrb[0].mxu0 %v3120
    %v3197 = vpop.f32.mrb[0].mxu0
    %v3198 = vadd.f32 0.0, %v3197
    %v3199 = vpop.f32.mrb[0].mxu0
    %v3200 = vadd.f32 0.0, %v3199
    %v3201 = vpop.f32.mrb[0].mxu0
    %v3202 = vpop.f32.mrb[0].mxu0
    %3203 = vdwg.mxu0
    %v3204 = vadd.f32 %v3114, %v3157
    %v3205 = vadd.f32 %v3115, %v3159
    %v3206 = vadd.f32 %v3116, %v3198
    %v3207 = vadd.f32 %v3117, %v3200
    %v3208 = vxor.u32 %v3204, 2147483648
    %v3209 = vxor.u32 %v3205, 2147483648
    %v3210 = vxor.u32 %v3206, 2147483648
    %v3211 = vmul.f32 %v3208, 1.442695
    %v3212 = vpow.pop %v3211
    %v3213 = vmul.f32 %v3209, 1.442695
    %v3214 = vpow.pop %v3213
    %v3215 = vmul.f32 %v3210, 1.442695
    %v3216 = vpow.pop %v3215
    %v3217 = vadd.f32 %v3212, 1.0
    %v3218 = vadd.f32 %v3214, 1.0
    %v3219 = vadd.f32 %v3216, 1.0
    %v3220 = vrcp.pop %v3217
    %v3221 = vmul.f32 1.0, %v3220
    %v3222 = vrcp.pop %v3218
    %v3223 = vmul.f32 1.0, %v3222
    %v3224 = vrcp.pop %v3219
    %v3225 = vmul.f32 1.0, %v3224
    %v3226 = vtanh.pop %v3207
    %v3227 = vmul.f32 %v3223, %v3110
    %v3228 = vmul.f32 %v3221, %v3226
    %v3229 = vadd.f32 %v3227, %v3228
    %v3230 = vtanh.pop %v3229
    %v3231 = vmul.f32 %v3225, %v3230
    %v3232 = vadd.f32 %v3113, %v3231
    %v3233 = vld [vmem:[#allocation3 + $0x100] sm:$0xff]
    %v3234 = vld [vmem:[#allocation3 + $0x108] sm:$0xff]
    %v3235 = vld [vmem:[#allocation3 + $0x110] sm:$0xff]
    %v3236 = vld [vmem:[#allocation3 + $0x118] sm:$0xff]
    %v3237 = vpack.c.bf16 %v3231, %v3231
    %v3239 = vsel %vm2284, %v3237, 0
    %3241 = vmatprep.subr.bf16.mxu0 %v2237
    %3242 = vmatpush1.bf16.msra.mxu0 %v2236
    %3243 = vmatprep.subr.bf16.mxu0 %v2241
    %3244 = vmatpush1.bf16.msra.mxu0 %v2240
    %3245 = vmatprep.subr.bf16.mxu0 %v2245
    %3246 = vmatpush1.bf16.msra.mxu0 %v2244
    %3247 = vmatprep.subr.bf16.mxu0 %v2249
    %3248 = vmatpush1.bf16.msra.mxu0 %v2248
    %3249 = vmatprep.subr.bf16.mxu0 %v2253
    %3250 = vmatpush1.bf16.msra.mxu0 %v2252
    %3251 = vmatprep.subr.bf16.mxu0 %v2257
    %3252 = vmatpush1.bf16.msra.mxu0 %v2256
    %3253 = vmatprep.subr.bf16.mxu0 0
    %3254 = vmatpush1.bf16.msra.mxu0 0
    %3255 = vmatprep.subr.bf16.mxu0 0
    %3256 = vmatpush1.bf16.msra.mxu0 0
    %3257 = vmatprep.subr.bf16.mxu0 0
    %3258 = vmatpush1.bf16.msra.mxu0 0
    %3259 = vmatprep.subr.bf16.mxu0 0
    %3260 = vmatpush1.bf16.msra.mxu0 0
    %3261 = vmatprep.subr.bf16.mxu0 0
    %3262 = vmatpush1.bf16.msra.mxu0 0
    %3263 = vmatprep.subr.bf16.mxu0 0
    %3264 = vmatpush1.bf16.msra.mxu0 0
    %3265 = vmatprep.subr.bf16.mxu0 0
    %3266 = vmatpush1.bf16.msra.mxu0 0
    %3267 = vmatprep.subr.bf16.mxu0 0
    %3268 = vmatpush1.bf16.msra.mxu0 0
    %3269 = vmatprep.subr.bf16.mxu0 0
    %3270 = vmatpush1.bf16.msra.mxu0 0
    %3271 = vmatprep.subr.bf16.mxu0 0
    %3272 = vmatpush1.bf16.msra.mxu0 0
    %3273 = vmatprep.mubr.bf16.mxu0 0
    %3274 = vmatmul.mubr.bf16.gmra.mrb[0].mxu0 %v3239
    %v3275 = vpop.f32.mrb[0].mxu0
    %v3276 = vadd.f32 0.0, %v3275
    %v3277 = vpop.f32.mrb[0].mxu0
    %v3278 = vadd.f32 0.0, %v3277
    %v3279 = vpop.f32.mrb[0].mxu0
    %v3280 = vpop.f32.mrb[0].mxu0
    %3281 = vdwg.mxu0
    %3282 = vmatprep.subr.bf16.mxu0 %v2239
    %3283 = vmatpush1.bf16.msra.mxu0 %v2238
    %3284 = vmatprep.subr.bf16.mxu0 %v2243
    %3285 = vmatpush1.bf16.msra.mxu0 %v2242
    %3286 = vmatprep.subr.bf16.mxu0 %v2247
    %3287 = vmatpush1.bf16.msra.mxu0 %v2246
    %3288 = vmatprep.subr.bf16.mxu0 %v2251
    %3289 = vmatpush1.bf16.msra.mxu0 %v2250
    %3290 = vmatprep.subr.bf16.mxu0 %v2255
    %3291 = vmatpush1.bf16.msra.mxu0 %v2254
    %3292 = vmatprep.subr.bf16.mxu0 %v2259
    %3293 = vmatpush1.bf16.msra.mxu0 %v2258
    %3294 = vmatprep.subr.bf16.mxu0 0
    %3295 = vmatpush1.bf16.msra.mxu0 0
    %3296 = vmatprep.subr.bf16.mxu0 0
    %3297 = vmatpush1.bf16.msra.mxu0 0
    %3298 = vmatprep.subr.bf16.mxu0 0
    %3299 = vmatpush1.bf16.msra.mxu0 0
    %3300 = vmatprep.subr.bf16.mxu0 0
    %3301 = vmatpush1.bf16.msra.mxu0 0
    %3302 = vmatprep.subr.bf16.mxu0 0
    %3303 = vmatpush1.bf16.msra.mxu0 0
    %3304 = vmatprep.subr.bf16.mxu0 0
    %3305 = vmatpush1.bf16.msra.mxu0 0
    %3306 = vmatprep.subr.bf16.mxu0 0
    %3307 = vmatpush1.bf16.msra.mxu0 0
    %3308 = vmatprep.subr.bf16.mxu0 0
    %3309 = vmatpush1.bf16.msra.mxu0 0
    %3310 = vmatprep.subr.bf16.mxu0 0
    %3311 = vmatpush1.bf16.msra.mxu0 0
    %3312 = vmatprep.subr.bf16.mxu0 0
    %3313 = vmatpush1.bf16.msra.mxu0 0
    %3314 = vmatprep.mubr.bf16.mxu0 0
    %3315 = vmatmul.mubr.bf16.gmra.mrb[0].mxu0 %v3239
    %v3316 = vpop.f32.mrb[0].mxu0
    %v3317 = vadd.f32 0.0, %v3316
    %v3318 = vpop.f32.mrb[0].mxu0
    %v3319 = vadd.f32 0.0, %v3318
    %v3320 = vpop.f32.mrb[0].mxu0
    %v3321 = vpop.f32.mrb[0].mxu0
    %3322 = vdwg.mxu0
    %v3323 = vadd.f32 %v3233, %v3276
    %v3324 = vadd.f32 %v3234, %v3278
    %v3325 = vadd.f32 %v3235, %v3317
    %v3326 = vadd.f32 %v3236, %v3319
    %v3327 = vxor.u32 %v3323, 2147483648
    %v3328 = vxor.u32 %v3324, 2147483648
    %v3329 = vxor.u32 %v3325, 2147483648
    %v3330 = vmul.f32 %v3327, 1.442695
    %v3331 = vpow.pop %v3330
    %v3332 = vmul.f32 %v3328, 1.442695
    %v3333 = vpow.pop %v3332
    %v3334 = vmul.f32 %v3329, 1.442695
    %v3335 = vpow.pop %v3334
    %v3336 = vadd.f32 %v3331, 1.0
    %v3337 = vadd.f32 %v3333, 1.0
    %v3338 = vadd.f32 %v3335, 1.0
    %v3339 = vrcp.pop %v3336
    %v3340 = vmul.f32 1.0, %v3339
    %v3341 = vrcp.pop %v3337
    %v3342 = vmul.f32 1.0, %v3341
    %v3343 = vrcp.pop %v3338
    %v3344 = vmul.f32 1.0, %v3343
    %v3345 = vtanh.pop %v3326
    %v3346 = vmul.f32 %v3342, %v3229
    %v3347 = vmul.f32 %v3340, %v3345
    %v3348 = vadd.f32 %v3346, %v3347
    %v3349 = vtanh.pop %v3348
    %v3350 = vmul.f32 %v3344, %v3349
    %v3351 = vadd.f32 %v3232, %v3350
    %v3352 = vld [vmem:[#allocation3 + $0x120] sm:$0xff]
    %v3353 = vld [vmem:[#allocation3 + $0x128] sm:$0xff]
    %v3354 = vld [vmem:[#allocation3 + $0x130] sm:$0xff]
    %v3355 = vld [vmem:[#allocation3 + $0x138] sm:$0xff]
    %v3356 = vpack.c.bf16 %v3350, %v3350
    %v3358 = vsel %vm2284, %v3356, 0
    %3360 = vmatprep.subr.bf16.mxu0 %v2237
    %3361 = vmatpush1.bf16.msra.mxu0 %v2236
    %3362 = vmatprep.subr.bf16.mxu0 %v2241
    %3363 = vmatpush1.bf16.msra.mxu0 %v2240
    %3364 = vmatprep.subr.bf16.mxu0 %v2245
    %3365 = vmatpush1.bf16.msra.mxu0 %v2244
    %3366 = vmatprep.subr.bf16.mxu0 %v2249
    %3367 = vmatpush1.bf16.msra.mxu0 %v2248
    %3368 = vmatprep.subr.bf16.mxu0 %v2253
    %3369 = vmatpush1.bf16.msra.mxu0 %v2252
    %3370 = vmatprep.subr.bf16.mxu0 %v2257
    %3371 = vmatpush1.bf16.msra.mxu0 %v2256
    %3372 = vmatprep.subr.bf16.mxu0 0
    %3373 = vmatpush1.bf16.msra.mxu0 0
    %3374 = vmatprep.subr.bf16.mxu0 0
    %3375 = vmatpush1.bf16.msra.mxu0 0
    %3376 = vmatprep.subr.bf16.mxu0 0
    %3377 = vmatpush1.bf16.msra.mxu0 0
    %3378 = vmatprep.subr.bf16.mxu0 0
    %3379 = vmatpush1.bf16.msra.mxu0 0
    %3380 = vmatprep.subr.bf16.mxu0 0
    %3381 = vmatpush1.bf16.msra.mxu0 0
    %3382 = vmatprep.subr.bf16.mxu0 0
    %3383 = vmatpush1.bf16.msra.mxu0 0
    %3384 = vmatprep.subr.bf16.mxu0 0
    %3385 = vmatpush1.bf16.msra.mxu0 0
    %3386 = vmatprep.subr.bf16.mxu0 0
    %3387 = vmatpush1.bf16.msra.mxu0 0
    %3388 = vmatprep.subr.bf16.mxu0 0
    %3389 = vmatpush1.bf16.msra.mxu0 0
    %3390 = vmatprep.subr.bf16.mxu0 0
    %3391 = vmatpush1.bf16.msra.mxu0 0
    %3392 = vmatprep.mubr.bf16.mxu0 0
    %3393 = vmatmul.mubr.bf16.gmra.mrb[0].mxu0 %v3358
    %v3394 = vpop.f32.mrb[0].mxu0
    %v3395 = vadd.f32 0.0, %v3394
    %v3396 = vpop.f32.mrb[0].mxu0
    %v3397 = vadd.f32 0.0, %v3396
    %v3398 = vpop.f32.mrb[0].mxu0
    %v3399 = vpop.f32.mrb[0].mxu0
    %3400 = vdwg.mxu0
    %3401 = vmatprep.subr.bf16.mxu0 %v2239
    %3402 = vmatpush1.bf16.msra.mxu0 %v2238
    %3403 = vmatprep.subr.bf16.mxu0 %v2243
    %3404 = vmatpush1.bf16.msra.mxu0 %v2242
    %3405 = vmatprep.subr.bf16.mxu0 %v2247
    %3406 = vmatpush1.bf16.msra.mxu0 %v2246
    %3407 = vmatprep.subr.bf16.mxu0 %v2251
    %3408 = vmatpush1.bf16.msra.mxu0 %v2250
    %3409 = vmatprep.subr.bf16.mxu0 %v2255
    %3410 = vmatpush1.bf16.msra.mxu0 %v2254
    %3411 = vmatprep.subr.bf16.mxu0 %v2259
    %3412 = vmatpush1.bf16.msra.mxu0 %v2258
    %3413 = vmatprep.subr.bf16.mxu0 0
    %3414 = vmatpush1.bf16.msra.mxu0 0
    %3415 = vmatprep.subr.bf16.mxu0 0
    %3416 = vmatpush1.bf16.msra.mxu0 0
    %3417 = vmatprep.subr.bf16.mxu0 0
    %3418 = vmatpush1.bf16.msra.mxu0 0
    %3419 = vmatprep.subr.bf16.mxu0 0
    %3420 = vmatpush1.bf16.msra.mxu0 0
    %3421 = vmatprep.subr.bf16.mxu0 0
    %3422 = vmatpush1.bf16.msra.mxu0 0
    %3423 = vmatprep.subr.bf16.mxu0 0
    %3424 = vmatpush1.bf16.msra.mxu0 0
    %3425 = vmatprep.subr.bf16.mxu0 0
    %3426 = vmatpush1.bf16.msra.mxu0 0
    %3427 = vmatprep.subr.bf16.mxu0 0
    %3428 = vmatpush1.bf16.msra.mxu0 0
    %3429 = vmatprep.subr.bf16.mxu0 0
    %3430 = vmatpush1.bf16.msra.mxu0 0
    %3431 = vmatprep.subr.bf16.mxu0 0
    %3432 = vmatpush1.bf16.msra.mxu0 0
    %3433 = vmatprep.mubr.bf16.mxu0 0
    %3434 = vmatmul.mubr.bf16.gmra.mrb[0].mxu0 %v3358
    %v3435 = vpop.f32.mrb[0].mxu0
    %v3436 = vadd.f32 0.0, %v3435
    %v3437 = vpop.f32.mrb[0].mxu0
    %v3438 = vadd.f32 0.0, %v3437
    %v3439 = vpop.f32.mrb[0].mxu0
    %v3440 = vpop.f32.mrb[0].mxu0
    %3441 = vdwg.mxu0
    %v3442 = vadd.f32 %v3352, %v3395
    %v3443 = vadd.f32 %v3353, %v3397
    %v3444 = vadd.f32 %v3354, %v3436
    %v3445 = vadd.f32 %v3355, %v3438
    %v3446 = vxor.u32 %v3442, 2147483648
    %v3447 = vxor.u32 %v3443, 2147483648
    %v3448 = vxor.u32 %v3444, 2147483648
    %v3449 = vmul.f32 %v3446, 1.442695
    %v3450 = vpow.pop %v3449
    %v3451 = vmul.f32 %v3447, 1.442695
    %v3452 = vpow.pop %v3451
    %v3453 = vmul.f32 %v3448, 1.442695
    %v3454 = vpow.pop %v3453
    %v3455 = vadd.f32 %v3450, 1.0
    %v3456 = vadd.f32 %v3452, 1.0
    %v3457 = vadd.f32 %v3454, 1.0
    %v3458 = vrcp.pop %v3455
    %v3459 = vmul.f32 1.0, %v3458
    %v3460 = vrcp.pop %v3456
    %v3461 = vmul.f32 1.0, %v3460
    %v3462 = vrcp.pop %v3457
    %v3463 = vmul.f32 1.0, %v3462
    %v3464 = vtanh.pop %v3445
    %v3465 = vmul.f32 %v3461, %v3348
    %v3466 = vmul.f32 %v3459, %v3464
    %v3467 = vadd.f32 %v3465, %v3466
    %v3468 = vtanh.pop %v3467
    %v3469 = vmul.f32 %v3463, %v3468
    %v3470 = vadd.f32 %v3351, %v3469
    %v3471 = vld [vmem:[#allocation3 + $0x140] sm:$0xff]
    %v3472 = vld [vmem:[#allocation3 + $0x148] sm:$0xff]
    %v3473 = vld [vmem:[#allocation3 + $0x150] sm:$0xff]
    %v3474 = vld [vmem:[#allocation3 + $0x158] sm:$0xff]
    %v3475 = vpack.c.bf16 %v3469, %v3469
    %v3477 = vsel %vm2284, %v3475, 0
    %3479 = vmatprep.subr.bf16.mxu0 %v2237
    %3480 = vmatpush1.bf16.msra.mxu0 %v2236
    %3481 = vmatprep.subr.bf16.mxu0 %v2241
    %3482 = vmatpush1.bf16.msra.mxu0 %v2240
    %3483 = vmatprep.subr.bf16.mxu0 %v2245
    %3484 = vmatpush1.bf16.msra.mxu0 %v2244
    %3485 = vmatprep.subr.bf16.mxu0 %v2249
    %3486 = vmatpush1.bf16.msra.mxu0 %v2248
    %3487 = vmatprep.subr.bf16.mxu0 %v2253
    %3488 = vmatpush1.bf16.msra.mxu0 %v2252
    %3489 = vmatprep.subr.bf16.mxu0 %v2257
    %3490 = vmatpush1.bf16.msra.mxu0 %v2256
    %3491 = vmatprep.subr.bf16.mxu0 0
    %3492 = vmatpush1.bf16.msra.mxu0 0
    %3493 = vmatprep.subr.bf16.mxu0 0
    %3494 = vmatpush1.bf16.msra.mxu0 0
    %3495 = vmatprep.subr.bf16.mxu0 0
    %3496 = vmatpush1.bf16.msra.mxu0 0
    %3497 = vmatprep.subr.bf16.mxu0 0
    %3498 = vmatpush1.bf16.msra.mxu0 0
    %3499 = vmatprep.subr.bf16.mxu0 0
    %3500 = vmatpush1.bf16.msra.mxu0 0
    %3501 = vmatprep.subr.bf16.mxu0 0
    %3502 = vmatpush1.bf16.msra.mxu0 0
    %3503 = vmatprep.subr.bf16.mxu0 0
    %3504 = vmatpush1.bf16.msra.mxu0 0
    %3505 = vmatprep.subr.bf16.mxu0 0
    %3506 = vmatpush1.bf16.msra.mxu0 0
    %3507 = vmatprep.subr.bf16.mxu0 0
    %3508 = vmatpush1.bf16.msra.mxu0 0
    %3509 = vmatprep.subr.bf16.mxu0 0
    %3510 = vmatpush1.bf16.msra.mxu0 0
    %3511 = vmatprep.mubr.bf16.mxu0 0
    %3512 = vmatmul.mubr.bf16.gmra.mrb[0].mxu0 %v3477
    %v3513 = vpop.f32.mrb[0].mxu0
    %v3514 = vadd.f32 0.0, %v3513
    %v3515 = vpop.f32.mrb[0].mxu0
    %v3516 = vadd.f32 0.0, %v3515
    %v3517 = vpop.f32.mrb[0].mxu0
    %v3518 = vpop.f32.mrb[0].mxu0
    %3519 = vdwg.mxu0
    %3520 = vmatprep.subr.bf16.mxu0 %v2239
    %3521 = vmatpush1.bf16.msra.mxu0 %v2238
    %3522 = vmatprep.subr.bf16.mxu0 %v2243
    %3523 = vmatpush1.bf16.msra.mxu0 %v2242
    %3524 = vmatprep.subr.bf16.mxu0 %v2247
    %3525 = vmatpush1.bf16.msra.mxu0 %v2246
    %3526 = vmatprep.subr.bf16.mxu0 %v2251
    %3527 = vmatpush1.bf16.msra.mxu0 %v2250
    %3528 = vmatprep.subr.bf16.mxu0 %v2255
    %3529 = vmatpush1.bf16.msra.mxu0 %v2254
    %3530 = vmatprep.subr.bf16.mxu0 %v2259
    %3531 = vmatpush1.bf16.msra.mxu0 %v2258
    %3532 = vmatprep.subr.bf16.mxu0 0
    %3533 = vmatpush1.bf16.msra.mxu0 0
    %3534 = vmatprep.subr.bf16.mxu0 0
    %3535 = vmatpush1.bf16.msra.mxu0 0
    %3536 = vmatprep.subr.bf16.mxu0 0
    %3537 = vmatpush1.bf16.msra.mxu0 0
    %3538 = vmatprep.subr.bf16.mxu0 0
    %3539 = vmatpush1.bf16.msra.mxu0 0
    %3540 = vmatprep.subr.bf16.mxu0 0
    %3541 = vmatpush1.bf16.msra.mxu0 0
    %3542 = vmatprep.subr.bf16.mxu0 0
    %3543 = vmatpush1.bf16.msra.mxu0 0
    %3544 = vmatprep.subr.bf16.mxu0 0
    %3545 = vmatpush1.bf16.msra.mxu0 0
    %3546 = vmatprep.subr.bf16.mxu0 0
    %3547 = vmatpush1.bf16.msra.mxu0 0
    %3548 = vmatprep.subr.bf16.mxu0 0
    %3549 = vmatpush1.bf16.msra.mxu0 0
    %3550 = vmatprep.subr.bf16.mxu0 0
    %3551 = vmatpush1.bf16.msra.mxu0 0
    %3552 = vmatprep.mubr.bf16.mxu0 0
    %3553 = vmatmul.mubr.bf16.gmra.mrb[0].mxu0 %v3477
    %v3554 = vpop.f32.mrb[0].mxu0
    %v3555 = vadd.f32 0.0, %v3554
    %v3556 = vpop.f32.mrb[0].mxu0
    %v3557 = vadd.f32 0.0, %v3556
    %v3558 = vpop.f32.mrb[0].mxu0
    %v3559 = vpop.f32.mrb[0].mxu0
    %3560 = vdwg.mxu0
    %v3561 = vadd.f32 %v3471, %v3514
    %v3562 = vadd.f32 %v3472, %v3516
    %v3563 = vadd.f32 %v3473, %v3555
    %v3564 = vadd.f32 %v3474, %v3557
    %v3565 = vxor.u32 %v3561, 2147483648
    %v3566 = vxor.u32 %v3562, 2147483648
    %v3567 = vxor.u32 %v3563, 2147483648
    %v3568 = vmul.f32 %v3565, 1.442695
    %v3569 = vpow.pop %v3568
    %v3570 = vmul.f32 %v3566, 1.442695
    %v3571 = vpow.pop %v3570
    %v3572 = vmul.f32 %v3567, 1.442695
    %v3573 = vpow.pop %v3572
    %v3574 = vadd.f32 %v3569, 1.0
    %v3575 = vadd.f32 %v3571, 1.0
    %v3576 = vadd.f32 %v3573, 1.0
    %v3577 = vrcp.pop %v3574
    %v3578 = vmul.f32 1.0, %v3577
    %v3579 = vrcp.pop %v3575
    %v3580 = vmul.f32 1.0, %v3579
    %v3581 = vrcp.pop %v3576
    %v3582 = vmul.f32 1.0, %v3581
    %v3583 = vtanh.pop %v3564
    %v3584 = vmul.f32 %v3580, %v3467
    %v3585 = vmul.f32 %v3578, %v3583
    %v3586 = vadd.f32 %v3584, %v3585
    %v3587 = vtanh.pop %v3586
    %v3588 = vmul.f32 %v3582, %v3587
    %v3589 = vadd.f32 %v3470, %v3588
    %v3590 = vld [vmem:[#allocation3 + $0x160] sm:$0xff]
    %v3591 = vld [vmem:[#allocation3 + $0x168] sm:$0xff]
    %v3592 = vld [vmem:[#allocation3 + $0x170] sm:$0xff]
    %v3593 = vld [vmem:[#allocation3 + $0x178] sm:$0xff]
    %v3594 = vpack.c.bf16 %v3588, %v3588
    %v3596 = vsel %vm2284, %v3594, 0
    %3598 = vmatprep.subr.bf16.mxu0 %v2237
    %3599 = vmatpush1.bf16.msra.mxu0 %v2236
    %3600 = vmatprep.subr.bf16.mxu0 %v2241
    %3601 = vmatpush1.bf16.msra.mxu0 %v2240
    %3602 = vmatprep.subr.bf16.mxu0 %v2245
    %3603 = vmatpush1.bf16.msra.mxu0 %v2244
    %3604 = vmatprep.subr.bf16.mxu0 %v2249
    %3605 = vmatpush1.bf16.msra.mxu0 %v2248
    %3606 = vmatprep.subr.bf16.mxu0 %v2253
    %3607 = vmatpush1.bf16.msra.mxu0 %v2252
    %3608 = vmatprep.subr.bf16.mxu0 %v2257
    %3609 = vmatpush1.bf16.msra.mxu0 %v2256
    %3610 = vmatprep.subr.bf16.mxu0 0
    %3611 = vmatpush1.bf16.msra.mxu0 0
    %3612 = vmatprep.subr.bf16.mxu0 0
    %3613 = vmatpush1.bf16.msra.mxu0 0
    %3614 = vmatprep.subr.bf16.mxu0 0
    %3615 = vmatpush1.bf16.msra.mxu0 0
    %3616 = vmatprep.subr.bf16.mxu0 0
    %3617 = vmatpush1.bf16.msra.mxu0 0
    %3618 = vmatprep.subr.bf16.mxu0 0
    %3619 = vmatpush1.bf16.msra.mxu0 0
    %3620 = vmatprep.subr.bf16.mxu0 0
    %3621 = vmatpush1.bf16.msra.mxu0 0
    %3622 = vmatprep.subr.bf16.mxu0 0
    %3623 = vmatpush1.bf16.msra.mxu0 0
    %3624 = vmatprep.subr.bf16.mxu0 0
    %3625 = vmatpush1.bf16.msra.mxu0 0
    %3626 = vmatprep.subr.bf16.mxu0 0
    %3627 = vmatpush1.bf16.msra.mxu0 0
    %3628 = vmatprep.subr.bf16.mxu0 0
    %3629 = vmatpush1.bf16.msra.mxu0 0
    %3630 = vmatprep.mubr.bf16.mxu0 0
    %3631 = vmatmul.mubr.bf16.gmra.mrb[0].mxu0 %v3596
    %v3632 = vpop.f32.mrb[0].mxu0
    %v3633 = vadd.f32 0.0, %v3632
    %v3634 = vpop.f32.mrb[0].mxu0
    %v3635 = vadd.f32 0.0, %v3634
    %v3636 = vpop.f32.mrb[0].mxu0
    %v3637 = vpop.f32.mrb[0].mxu0
    %3638 = vdwg.mxu0
    %3639 = vmatprep.subr.bf16.mxu0 %v2239
    %3640 = vmatpush1.bf16.msra.mxu0 %v2238
    %3641 = vmatprep.subr.bf16.mxu0 %v2243
    %3642 = vmatpush1.bf16.msra.mxu0 %v2242
    %3643 = vmatprep.subr.bf16.mxu0 %v2247
    %3644 = vmatpush1.bf16.msra.mxu0 %v2246
    %3645 = vmatprep.subr.bf16.mxu0 %v2251
    %3646 = vmatpush1.bf16.msra.mxu0 %v2250
    %3647 = vmatprep.subr.bf16.mxu0 %v2255
    %3648 = vmatpush1.bf16.msra.mxu0 %v2254
    %3649 = vmatprep.subr.bf16.mxu0 %v2259
    %3650 = vmatpush1.bf16.msra.mxu0 %v2258
    %3651 = vmatprep.subr.bf16.mxu0 0
    %3652 = vmatpush1.bf16.msra.mxu0 0
    %3653 = vmatprep.subr.bf16.mxu0 0
    %3654 = vmatpush1.bf16.msra.mxu0 0
    %3655 = vmatprep.subr.bf16.mxu0 0
    %3656 = vmatpush1.bf16.msra.mxu0 0
    %3657 = vmatprep.subr.bf16.mxu0 0
    %3658 = vmatpush1.bf16.msra.mxu0 0
    %3659 = vmatprep.subr.bf16.mxu0 0
    %3660 = vmatpush1.bf16.msra.mxu0 0
    %3661 = vmatprep.subr.bf16.mxu0 0
    %3662 = vmatpush1.bf16.msra.mxu0 0
    %3663 = vmatprep.subr.bf16.mxu0 0
    %3664 = vmatpush1.bf16.msra.mxu0 0
    %3665 = vmatprep.subr.bf16.mxu0 0
    %3666 = vmatpush1.bf16.msra.mxu0 0
    %3667 = vmatprep.subr.bf16.mxu0 0
    %3668 = vmatpush1.bf16.msra.mxu0 0
    %3669 = vmatprep.subr.bf16.mxu0 0
    %3670 = vmatpush1.bf16.msra.mxu0 0
    %3671 = vmatprep.mubr.bf16.mxu0 0
    %3672 = vmatmul.mubr.bf16.gmra.mrb[0].mxu0 %v3596
    %v3673 = vpop.f32.mrb[0].mxu0
    %v3674 = vadd.f32 0.0, %v3673
    %v3675 = vpop.f32.mrb[0].mxu0
    %v3676 = vadd.f32 0.0, %v3675
    %v3677 = vpop.f32.mrb[0].mxu0
    %v3678 = vpop.f32.mrb[0].mxu0
    %3679 = vdwg.mxu0
    %v3680 = vadd.f32 %v3590, %v3633
    %v3681 = vadd.f32 %v3591, %v3635
    %v3682 = vadd.f32 %v3592, %v3674
    %v3683 = vadd.f32 %v3593, %v3676
    %v3684 = vxor.u32 %v3680, 2147483648
    %v3685 = vxor.u32 %v3681, 2147483648
    %v3686 = vxor.u32 %v3682, 2147483648
    %v3687 = vmul.f32 %v3684, 1.442695
    %v3688 = vpow.pop %v3687
    %v3689 = vmul.f32 %v3685, 1.442695
    %v3690 = vpow.pop %v3689
    %v3691 = vmul.f32 %v3686, 1.442695
    %v3692 = vpow.pop %v3691
    %v3693 = vadd.f32 %v3688, 1.0
    %v3694 = vadd.f32 %v3690, 1.0
    %v3695 = vadd.f32 %v3692, 1.0
    %v3696 = vrcp.pop %v3693
    %v3697 = vmul.f32 1.0, %v3696
    %v3698 = vrcp.pop %v3694
    %v3699 = vmul.f32 1.0, %v3698
    %v3700 = vrcp.pop %v3695
    %v3701 = vmul.f32 1.0, %v3700
    %v3702 = vtanh.pop %v3683
    %v3703 = vmul.f32 %v3699, %v3586
    %v3704 = vmul.f32 %v3697, %v3702
    %v3705 = vadd.f32 %v3703, %v3704
    %v3706 = vtanh.pop %v3705
    %v3707 = vmul.f32 %v3701, %v3706
    %v3708 = vadd.f32 %v3589, %v3707
    %v3709 = vld [vmem:[#allocation3 + $0x180] sm:$0xff]
    %v3710 = vld [vmem:[#allocation3 + $0x188] sm:$0xff]
    %v3711 = vld [vmem:[#allocation3 + $0x190] sm:$0xff]
    %v3712 = vld [vmem:[#allocation3 + $0x198] sm:$0xff]
    %v3713 = vpack.c.bf16 %v3707, %v3707
    %v3715 = vsel %vm2284, %v3713, 0
    %3717 = vmatprep.subr.bf16.mxu0 %v2237
    %3718 = vmatpush1.bf16.msra.mxu0 %v2236
    %3719 = vmatprep.subr.bf16.mxu0 %v2241
    %3720 = vmatpush1.bf16.msra.mxu0 %v2240
    %3721 = vmatprep.subr.bf16.mxu0 %v2245
    %3722 = vmatpush1.bf16.msra.mxu0 %v2244
    %3723 = vmatprep.subr.bf16.mxu0 %v2249
    %3724 = vmatpush1.bf16.msra.mxu0 %v2248
    %3725 = vmatprep.subr.bf16.mxu0 %v2253
    %3726 = vmatpush1.bf16.msra.mxu0 %v2252
    %3727 = vmatprep.subr.bf16.mxu0 %v2257
    %3728 = vmatpush1.bf16.msra.mxu0 %v2256
    %3729 = vmatprep.subr.bf16.mxu0 0
    %3730 = vmatpush1.bf16.msra.mxu0 0
    %3731 = vmatprep.subr.bf16.mxu0 0
    %3732 = vmatpush1.bf16.msra.mxu0 0
    %3733 = vmatprep.subr.bf16.mxu0 0
    %3734 = vmatpush1.bf16.msra.mxu0 0
    %3735 = vmatprep.subr.bf16.mxu0 0
    %3736 = vmatpush1.bf16.msra.mxu0 0
    %3737 = vmatprep.subr.bf16.mxu0 0
    %3738 = vmatpush1.bf16.msra.mxu0 0
    %3739 = vmatprep.subr.bf16.mxu0 0
    %3740 = vmatpush1.bf16.msra.mxu0 0
    %3741 = vmatprep.subr.bf16.mxu0 0
    %3742 = vmatpush1.bf16.msra.mxu0 0
    %3743 = vmatprep.subr.bf16.mxu0 0
    %3744 = vmatpush1.bf16.msra.mxu0 0
    %3745 = vmatprep.subr.bf16.mxu0 0
    %3746 = vmatpush1.bf16.msra.mxu0 0
    %3747 = vmatprep.subr.bf16.mxu0 0
    %3748 = vmatpush1.bf16.msra.mxu0 0
    %3749 = vmatprep.mubr.bf16.mxu0 0
    %3750 = vmatmul.mubr.bf16.gmra.mrb[0].mxu0 %v3715
    %v3751 = vpop.f32.mrb[0].mxu0
    %v3752 = vadd.f32 0.0, %v3751
    %v3753 = vpop.f32.mrb[0].mxu0
    %v3754 = vadd.f32 0.0, %v3753
    %v3755 = vpop.f32.mrb[0].mxu0
    %v3756 = vpop.f32.mrb[0].mxu0
    %3757 = vdwg.mxu0
    %3758 = vmatprep.subr.bf16.mxu0 %v2239
    %3759 = vmatpush1.bf16.msra.mxu0 %v2238
    %3760 = vmatprep.subr.bf16.mxu0 %v2243
    %3761 = vmatpush1.bf16.msra.mxu0 %v2242
    %3762 = vmatprep.subr.bf16.mxu0 %v2247
    %3763 = vmatpush1.bf16.msra.mxu0 %v2246
    %3764 = vmatprep.subr.bf16.mxu0 %v2251
    %3765 = vmatpush1.bf16.msra.mxu0 %v2250
    %3766 = vmatprep.subr.bf16.mxu0 %v2255
    %3767 = vmatpush1.bf16.msra.mxu0 %v2254
    %3768 = vmatprep.subr.bf16.mxu0 %v2259
    %3769 = vmatpush1.bf16.msra.mxu0 %v2258
    %3770 = vmatprep.subr.bf16.mxu0 0
    %3771 = vmatpush1.bf16.msra.mxu0 0
    %3772 = vmatprep.subr.bf16.mxu0 0
    %3773 = vmatpush1.bf16.msra.mxu0 0
    %3774 = vmatprep.subr.bf16.mxu0 0
    %3775 = vmatpush1.bf16.msra.mxu0 0
    %3776 = vmatprep.subr.bf16.mxu0 0
    %3777 = vmatpush1.bf16.msra.mxu0 0
    %3778 = vmatprep.subr.bf16.mxu0 0
    %3779 = vmatpush1.bf16.msra.mxu0 0
    %3780 = vmatprep.subr.bf16.mxu0 0
    %3781 = vmatpush1.bf16.msra.mxu0 0
    %3782 = vmatprep.subr.bf16.mxu0 0
    %3783 = vmatpush1.bf16.msra.mxu0 0
    %3784 = vmatprep.subr.bf16.mxu0 0
    %3785 = vmatpush1.bf16.msra.mxu0 0
    %3786 = vmatprep.subr.bf16.mxu0 0
    %3787 = vmatpush1.bf16.msra.mxu0 0
    %3788 = vmatprep.subr.bf16.mxu0 0
    %3789 = vmatpush1.bf16.msra.mxu0 0
    %3790 = vmatprep.mubr.bf16.mxu0 0
    %3791 = vmatmul.mubr.bf16.gmra.mrb[0].mxu0 %v3715
    %v3792 = vpop.f32.mrb[0].mxu0
    %v3793 = vadd.f32 0.0, %v3792
    %v3794 = vpop.f32.mrb[0].mxu0
    %v3795 = vadd.f32 0.0, %v3794
    %v3796 = vpop.f32.mrb[0].mxu0
    %v3797 = vpop.f32.mrb[0].mxu0
    %3798 = vdwg.mxu0
    %v3799 = vadd.f32 %v3709, %v3752
    %v3800 = vadd.f32 %v3710, %v3754
    %v3801 = vadd.f32 %v3711, %v3793
    %v3802 = vadd.f32 %v3712, %v3795
    %v3803 = vxor.u32 %v3799, 2147483648
    %v3804 = vxor.u32 %v3800, 2147483648
    %v3805 = vxor.u32 %v3801, 2147483648
    %v3806 = vmul.f32 %v3803, 1.442695
    %v3807 = vpow.pop %v3806
    %v3808 = vmul.f32 %v3804, 1.442695
    %v3809 = vpow.pop %v3808
    %v3810 = vmul.f32 %v3805, 1.442695
    %v3811 = vpow.pop %v3810
    %v3812 = vadd.f32 %v3807, 1.0
    %v3813 = vadd.f32 %v3809, 1.0
    %v3814 = vadd.f32 %v3811, 1.0
    %v3815 = vrcp.pop %v3812
    %v3816 = vmul.f32 1.0, %v3815
    %v3817 = vrcp.pop %v3813
    %v3818 = vmul.f32 1.0, %v3817
    %v3819 = vrcp.pop %v3814
    %v3820 = vmul.f32 1.0, %v3819
    %v3821 = vtanh.pop %v3802
    %v3822 = vmul.f32 %v3818, %v3705
    %v3823 = vmul.f32 %v3816, %v3821
    %v3824 = vadd.f32 %v3822, %v3823
    %v3825 = vtanh.pop %v3824
    %v3826 = vmul.f32 %v3820, %v3825
    %v3827 = vadd.f32 %v3708, %v3826
    %v3828 = vld [vmem:[#allocation3 + $0x1a0] sm:$0xff]
    %v3829 = vld [vmem:[#allocation3 + $0x1a8] sm:$0xff]
    %v3830 = vld [vmem:[#allocation3 + $0x1b0] sm:$0xff]
    %v3831 = vld [vmem:[#allocation3 + $0x1b8] sm:$0xff]
    %v3832 = vpack.c.bf16 %v3826, %v3826
    %v3834 = vsel %vm2284, %v3832, 0
    %3836 = vmatprep.subr.bf16.mxu0 %v2237
    %3837 = vmatpush1.bf16.msra.mxu0 %v2236
    %3838 = vmatprep.subr.bf16.mxu0 %v2241
    %3839 = vmatpush1.bf16.msra.mxu0 %v2240
    %3840 = vmatprep.subr.bf16.mxu0 %v2245
    %3841 = vmatpush1.bf16.msra.mxu0 %v2244
    %3842 = vmatprep.subr.bf16.mxu0 %v2249
    %3843 = vmatpush1.bf16.msra.mxu0 %v2248
    %3844 = vmatprep.subr.bf16.mxu0 %v2253
    %3845 = vmatpush1.bf16.msra.mxu0 %v2252
    %3846 = vmatprep.subr.bf16.mxu0 %v2257
    %3847 = vmatpush1.bf16.msra.mxu0 %v2256
    %3848 = vmatprep.subr.bf16.mxu0 0
    %3849 = vmatpush1.bf16.msra.mxu0 0
    %3850 = vmatprep.subr.bf16.mxu0 0
    %3851 = vmatpush1.bf16.msra.mxu0 0
    %3852 = vmatprep.subr.bf16.mxu0 0
    %3853 = vmatpush1.bf16.msra.mxu0 0
    %3854 = vmatprep.subr.bf16.mxu0 0
    %3855 = vmatpush1.bf16.msra.mxu0 0
    %3856 = vmatprep.subr.bf16.mxu0 0
    %3857 = vmatpush1.bf16.msra.mxu0 0
    %3858 = vmatprep.subr.bf16.mxu0 0
    %3859 = vmatpush1.bf16.msra.mxu0 0
    %3860 = vmatprep.subr.bf16.mxu0 0
    %3861 = vmatpush1.bf16.msra.mxu0 0
    %3862 = vmatprep.subr.bf16.mxu0 0
    %3863 = vmatpush1.bf16.msra.mxu0 0
    %3864 = vmatprep.subr.bf16.mxu0 0
    %3865 = vmatpush1.bf16.msra.mxu0 0
    %3866 = vmatprep.subr.bf16.mxu0 0
    %3867 = vmatpush1.bf16.msra.mxu0 0
    %3868 = vmatprep.mubr.bf16.mxu0 0
    %3869 = vmatmul.mubr.bf16.gmra.mrb[0].mxu0 %v3834
    %v3870 = vpop.f32.mrb[0].mxu0
    %v3871 = vadd.f32 0.0, %v3870
    %v3872 = vpop.f32.mrb[0].mxu0
    %v3873 = vadd.f32 0.0, %v3872
    %v3874 = vpop.f32.mrb[0].mxu0
    %v3875 = vpop.f32.mrb[0].mxu0
    %3876 = vdwg.mxu0
    %3877 = vmatprep.subr.bf16.mxu0 %v2239
    %3878 = vmatpush1.bf16.msra.mxu0 %v2238
    %3879 = vmatprep.subr.bf16.mxu0 %v2243
    %3880 = vmatpush1.bf16.msra.mxu0 %v2242
    %3881 = vmatprep.subr.bf16.mxu0 %v2247
    %3882 = vmatpush1.bf16.msra.mxu0 %v2246
    %3883 = vmatprep.subr.bf16.mxu0 %v2251
    %3884 = vmatpush1.bf16.msra.mxu0 %v2250
    %3885 = vmatprep.subr.bf16.mxu0 %v2255
    %3886 = vmatpush1.bf16.msra.mxu0 %v2254
    %3887 = vmatprep.subr.bf16.mxu0 %v2259
    %3888 = vmatpush1.bf16.msra.mxu0 %v2258
    %3889 = vmatprep.subr.bf16.mxu0 0
    %3890 = vmatpush1.bf16.msra.mxu0 0
    %3891 = vmatprep.subr.bf16.mxu0 0
    %3892 = vmatpush1.bf16.msra.mxu0 0
    %3893 = vmatprep.subr.bf16.mxu0 0
    %3894 = vmatpush1.bf16.msra.mxu0 0
    %3895 = vmatprep.subr.bf16.mxu0 0
    %3896 = vmatpush1.bf16.msra.mxu0 0
    %3897 = vmatprep.subr.bf16.mxu0 0
    %3898 = vmatpush1.bf16.msra.mxu0 0
    %3899 = vmatprep.subr.bf16.mxu0 0
    %3900 = vmatpush1.bf16.msra.mxu0 0
    %3901 = vmatprep.subr.bf16.mxu0 0
    %3902 = vmatpush1.bf16.msra.mxu0 0
    %3903 = vmatprep.subr.bf16.mxu0 0
    %3904 = vmatpush1.bf16.msra.mxu0 0
    %3905 = vmatprep.subr.bf16.mxu0 0
    %3906 = vmatpush1.bf16.msra.mxu0 0
    %3907 = vmatprep.subr.bf16.mxu0 0
    %3908 = vmatpush1.bf16.msra.mxu0 0
    %3909 = vmatprep.mubr.bf16.mxu0 0
    %3910 = vmatmul.mubr.bf16.gmra.mrb[0].mxu0 %v3834
    %v3911 = vpop.f32.mrb[0].mxu0
    %v3912 = vadd.f32 0.0, %v3911
    %v3913 = vpop.f32.mrb[0].mxu0
    %v3914 = vadd.f32 0.0, %v3913
    %v3915 = vpop.f32.mrb[0].mxu0
    %v3916 = vpop.f32.mrb[0].mxu0
    %3917 = vdwg.mxu0
    %v3918 = vadd.f32 %v3828, %v3871
    %v3919 = vadd.f32 %v3829, %v3873
    %v3920 = vadd.f32 %v3830, %v3912
    %v3921 = vadd.f32 %v3831, %v3914
    %v3922 = vxor.u32 %v3918, 2147483648
    %v3923 = vxor.u32 %v3919, 2147483648
    %v3924 = vxor.u32 %v3920, 2147483648
    %v3925 = vmul.f32 %v3922, 1.442695
    %v3926 = vpow.pop %v3925
    %v3927 = vmul.f32 %v3923, 1.442695
    %v3928 = vpow.pop %v3927
    %v3929 = vmul.f32 %v3924, 1.442695
    %v3930 = vpow.pop %v3929
    %v3931 = vadd.f32 %v3926, 1.0
    %v3932 = vadd.f32 %v3928, 1.0
    %v3933 = vadd.f32 %v3930, 1.0
    %v3934 = vrcp.pop %v3931
    %v3935 = vmul.f32 1.0, %v3934
    %v3936 = vrcp.pop %v3932
    %v3937 = vmul.f32 1.0, %v3936
    %v3938 = vrcp.pop %v3933
    %v3939 = vmul.f32 1.0, %v3938
    %v3940 = vtanh.pop %v3921
    %v3941 = vmul.f32 %v3937, %v3824
    %v3942 = vmul.f32 %v3935, %v3940
    %v3943 = vadd.f32 %v3941, %v3942
    %v3944 = vtanh.pop %v3943
    %v3945 = vmul.f32 %v3939, %v3944
    %v3946 = vadd.f32 %v3827, %v3945
    %v3947 = vld [vmem:[#allocation3 + $0x1c0] sm:$0xff]
    %v3948 = vld [vmem:[#allocation3 + $0x1c8] sm:$0xff]
    %v3949 = vld [vmem:[#allocation3 + $0x1d0] sm:$0xff]
    %v3950 = vld [vmem:[#allocation3 + $0x1d8] sm:$0xff]
    %v3951 = vpack.c.bf16 %v3945, %v3945
    %v3953 = vsel %vm2284, %v3951, 0
    %3955 = vmatprep.subr.bf16.mxu0 %v2237
    %3956 = vmatpush1.bf16.msra.mxu0 %v2236
    %3957 = vmatprep.subr.bf16.mxu0 %v2241
    %3958 = vmatpush1.bf16.msra.mxu0 %v2240
    %3959 = vmatprep.subr.bf16.mxu0 %v2245
    %3960 = vmatpush1.bf16.msra.mxu0 %v2244
    %3961 = vmatprep.subr.bf16.mxu0 %v2249
    %3962 = vmatpush1.bf16.msra.mxu0 %v2248
    %3963 = vmatprep.subr.bf16.mxu0 %v2253
    %3964 = vmatpush1.bf16.msra.mxu0 %v2252
    %3965 = vmatprep.subr.bf16.mxu0 %v2257
    %3966 = vmatpush1.bf16.msra.mxu0 %v2256
    %3967 = vmatprep.subr.bf16.mxu0 0
    %3968 = vmatpush1.bf16.msra.mxu0 0
    %3969 = vmatprep.subr.bf16.mxu0 0
    %3970 = vmatpush1.bf16.msra.mxu0 0
    %3971 = vmatprep.subr.bf16.mxu0 0
    %3972 = vmatpush1.bf16.msra.mxu0 0
    %3973 = vmatprep.subr.bf16.mxu0 0
    %3974 = vmatpush1.bf16.msra.mxu0 0
    %3975 = vmatprep.subr.bf16.mxu0 0
    %3976 = vmatpush1.bf16.msra.mxu0 0
    %3977 = vmatprep.subr.bf16.mxu0 0
    %3978 = vmatpush1.bf16.msra.mxu0 0
    %3979 = vmatprep.subr.bf16.mxu0 0
    %3980 = vmatpush1.bf16.msra.mxu0 0
    %3981 = vmatprep.subr.bf16.mxu0 0
    %3982 = vmatpush1.bf16.msra.mxu0 0
    %3983 = vmatprep.subr.bf16.mxu0 0
    %3984 = vmatpush1.bf16.msra.mxu0 0
    %3985 = vmatprep.subr.bf16.mxu0 0
    %3986 = vmatpush1.bf16.msra.mxu0 0
    %3987 = vmatprep.mubr.bf16.mxu0 0
    %3988 = vmatmul.mubr.bf16.gmra.mrb[0].mxu0 %v3953
    %v3989 = vpop.f32.mrb[0].mxu0
    %v3990 = vadd.f32 0.0, %v3989
    %v3991 = vpop.f32.mrb[0].mxu0
    %v3992 = vadd.f32 0.0, %v3991
    %v3993 = vpop.f32.mrb[0].mxu0
    %v3994 = vpop.f32.mrb[0].mxu0
    %3995 = vdwg.mxu0
    %3996 = vmatprep.subr.bf16.mxu0 %v2239
    %3997 = vmatpush1.bf16.msra.mxu0 %v2238
    %3998 = vmatprep.subr.bf16.mxu0 %v2243
    %3999 = vmatpush1.bf16.msra.mxu0 %v2242
    %4000 = vmatprep.subr.bf16.mxu0 %v2247
    %4001 = vmatpush1.bf16.msra.mxu0 %v2246
    %4002 = vmatprep.subr.bf16.mxu0 %v2251
    %4003 = vmatpush1.bf16.msra.mxu0 %v2250
    %4004 = vmatprep.subr.bf16.mxu0 %v2255
    %4005 = vmatpush1.bf16.msra.mxu0 %v2254
    %4006 = vmatprep.subr.bf16.mxu0 %v2259
    %4007 = vmatpush1.bf16.msra.mxu0 %v2258
    %4008 = vmatprep.subr.bf16.mxu0 0
    %4009 = vmatpush1.bf16.msra.mxu0 0
    %4010 = vmatprep.subr.bf16.mxu0 0
    %4011 = vmatpush1.bf16.msra.mxu0 0
    %4012 = vmatprep.subr.bf16.mxu0 0
    %4013 = vmatpush1.bf16.msra.mxu0 0
    %4014 = vmatprep.subr.bf16.mxu0 0
    %4015 = vmatpush1.bf16.msra.mxu0 0
    %4016 = vmatprep.subr.bf16.mxu0 0
    %4017 = vmatpush1.bf16.msra.mxu0 0
    %4018 = vmatprep.subr.bf16.mxu0 0
    %4019 = vmatpush1.bf16.msra.mxu0 0
    %4020 = vmatprep.subr.bf16.mxu0 0
    %4021 = vmatpush1.bf16.msra.mxu0 0
    %4022 = vmatprep.subr.bf16.mxu0 0
    %4023 = vmatpush1.bf16.msra.mxu0 0
    %4024 = vmatprep.subr.bf16.mxu0 0
    %4025 = vmatpush1.bf16.msra.mxu0 0
    %4026 = vmatprep.subr.bf16.mxu0 0
    %4027 = vmatpush1.bf16.msra.mxu0 0
    %4028 = vmatprep.mubr.bf16.mxu0 0
    %4029 = vmatmul.mubr.bf16.gmra.mrb[0].mxu0 %v3953
    %v4030 = vpop.f32.mrb[0].mxu0
    %v4031 = vadd.f32 0.0, %v4030
    %v4032 = vpop.f32.mrb[0].mxu0
    %v4033 = vadd.f32 0.0, %v4032
    %v4034 = vpop.f32.mrb[0].mxu0
    %v4035 = vpop.f32.mrb[0].mxu0
    %4036 = vdwg.mxu0
    %v4037 = vadd.f32 %v3947, %v3990
    %v4038 = vadd.f32 %v3948, %v3992
    %v4039 = vadd.f32 %v3949, %v4031
    %v4040 = vadd.f32 %v3950, %v4033
    %v4041 = vxor.u32 %v4037, 2147483648
    %v4042 = vxor.u32 %v4038, 2147483648
    %v4043 = vxor.u32 %v4039, 2147483648
    %v4044 = vmul.f32 %v4041, 1.442695
    %v4045 = vpow.pop %v4044
    %v4046 = vmul.f32 %v4042, 1.442695
    %v4047 = vpow.pop %v4046
    %v4048 = vmul.f32 %v4043, 1.442695
    %v4049 = vpow.pop %v4048
    %v4050 = vadd.f32 %v4045, 1.0
    %v4051 = vadd.f32 %v4047, 1.0
    %v4052 = vadd.f32 %v4049, 1.0
    %v4053 = vrcp.pop %v4050
    %v4054 = vmul.f32 1.0, %v4053
    %v4055 = vrcp.pop %v4051
    %v4056 = vmul.f32 1.0, %v4055
    %v4057 = vrcp.pop %v4052
    %v4058 = vmul.f32 1.0, %v4057
    %v4059 = vtanh.pop %v4040
    %v4060 = vmul.f32 %v4056, %v3943
    %v4061 = vmul.f32 %v4054, %v4059
    %v4062 = vadd.f32 %v4060, %v4061
    %v4063 = vtanh.pop %v4062
    %v4064 = vmul.f32 %v4058, %v4063
    %v4065 = vadd.f32 %v3946, %v4064
    %v4066 = vld [vmem:[#allocation3 + $0x1e0] sm:$0xff]
    %v4067 = vld [vmem:[#allocation3 + $0x1e8] sm:$0xff]
    %v4068 = vld [vmem:[#allocation3 + $0x1f0] sm:$0xff]
    %v4069 = vld [vmem:[#allocation3 + $0x1f8] sm:$0xff]
    %v4070 = vpack.c.bf16 %v4064, %v4064
    %v4072 = vsel %vm2284, %v4070, 0
    %4074 = vmatprep.subr.bf16.mxu0 %v2237
    %4075 = vmatpush1.bf16.msra.mxu0 %v2236
    %4076 = vmatprep.subr.bf16.mxu0 %v2241
    %4077 = vmatpush1.bf16.msra.mxu0 %v2240
    %4078 = vmatprep.subr.bf16.mxu0 %v2245
    %4079 = vmatpush1.bf16.msra.mxu0 %v2244
    %4080 = vmatprep.subr.bf16.mxu0 %v2249
    %4081 = vmatpush1.bf16.msra.mxu0 %v2248
    %4082 = vmatprep.subr.bf16.mxu0 %v2253
    %4083 = vmatpush1.bf16.msra.mxu0 %v2252
    %4084 = vmatprep.subr.bf16.mxu0 %v2257
    %4085 = vmatpush1.bf16.msra.mxu0 %v2256
    %4086 = vmatprep.subr.bf16.mxu0 0
    %4087 = vmatpush1.bf16.msra.mxu0 0
    %4088 = vmatprep.subr.bf16.mxu0 0
    %4089 = vmatpush1.bf16.msra.mxu0 0
    %4090 = vmatprep.subr.bf16.mxu0 0
    %4091 = vmatpush1.bf16.msra.mxu0 0
    %4092 = vmatprep.subr.bf16.mxu0 0
    %4093 = vmatpush1.bf16.msra.mxu0 0
    %4094 = vmatprep.subr.bf16.mxu0 0
    %4095 = vmatpush1.bf16.msra.mxu0 0
    %4096 = vmatprep.subr.bf16.mxu0 0
    %4097 = vmatpush1.bf16.msra.mxu0 0
    %4098 = vmatprep.subr.bf16.mxu0 0
    %4099 = vmatpush1.bf16.msra.mxu0 0
    %4100 = vmatprep.subr.bf16.mxu0 0
    %4101 = vmatpush1.bf16.msra.mxu0 0
    %4102 = vmatprep.subr.bf16.mxu0 0
    %4103 = vmatpush1.bf16.msra.mxu0 0
    %4104 = vmatprep.subr.bf16.mxu0 0
    %4105 = vmatpush1.bf16.msra.mxu0 0
    %4106 = vmatprep.mubr.bf16.mxu0 0
    %4107 = vmatmul.mubr.bf16.gmra.mrb[0].mxu0 %v4072
    %v4108 = vpop.f32.mrb[0].mxu0
    %v4109 = vadd.f32 0.0, %v4108
    %v4110 = vpop.f32.mrb[0].mxu0
    %v4111 = vadd.f32 0.0, %v4110
    %v4112 = vpop.f32.mrb[0].mxu0
    %v4113 = vpop.f32.mrb[0].mxu0
    %4114 = vdwg.mxu0
    %4115 = vmatprep.subr.bf16.mxu0 %v2239
    %4116 = vmatpush1.bf16.msra.mxu0 %v2238
    %4117 = vmatprep.subr.bf16.mxu0 %v2243
    %4118 = vmatpush1.bf16.msra.mxu0 %v2242
    %4119 = vmatprep.subr.bf16.mxu0 %v2247
    %4120 = vmatpush1.bf16.msra.mxu0 %v2246
    %4121 = vmatprep.subr.bf16.mxu0 %v2251
    %4122 = vmatpush1.bf16.msra.mxu0 %v2250
    %4123 = vmatprep.subr.bf16.mxu0 %v2255
    %4124 = vmatpush1.bf16.msra.mxu0 %v2254
    %4125 = vmatprep.subr.bf16.mxu0 %v2259
    %4126 = vmatpush1.bf16.msra.mxu0 %v2258
    %4127 = vmatprep.subr.bf16.mxu0 0
    %4128 = vmatpush1.bf16.msra.mxu0 0
    %4129 = vmatprep.subr.bf16.mxu0 0
    %4130 = vmatpush1.bf16.msra.mxu0 0
    %4131 = vmatprep.subr.bf16.mxu0 0
    %4132 = vmatpush1.bf16.msra.mxu0 0
    %4133 = vmatprep.subr.bf16.mxu0 0
    %4134 = vmatpush1.bf16.msra.mxu0 0
    %4135 = vmatprep.subr.bf16.mxu0 0
    %4136 = vmatpush1.bf16.msra.mxu0 0
    %4137 = vmatprep.subr.bf16.mxu0 0
    %4138 = vmatpush1.bf16.msra.mxu0 0
    %4139 = vmatprep.subr.bf16.mxu0 0
    %4140 = vmatpush1.bf16.msra.mxu0 0
    %4141 = vmatprep.subr.bf16.mxu0 0
    %4142 = vmatpush1.bf16.msra.mxu0 0
    %4143 = vmatprep.subr.bf16.mxu0 0
    %4144 = vmatpush1.bf16.msra.mxu0 0
    %4145 = vmatprep.subr.bf16.mxu0 0
    %4146 = vmatpush1.bf16.msra.mxu0 0
    %4147 = vmatprep.mubr.bf16.mxu0 0
    %4148 = vmatmul.mubr.bf16.gmra.mrb[0].mxu0 %v4072
    %v4149 = vpop.f32.mrb[0].mxu0
    %v4150 = vadd.f32 0.0, %v4149
    %v4151 = vpop.f32.mrb[0].mxu0
    %v4152 = vadd.f32 0.0, %v4151
    %v4153 = vpop.f32.mrb[0].mxu0
    %v4154 = vpop.f32.mrb[0].mxu0
    %4155 = vdwg.mxu0
    %v4156 = vadd.f32 %v4066, %v4109
    %v4157 = vadd.f32 %v4067, %v4111
    %v4158 = vadd.f32 %v4068, %v4150
    %v4159 = vadd.f32 %v4069, %v4152
    %v4160 = vxor.u32 %v4156, 2147483648
    %v4161 = vxor.u32 %v4157, 2147483648
    %v4162 = vxor.u32 %v4158, 2147483648
    %v4163 = vmul.f32 %v4160, 1.442695
    %v4164 = vpow.pop %v4163
    %v4165 = vmul.f32 %v4161, 1.442695
    %v4166 = vpow.pop %v4165
    %v4167 = vmul.f32 %v4162, 1.442695
    %v4168 = vpow.pop %v4167
    %v4169 = vadd.f32 %v4164, 1.0
    %v4170 = vadd.f32 %v4166, 1.0
    %v4171 = vadd.f32 %v4168, 1.0
    %v4172 = vrcp.pop %v4169
    %v4173 = vmul.f32 1.0, %v4172
    %v4174 = vrcp.pop %v4170
    %v4175 = vmul.f32 1.0, %v4174
    %v4176 = vrcp.pop %v4171
    %v4177 = vmul.f32 1.0, %v4176
    %v4178 = vtanh.pop %v4159
    %v4179 = vmul.f32 %v4175, %v4062
    %v4180 = vmul.f32 %v4173, %v4178
    %v4181 = vadd.f32 %v4179, %v4180
    %v4182 = vtanh.pop %v4181
    %v4183 = vmul.f32 %v4177, %v4182
    %v4184 = vadd.f32 %v4065, %v4183
    %v4185 = vpack.c.bf16 %v4183, %v4183
    %v4187 = vsel %vm2284, %v4185, 0
    %4189 = vmatprep.subr.bf16.mxu0 %v2237
    %4190 = vmatpush1.bf16.msra.mxu0 %v2236
    %4191 = vmatprep.subr.bf16.mxu0 %v2241
    %4192 = vmatpush1.bf16.msra.mxu0 %v2240
    %4193 = vmatprep.subr.bf16.mxu0 %v2245
    %4194 = vmatpush1.bf16.msra.mxu0 %v2244
    %4195 = vmatprep.subr.bf16.mxu0 %v2249
    %4196 = vmatpush1.bf16.msra.mxu0 %v2248
    %4197 = vmatprep.subr.bf16.mxu0 %v2253
    %4198 = vmatpush1.bf16.msra.mxu0 %v2252
    %4199 = vmatprep.subr.bf16.mxu0 %v2257
    %4200 = vmatpush1.bf16.msra.mxu0 %v2256
    %4201 = vmatprep.subr.bf16.mxu0 0
    %4202 = vmatpush1.bf16.msra.mxu0 0
    %4203 = vmatprep.subr.bf16.mxu0 0
    %4204 = vmatpush1.bf16.msra.mxu0 0
    %4205 = vmatprep.subr.bf16.mxu0 0
    %4206 = vmatpush1.bf16.msra.mxu0 0
    %4207 = vmatprep.subr.bf16.mxu0 0
    %4208 = vmatpush1.bf16.msra.mxu0 0
    %4209 = vmatprep.subr.bf16.mxu0 0
    %4210 = vmatpush1.bf16.msra.mxu0 0
    %4211 = vmatprep.subr.bf16.mxu0 0
    %4212 = vmatpush1.bf16.msra.mxu0 0
    %4213 = vmatprep.subr.bf16.mxu0 0
    %4214 = vmatpush1.bf16.msra.mxu0 0
    %4215 = vmatprep.subr.bf16.mxu0 0
    %4216 = vmatpush1.bf16.msra.mxu0 0
    %4217 = vmatprep.subr.bf16.mxu0 0
    %4218 = vmatpush1.bf16.msra.mxu0 0
    %4219 = vmatprep.subr.bf16.mxu0 0
    %4220 = vmatpush1.bf16.msra.mxu0 0
    %4221 = vmatprep.mubr.bf16.mxu0 0
    %4222 = vmatmul.mubr.bf16.gmra.mrb[0].mxu0 %v4187
    %v4223 = vpop.f32.mrb[0].mxu0
    %v4224 = vadd.f32 0.0, %v4223
    %v4225 = vpop.f32.mrb[0].mxu0
    %v4226 = vadd.f32 0.0, %v4225
    %v4227 = vpop.f32.mrb[0].mxu0
    %v4228 = vpop.f32.mrb[0].mxu0
    %4229 = vdwg.mxu0
    %4230 = vmatprep.subr.bf16.mxu0 %v2239
    %4231 = vmatpush1.bf16.msra.mxu0 %v2238
    %4232 = vmatprep.subr.bf16.mxu0 %v2243
    %4233 = vmatpush1.bf16.msra.mxu0 %v2242
    %4234 = vmatprep.subr.bf16.mxu0 %v2247
    %4235 = vmatpush1.bf16.msra.mxu0 %v2246
    %4236 = vmatprep.subr.bf16.mxu0 %v2251
    %4237 = vmatpush1.bf16.msra.mxu0 %v2250
    %4238 = vmatprep.subr.bf16.mxu0 %v2255
    %4239 = vmatpush1.bf16.msra.mxu0 %v2254
    %4240 = vmatprep.subr.bf16.mxu0 %v2259
    %4241 = vmatpush1.bf16.msra.mxu0 %v2258
    %4242 = vmatprep.subr.bf16.mxu0 0
    %4243 = vmatpush1.bf16.msra.mxu0 0
    %4244 = vmatprep.subr.bf16.mxu0 0
    %4245 = vmatpush1.bf16.msra.mxu0 0
    %4246 = vmatprep.subr.bf16.mxu0 0
    %4247 = vmatpush1.bf16.msra.mxu0 0
    %4248 = vmatprep.subr.bf16.mxu0 0
    %4249 = vmatpush1.bf16.msra.mxu0 0
    %4250 = vmatprep.subr.bf16.mxu0 0
    %4251 = vmatpush1.bf16.msra.mxu0 0
    %4252 = vmatprep.subr.bf16.mxu0 0
    %4253 = vmatpush1.bf16.msra.mxu0 0
    %4254 = vmatprep.subr.bf16.mxu0 0
    %4255 = vmatpush1.bf16.msra.mxu0 0
    %4256 = vmatprep.subr.bf16.mxu0 0
    %4257 = vmatpush1.bf16.msra.mxu0 0
    %4258 = vmatprep.subr.bf16.mxu0 0
    %4259 = vmatpush1.bf16.msra.mxu0 0
    %4260 = vmatprep.subr.bf16.mxu0 0
    %4261 = vmatpush1.bf16.msra.mxu0 0
    %4262 = vmatprep.mubr.bf16.mxu0 0
    %4263 = vmatmul.mubr.bf16.gmra.mrb[0].mxu0 %v4187
    %v4264 = vpop.f32.mrb[0].mxu0
    %v4265 = vadd.f32 0.0, %v4264
    %v4266 = vpop.f32.mrb[0].mxu0
    %v4267 = vadd.f32 0.0, %v4266
    %v4268 = vpop.f32.mrb[0].mxu0
    %v4269 = vpop.f32.mrb[0].mxu0
    %4270 = vdwg.mxu0
    %v4271 = vadd.f32 %v4066, %v4224
    %v4272 = vadd.f32 %v4067, %v4226
    %v4273 = vadd.f32 %v4068, %v4265
    %v4274 = vadd.f32 %v4069, %v4267
    %v4275 = vxor.u32 %v4271, 2147483648
    %v4276 = vxor.u32 %v4272, 2147483648
    %v4277 = vxor.u32 %v4273, 2147483648
    %v4278 = vmul.f32 %v4275, 1.442695
    %v4279 = vpow.pop %v4278
    %v4280 = vmul.f32 %v4276, 1.442695
    %v4281 = vpow.pop %v4280
    %v4282 = vmul.f32 %v4277, 1.442695
    %v4283 = vpow.pop %v4282
    %v4284 = vadd.f32 %v4279, 1.0
    %v4285 = vadd.f32 %v4281, 1.0
    %v4286 = vadd.f32 %v4283, 1.0
    %v4287 = vrcp.pop %v4284
    %v4288 = vmul.f32 1.0, %v4287
    %v4289 = vrcp.pop %v4285
    %v4290 = vmul.f32 1.0, %v4289
    %v4291 = vrcp.pop %v4286
    %v4292 = vmul.f32 1.0, %v4291
    %v4293 = vtanh.pop %v4274
    %v4294 = vmul.f32 %v4290, %v4181
    %v4295 = vmul.f32 %v4288, %v4293
    %v4296 = vadd.f32 %v4294, %v4295
    %v4297 = vtanh.pop %v4296
    %v4298 = vmul.f32 %v4292, %v4297
    %v4299 = vadd.f32 %v4184, %v4298
    %v4300 = vpack.c.bf16 %v4298, %v4298
    %v4302 = vsel %vm2284, %v4300, 0
    %4304 = vmatprep.subr.bf16.mxu0 %v2237
    %4305 = vmatpush1.bf16.msra.mxu0 %v2236
    %4306 = vmatprep.subr.bf16.mxu0 %v2241
    %4307 = vmatpush1.bf16.msra.mxu0 %v2240
    %4308 = vmatprep.subr.bf16.mxu0 %v2245
    %4309 = vmatpush1.bf16.msra.mxu0 %v2244
    %4310 = vmatprep.subr.bf16.mxu0 %v2249
    %4311 = vmatpush1.bf16.msra.mxu0 %v2248
    %4312 = vmatprep.subr.bf16.mxu0 %v2253
    %4313 = vmatpush1.bf16.msra.mxu0 %v2252
    %4314 = vmatprep.subr.bf16.mxu0 %v2257
    %4315 = vmatpush1.bf16.msra.mxu0 %v2256
    %4316 = vmatprep.subr.bf16.mxu0 0
    %4317 = vmatpush1.bf16.msra.mxu0 0
    %4318 = vmatprep.subr.bf16.mxu0 0
    %4319 = vmatpush1.bf16.msra.mxu0 0
    %4320 = vmatprep.subr.bf16.mxu0 0
    %4321 = vmatpush1.bf16.msra.mxu0 0
    %4322 = vmatprep.subr.bf16.mxu0 0
    %4323 = vmatpush1.bf16.msra.mxu0 0
    %4324 = vmatprep.subr.bf16.mxu0 0
    %4325 = vmatpush1.bf16.msra.mxu0 0
    %4326 = vmatprep.subr.bf16.mxu0 0
    %4327 = vmatpush1.bf16.msra.mxu0 0
    %4328 = vmatprep.subr.bf16.mxu0 0
    %4329 = vmatpush1.bf16.msra.mxu0 0
    %4330 = vmatprep.subr.bf16.mxu0 0
    %4331 = vmatpush1.bf16.msra.mxu0 0
    %4332 = vmatprep.subr.bf16.mxu0 0
    %4333 = vmatpush1.bf16.msra.mxu0 0
    %4334 = vmatprep.subr.bf16.mxu0 0
    %4335 = vmatpush1.bf16.msra.mxu0 0
    %4336 = vmatprep.mubr.bf16.mxu0 0
    %4337 = vmatmul.mubr.bf16.gmra.mrb[0].mxu0 %v4302
    %v4338 = vpop.f32.mrb[0].mxu0
    %v4339 = vadd.f32 0.0, %v4338
    %v4340 = vpop.f32.mrb[0].mxu0
    %v4341 = vadd.f32 0.0, %v4340
    %v4342 = vpop.f32.mrb[0].mxu0
    %v4343 = vpop.f32.mrb[0].mxu0
    %4344 = vdwg.mxu0
    %4345 = vmatprep.subr.bf16.mxu0 %v2239
    %4346 = vmatpush1.bf16.msra.mxu0 %v2238
    %4347 = vmatprep.subr.bf16.mxu0 %v2243
    %4348 = vmatpush1.bf16.msra.mxu0 %v2242
    %4349 = vmatprep.subr.bf16.mxu0 %v2247
    %4350 = vmatpush1.bf16.msra.mxu0 %v2246
    %4351 = vmatprep.subr.bf16.mxu0 %v2251
    %4352 = vmatpush1.bf16.msra.mxu0 %v2250
    %4353 = vmatprep.subr.bf16.mxu0 %v2255
    %4354 = vmatpush1.bf16.msra.mxu0 %v2254
    %4355 = vmatprep.subr.bf16.mxu0 %v2259
    %4356 = vmatpush1.bf16.msra.mxu0 %v2258
    %4357 = vmatprep.subr.bf16.mxu0 0
    %4358 = vmatpush1.bf16.msra.mxu0 0
    %4359 = vmatprep.subr.bf16.mxu0 0
    %4360 = vmatpush1.bf16.msra.mxu0 0
    %4361 = vmatprep.subr.bf16.mxu0 0
    %4362 = vmatpush1.bf16.msra.mxu0 0
    %4363 = vmatprep.subr.bf16.mxu0 0
    %4364 = vmatpush1.bf16.msra.mxu0 0
    %4365 = vmatprep.subr.bf16.mxu0 0
    %4366 = vmatpush1.bf16.msra.mxu0 0
    %4367 = vmatprep.subr.bf16.mxu0 0
    %4368 = vmatpush1.bf16.msra.mxu0 0
    %4369 = vmatprep.subr.bf16.mxu0 0
    %4370 = vmatpush1.bf16.msra.mxu0 0
    %4371 = vmatprep.subr.bf16.mxu0 0
    %4372 = vmatpush1.bf16.msra.mxu0 0
    %4373 = vmatprep.subr.bf16.mxu0 0
    %4374 = vmatpush1.bf16.msra.mxu0 0
    %4375 = vmatprep.subr.bf16.mxu0 0
    %4376 = vmatpush1.bf16.msra.mxu0 0
    %4377 = vmatprep.mubr.bf16.mxu0 0
    %4378 = vmatmul.mubr.bf16.gmra.mrb[0].mxu0 %v4302
    %v4379 = vpop.f32.mrb[0].mxu0
    %v4380 = vadd.f32 0.0, %v4379
    %v4381 = vpop.f32.mrb[0].mxu0
    %v4382 = vadd.f32 0.0, %v4381
    %v4383 = vpop.f32.mrb[0].mxu0
    %v4384 = vpop.f32.mrb[0].mxu0
    %4385 = vdwg.mxu0
    %v4386 = vadd.f32 %v4066, %v4339
    %v4387 = vadd.f32 %v4067, %v4341
    %v4388 = vadd.f32 %v4068, %v4380
    %v4389 = vadd.f32 %v4069, %v4382
    %v4390 = vxor.u32 %v4386, 2147483648
    %v4391 = vxor.u32 %v4387, 2147483648
    %v4392 = vxor.u32 %v4388, 2147483648
    %v4393 = vmul.f32 %v4390, 1.442695
    %v4394 = vpow.pop %v4393
    %v4395 = vmul.f32 %v4391, 1.442695
    %v4396 = vpow.pop %v4395
    %v4397 = vmul.f32 %v4392, 1.442695
    %v4398 = vpow.pop %v4397
    %v4399 = vadd.f32 %v4394, 1.0
    %v4400 = vadd.f32 %v4396, 1.0
    %v4401 = vadd.f32 %v4398, 1.0
    %v4402 = vrcp.pop %v4399
    %v4403 = vmul.f32 1.0, %v4402
    %v4404 = vrcp.pop %v4400
    %v4405 = vmul.f32 1.0, %v4404
    %v4406 = vrcp.pop %v4401
    %v4407 = vmul.f32 1.0, %v4406
    %v4408 = vtanh.pop %v4389
    %v4409 = vmul.f32 %v4405, %v4296
    %v4410 = vmul.f32 %v4403, %v4408
    %v4411 = vadd.f32 %v4409, %v4410
    %v4412 = vtanh.pop %v4411
    %v4413 = vmul.f32 %v4407, %v4412
    %v4414 = vadd.f32 %v4299, %v4413
    %v4415 = vmul.f32 %v4414, 0.0625
    %v4416 = vpack.c.bf16 %v4415, %v4415
    %v4417 = vld [vmem:[#allocation4 + $0x290] sm:$0xf]
    %v4418 = vld [vmem:[#allocation4 + $0x2a0] sm:$0xf]
    %v4419 = vld [vmem:[#allocation4 + $0x2b0] sm:$0xf]
    %v4420 = vld [vmem:[#allocation4 + $0x2c0] sm:$0xf]
    %v4421 = vld [vmem:[%s3 + $0x60] ss:$0 sm:$0xff]
    %4423 = vrot.lane.b32.xlu0 %v4416, 64
    %v4424 = vpop.permute.xlu0 %4423
    %v4429 = vunpack.c.l.b16 %v4417
    %v4430 = vunpack.c.l.b16 %v4418
    %v4431 = vunpack.c.l.b16 %v4419
    %v4432 = vunpack.c.l.b16 %v4420
    %v4433 = vpack.c.b16 %v4430, %v4429
    %v4434 = vpack.c.b16 %v4432, %v4431
    %v4438 = vsel %vm1410, %v4424, 0
    %4440 = vmatprep.subr.bf16.mxu0 0
    %4441 = vmatpush1.bf16.msra.mxu0 %v4433
    %4442 = vmatprep.subr.bf16.mxu0 0
    %4443 = vmatpush1.bf16.msra.mxu0 %v4434
    %4444 = vmatprep.subr.bf16.mxu0 0
    %4445 = vmatpush1.bf16.msra.mxu0 0
    %4446 = vmatprep.subr.bf16.mxu0 0
    %4447 = vmatpush1.bf16.msra.mxu0 0
    %4448 = vmatprep.subr.bf16.mxu0 0
    %4449 = vmatpush1.bf16.msra.mxu0 0
    %4450 = vmatprep.subr.bf16.mxu0 0
    %4451 = vmatpush1.bf16.msra.mxu0 0
    %4452 = vmatprep.subr.bf16.mxu0 0
    %4453 = vmatpush1.bf16.msra.mxu0 0
    %4454 = vmatprep.subr.bf16.mxu0 0
    %4455 = vmatpush1.bf16.msra.mxu0 0
    %4456 = vmatprep.subr.bf16.mxu0 0
    %4457 = vmatpush1.bf16.msra.mxu0 0
    %4458 = vmatprep.subr.bf16.mxu0 0
    %4459 = vmatpush1.bf16.msra.mxu0 0
    %4460 = vmatprep.subr.bf16.mxu0 0
    %4461 = vmatpush1.bf16.msra.mxu0 0
    %4462 = vmatprep.subr.bf16.mxu0 0
    %4463 = vmatpush1.bf16.msra.mxu0 0
    %4464 = vmatprep.subr.bf16.mxu0 0
    %4465 = vmatpush1.bf16.msra.mxu0 0
    %4466 = vmatprep.subr.bf16.mxu0 0
    %4467 = vmatpush1.bf16.msra.mxu0 0
    %4468 = vmatprep.subr.bf16.mxu0 0
    %4469 = vmatpush1.bf16.msra.mxu0 0
    %4470 = vmatprep.subr.bf16.mxu0 0
    %4471 = vmatpush1.bf16.msra.mxu0 0
    %4472 = vmatprep.mubr.bf16.mxu0 0
    %4473 = vmatmul.mubr.bf16.gmra.mrb[0].mxu0 %v4438
    %v4474 = vpop.f32.mrb[0].mxu0
    %v4475 = vadd.f32 %v4421, %v4474
    %v4476 = vpop.f32.mrb[0].mxu0
    %v4477 = vpop.f32.mrb[0].mxu0
    %v4478 = vpop.f32.mrb[0].mxu0
    %4479 = vdwg.mxu0
    %vm4480 = vcmask 23552
    %4481 = vst.msk [vmem:[%s5] sm:$0xff] %vm4480, %v4475
    // Predicated region
    $region22: #{forward.1} parent=1 // pred_check
      _
    $region23: #{forward.1} parent=1 // pred_check_branch
      %4483 = sbr.rel (0) target = $region25
    $region24: #{forward.1} parent=1 // pred_region
      _
    $region25: #{forward.1} parent=1 // pred_fallthru
      _
    // Predicated region
    $region26: #{forward.1} parent=1 // pred_check
      _
    $region27: #{forward.1} parent=1 // pred_check_branch
      %4485 = sbr.rel (0) target = $region29
    $region28: #{forward.1} parent=1 // pred_region
      _
    $region29: #{forward.1} parent=1 // pred_fallthru
      _
    // Predicated region
    $region30: #{forward.1} parent=1 // pred_check
      _
    $region31: #{forward.1} parent=1 // pred_check_branch
      %4487 = sbr.rel (0) target = $region33
    $region32: #{forward.1} parent=1 // pred_region
      _
    $region33: #{forward.1} parent=1 // pred_fallthru
      _
    // Predicated region
    $region34: #{forward.1} parent=1 // pred_check
      _
    $region35: #{forward.1} parent=1 // pred_check_branch
      %4489 = sbr.rel (0) target = $region37
    $region36: #{forward.1} parent=1 // pred_region
      _
    $region37: #{forward.1} parent=1 // pred_fallthru
      _
    %4490 = vsyncpa [#allocation5], 1

</llo_original>
